<compile_context>
chip_gen: v6e
topology: v6e:2x2x1
jax: 0.10.0
libtpu: 0.0.40
codegen_flags: <defaults>
</compile_context>

<pallas_src>
import numpy as np
import jax
import jax.numpy as jnp
from jax import lax
from jax.experimental import pallas as pl
from jax.experimental.pallas import tpu as pltpu

# ---- small synthetic config (consistent with SiglipVisionConfig fields) ----
BATCH = 2
CHANNELS = 3
IMAGE_SIZE = 32
PATCH_SIZE = 8
HIDDEN = 256                       # hidden_size
INTERMEDIATE = 512                 # intermediate_size
NUM_HEADS = 2                      # num_attention_heads
HEAD_DIM = HIDDEN // NUM_HEADS     # 128 -> lane-aligned head slices
NUM_LAYERS = 2                     # num_hidden_layers
EPS = 1e-6                         # layer_norm_eps
NUM_PATCHES = (IMAGE_SIZE // PATCH_SIZE) ** 2        # 16 tokens per image
PATCH_DIM = CHANNELS * PATCH_SIZE * PATCH_SIZE       # 192
KPAD = 256                                           # lane-dense padded K
SCALE = HEAD_DIM ** (-0.5)


# ----------------------------- math helpers ---------------------------------
def _layernorm(x, g, b):
    # PyTorch LayerNorm: population variance (unbiased=False), f32 math.
    mu = jnp.mean(x, axis=-1, keepdims=True)
    var = jnp.mean((x - mu) ** 2, axis=-1, keepdims=True)
    return (x - mu) * lax.rsqrt(var + EPS) * g + b


def _gelu_tanh(x):
    # nn.functional.gelu(..., approximate='tanh')
    c = 0.7978845608028654  # sqrt(2/pi)
    return 0.5 * x * (1.0 + jnp.tanh(c * (x + 0.044715 * x * x * x)))


def _bf16_dot(a, w_bf16):
    # bf16 operands on the MXU, f32 accumulation.
    return jnp.dot(a.astype(jnp.bfloat16), w_bf16,
                   preferred_element_type=jnp.float32)


# ------------------------------ fused kernel --------------------------------
def make_kernel(nb):
    """Build the fused kernel for `nb` images handled per grid step."""
    S, D, Hd, H = NUM_PATCHES, HIDDEN, HEAD_DIM, NUM_HEADS

    def kernel(patch_ref, emb_w_ref, posb_ref,
               ln1_g_ref, ln1_b_ref, wqkv_ref, bqkv_ref, wo_ref, bo_ref,
               ln2_g_ref, ln2_b_ref, w1_ref, b1_ref, w2_ref, b2_ref,
               post_g_ref, post_b_ref, o_ref):
        # ---- patch embedding (im2col'd Conv2d) + (bias + position) ----
        # patch_ref is (nb*S, KPAD); posb_ref already holds embed_b + pos.
        x = _bf16_dot(patch_ref[...], emb_w_ref[...]) + posb_ref[...]

        # ---- encoder layers (static unroll; weights stacked on layer axis) ----
        for li in range(NUM_LAYERS):
            # LayerNorm1 -> fused QKV over all nb*S rows
            xn = _layernorm(x, ln1_g_ref[li], ln1_b_ref[li])
            qkv = _bf16_dot(xn, wqkv_ref[li]) + bqkv_ref[li]      # (nb*S, 3D)
            qkv_b = qkv.astype(jnp.bfloat16)

            # Per-image, per-head attention.  Context heads land in
            # lane-aligned 128-wide column slots -> a plain concatenate,
            # then ONE (nb*S, D) @ (D, D) out-projection matmul.
            ctx_rows = []
            for b in range(nb):                                   # static
                r0 = b * S
                ctx_heads = []
                for h in range(H):                                # static
                    lo = h * Hd
                    qh = qkv_b[r0:r0 + S, lo:lo + Hd]
                    kh = qkv_b[r0:r0 + S, D + lo:D + lo + Hd]
                    vh = qkv_b[r0:r0 + S, 2 * D + lo:2 * D + lo + Hd]
                    # scores = q @ k^T without materializing a transpose
                    s = lax.dot_general(qh, kh, (((1,), (1,)), ((), ())),
                                        preferred_element_type=jnp.float32)
                    s = s * SCALE
                    s = s - jnp.max(s, axis=-1, keepdims=True)
                    p = jnp.exp(s)
                    p = p / jnp.sum(p, axis=-1, keepdims=True)    # exact softmax
                    ctx = jnp.dot(p.astype(jnp.bfloat16), vh,
                                  preferred_element_type=jnp.float32)
                    ctx_heads.append(ctx.astype(jnp.bfloat16))    # (S, Hd)
                ctx_rows.append(jnp.concatenate(ctx_heads, axis=-1))  # (S, D)
            ctx_all = (jnp.concatenate(ctx_rows, axis=0)
                       if nb > 1 else ctx_rows[0])                # (nb*S, D)

            x = x + _bf16_dot(ctx_all, wo_ref[li]) + bo_ref[li]

            # LayerNorm2 -> MLP (gelu tanh) -> residual
            xn2 = _layernorm(x, ln2_g_ref[li], ln2_b_ref[li])
            h1 = _gelu_tanh(_bf16_dot(xn2, w1_ref[li]) + b1_ref[li])
            x = x + _bf16_dot(h1, w2_ref[li]) + b2_ref[li]

        # ---- final LayerNorm ----
        o_ref[...] = _layernorm(x, post_g_ref[...], post_b_ref[...])

    return kernel


# ------------------------------ kernel wrapper -------------------------------
def _const_spec(a):
    # Whole-array block, constant index map; rank bound eagerly (no late-binding).
    r = a.ndim
    return pl.BlockSpec(a.shape, lambda i, _r=r: (0,) * _r)


def _images_per_step(batch):
    # Fold the batch into the matmul M dimension on single-TensorCore chips
    # (v5e/v6e); keep a per-image "parallel" grid on multi-core chips so the
    # second TensorCore gets work.  Either choice is correct; only perf differs.
    try:
        kind = jax.devices()[0].device_kind.lower()
    except Exception:
        kind = ""
    multi_core = any(t in kind for t in ("v7", "7x", "v4", "v5p"))
    return 1 if multi_core else batch


def patchify(pixel_values):
    # NCHW -> (B, num_patches, C*ps*ps); equivalent to stride=ps Conv2d im2col.
    B, C, Himg, Wimg = pixel_values.shape
    nh, nw = Himg // PATCH_SIZE, Wimg // PATCH_SIZE
    x = pixel_values.reshape(B, C, nh, PATCH_SIZE, nw, PATCH_SIZE)
    x = x.transpose(0, 2, 4, 1, 3, 5)              # (B, nh, nw, C, ps, ps)
    return x.reshape(B, nh * nw, C * PATCH_SIZE * PATCH_SIZE)


def siglip_vision_model(pixel_values, params):
    B = pixel_values.shape[0]
    S, D = NUM_PATCHES, HIDDEN
    nb = _images_per_step(B)                       # images per grid step
    M = nb * S                                     # GEMM rows per grid step

    # Host-side layout prep (free): im2col, zero-pad K 192 -> 256, flatten B
    # into the row dimension, pre-fuse embed bias + position embedding.
    patches = patchify(pixel_values)                               # (B,S,192)
    patches = jnp.pad(patches, ((0, 0), (0, 0), (0, KPAD - PATCH_DIM)))
    patches = patches.reshape(B * S, KPAD)                         # (B*S,256)
    emb_w = jnp.pad(params["embed_w"], ((0, KPAD - PATCH_DIM), (0, 0)))
    posb = params["embed_b"] + params["pos"]                       # (S, D)
    if nb > 1:
        posb = jnp.tile(posb, (nb, 1))                             # (M, D)

    weights = [emb_w, posb,
               params["ln1_g"], params["ln1_b"],
               params["wqkv"], params["bqkv"], params["wo"], params["bo"],
               params["ln2_g"], params["ln2_b"],
               params["w1"], params["b1"], params["w2"], params["b2"],
               params["post_g"], params["post_b"]]

    grid = (B // nb,)
    in_specs = ([pl.BlockSpec((M, KPAD), lambda i: (i, 0))]
                + [_const_spec(w) for w in weights])
    out_specs = pl.BlockSpec((M, D), lambda i: (i, 0))
    semantics = ("parallel",) if nb == 1 else ("arbitrary",)

    out = pl.pallas_call(
        make_kernel(nb),
        out_shape=jax.ShapeDtypeStruct((B * S, D), jnp.float32),
        grid=grid,
        in_specs=in_specs,
        out_specs=out_specs,
        compiler_params=pltpu.CompilerParams(
            dimension_semantics=semantics,
            vmem_limit_bytes=32 * 1024 * 1024),
    )(patches, *weights)
    return out.reshape(B, S, D)


# ------------------------------- parameter init ------------------------------
def init_params(key):
    def nrm(k, shape, dtype=jnp.float32, scale=0.02):
        return (scale * jax.random.normal(k, shape)).astype(dtype)

    bf = jnp.bfloat16
    L = NUM_LAYERS
    keys = jax.random.split(key, 3 + L)
    params = {
        # Conv2d weight (D, C, ps, ps) flattened to (C*ps*ps, D); bias (1, D).
        "embed_w": nrm(keys[0], (PATCH_DIM, HIDDEN), bf),
        "embed_b": nrm(keys[1], (1, HIDDEN)),
        "pos": nrm(keys[2], (NUM_PATCHES, HIDDEN)),
        "post_g": jnp.ones((1, HIDDEN), jnp.float32),
        "post_b": jnp.zeros((1, HIDDEN), jnp.float32),
        # LayerNorm params (torch default init), stacked over layers.
        "ln1_g": jnp.ones((L, 1, HIDDEN), jnp.float32),
        "ln1_b": jnp.zeros((L, 1, HIDDEN), jnp.float32),
        "ln2_g": jnp.ones((L, 1, HIDDEN), jnp.float32),
        "ln2_b": jnp.zeros((L, 1, HIDDEN), jnp.float32),
    }
    wqkv, bqkv, wo, bo, w1, b1, w2, b2 = ([] for _ in range(8))
    for li in range(L):
        ks = jax.random.split(keys[3 + li], 8)
        # nn.Linear stored as (in, out); Q/K/V fused along the output axis.
        wqkv.append(nrm(ks[0], (HIDDEN, 3 * HIDDEN), bf))
        bqkv.append(nrm(ks[1], (1, 3 * HIDDEN)))
        wo.append(nrm(ks[2], (HIDDEN, HIDDEN), bf))
        bo.append(nrm(ks[3], (1, HIDDEN)))
        w1.append(nrm(ks[4], (HIDDEN, INTERMEDIATE), bf))
        b1.append(nrm(ks[5], (1, INTERMEDIATE)))
        w2.append(nrm(ks[6], (INTERMEDIATE, HIDDEN), bf))
        b2.append(nrm(ks[7], (1, HIDDEN)))
    params.update(
        wqkv=jnp.stack(wqkv), bqkv=jnp.stack(bqkv),
        wo=jnp.stack(wo), bo=jnp.stack(bo),
        w1=jnp.stack(w1), b1=jnp.stack(b1),
        w2=jnp.stack(w2), b2=jnp.stack(b2),
    )
    return params


# ------------------------------ pure-JAX reference ---------------------------
# Mirrors the module semantics and the kernel's precision policy (bf16 matmul
# operands, f32 accumulation; everything else f32, exact softmax).
def ref_forward(pixel_values, params):
    bf = jnp.bfloat16

    def mm(a, w):
        return jnp.dot(a.astype(bf), w.astype(bf),
                       preferred_element_type=jnp.float32)

    D, Hh, hd = HIDDEN, NUM_HEADS, HEAD_DIM
    x = mm(patchify(pixel_values), params["embed_w"]) \
        + params["embed_b"] + params["pos"]
    B, S, _ = x.shape
    for li in range(NUM_LAYERS):
        xn = _layernorm(x, params["ln1_g"][li], params["ln1_b"][li])
        qkv = mm(xn, params["wqkv"][li]) + params["bqkv"][li]
        q = qkv[..., 0:D].reshape(B, S, Hh, hd)
        k = qkv[..., D:2 * D].reshape(B, S, Hh, hd)
        v = qkv[..., 2 * D:3 * D].reshape(B, S, Hh, hd)
        s = jnp.einsum("bqhd,bkhd->bhqk", q.astype(bf), k.astype(bf),
                       preferred_element_type=jnp.float32) * SCALE
        p = jax.nn.softmax(s, axis=-1)
        ctx = jnp.einsum("bhqk,bkhd->bqhd", p.astype(bf), v.astype(bf),
                         preferred_element_type=jnp.float32).reshape(B, S, D)
        x = x + mm(ctx, params["wo"][li]) + params["bo"][li]
        xn2 = _layernorm(x, params["ln2_g"][li], params["ln2_b"][li])
        h1 = _gelu_tanh(mm(xn2, params["w1"][li]) + params["b1"][li])
        x = x + mm(h1, params["w2"][li]) + params["b2"][li]
    return _layernorm(x, params["post_g"], params["post_b"])


# ------------------------------------ main ------------------------------------
if __name__ == "__main__":
    key = jax.random.PRNGKey(0)
    kx, kp = jax.random.split(key)
    pixel_values = jax.random.normal(
        kx, (BATCH, CHANNELS, IMAGE_SIZE, IMAGE_SIZE), dtype=jnp.float32)
    params = init_params(kp)

    forward = jax.jit(siglip_vision_model)
    out = jax.block_until_ready(forward(pixel_values, params))

    ref = jax.block_until_ready(ref_forward(pixel_values, params))
    # Both sides use identical bf16 operands + f32 accumulation and exact
    # softmax; tolerance covers accumulation-order differences only.
    np.testing.assert_allclose(np.asarray(out), np.asarray(ref),
                               rtol=5e-3, atol=5e-3)
    assert out.shape == (BATCH, NUM_PATCHES, HIDDEN)
    print("KERNEL_OK")
</pallas_src>

<mosaic_0001>
module attributes {stable_mosaic.version = 11 : i64} {
  func.func @kernel(%arg0: i32, %arg1: memref<32x256xf32, #tpu.memory_space<vmem>>, %arg2: memref<256x256xbf16, #tpu.memory_space<vmem>>, %arg3: memref<32x256xf32, #tpu.memory_space<vmem>>, %arg4: memref<2x1x256xf32, #tpu.memory_space<vmem>>, %arg5: memref<2x1x256xf32, #tpu.memory_space<vmem>>, %arg6: memref<2x256x768xbf16, #tpu.memory_space<vmem>>, %arg7: memref<2x1x768xf32, #tpu.memory_space<vmem>>, %arg8: memref<2x256x256xbf16, #tpu.memory_space<vmem>>, %arg9: memref<2x1x256xf32, #tpu.memory_space<vmem>>, %arg10: memref<2x1x256xf32, #tpu.memory_space<vmem>>, %arg11: memref<2x1x256xf32, #tpu.memory_space<vmem>>, %arg12: memref<2x256x512xbf16, #tpu.memory_space<vmem>>, %arg13: memref<2x1x512xf32, #tpu.memory_space<vmem>>, %arg14: memref<2x512x256xbf16, #tpu.memory_space<vmem>>, %arg15: memref<2x1x256xf32, #tpu.memory_space<vmem>>, %arg16: memref<1x256xf32, #tpu.memory_space<vmem>>, %arg17: memref<1x256xf32, #tpu.memory_space<vmem>>, %arg18: memref<32x256xf32, #tpu.memory_space<vmem>>) attributes {dimension_semantics = [#tpu.dimension_semantics<arbitrary>], iteration_bounds = array<i64: 1>, scalar_prefetch = 0 : i64, scratch_operands = 0 : i64, tpu.core_type = #tpu.core_type<tc>, window_params = [{transform_indices = @transform_0, window_bounds = array<i64: 32, 256>}, {pipeline_mode = #tpu.pipeline_mode<synchronous>, transform_indices = @transform_1, window_bounds = array<i64: 256, 256>}, {pipeline_mode = #tpu.pipeline_mode<synchronous>, transform_indices = @transform_2, window_bounds = array<i64: 32, 256>}, {pipeline_mode = #tpu.pipeline_mode<synchronous>, transform_indices = @transform_3, window_bounds = array<i64: 2, 1, 256>}, {pipeline_mode = #tpu.pipeline_mode<synchronous>, transform_indices = @transform_4, window_bounds = array<i64: 2, 1, 256>}, {pipeline_mode = #tpu.pipeline_mode<synchronous>, transform_indices = @transform_5, window_bounds = array<i64: 2, 256, 768>}, {pipeline_mode = #tpu.pipeline_mode<synchronous>, transform_indices = @transform_6, window_bounds = array<i64: 2, 1, 768>}, {pipeline_mode = #tpu.pipeline_mode<synchronous>, transform_indices = @transform_7, window_bounds = array<i64: 2, 256, 256>}, {pipeline_mode = #tpu.pipeline_mode<synchronous>, transform_indices = @transform_8, window_bounds = array<i64: 2, 1, 256>}, {pipeline_mode = #tpu.pipeline_mode<synchronous>, transform_indices = @transform_9, window_bounds = array<i64: 2, 1, 256>}, {pipeline_mode = #tpu.pipeline_mode<synchronous>, transform_indices = @transform_10, window_bounds = array<i64: 2, 1, 256>}, {pipeline_mode = #tpu.pipeline_mode<synchronous>, transform_indices = @transform_11, window_bounds = array<i64: 2, 256, 512>}, {pipeline_mode = #tpu.pipeline_mode<synchronous>, transform_indices = @transform_12, window_bounds = array<i64: 2, 1, 512>}, {pipeline_mode = #tpu.pipeline_mode<synchronous>, transform_indices = @transform_13, window_bounds = array<i64: 2, 512, 256>}, {pipeline_mode = #tpu.pipeline_mode<synchronous>, transform_indices = @transform_14, window_bounds = array<i64: 2, 1, 256>}, {pipeline_mode = #tpu.pipeline_mode<synchronous>, transform_indices = @transform_15, window_bounds = array<i64: 1, 256>}, {pipeline_mode = #tpu.pipeline_mode<synchronous>, transform_indices = @transform_16, window_bounds = array<i64: 1, 256>}, {transform_indices = @transform_17, window_bounds = array<i64: 32, 256>}]} {
    %c0 = arith.constant 0 : index
    %c0_0 = arith.constant 0 : index
    %0 = vector.load %arg1[%c0, %c0_0] : memref<32x256xf32, #tpu.memory_space<vmem>>, vector<32x256xf32>
    %c0_1 = arith.constant 0 : index
    %c0_2 = arith.constant 0 : index
    %1 = vector.load %arg2[%c0_1, %c0_2] : memref<256x256xbf16, #tpu.memory_space<vmem>>, vector<256x256xbf16>
    %2 = arith.truncf %0 : vector<32x256xf32> to vector<32x256xbf16>
    %cst = arith.constant dense<0.000000e+00> : vector<32x256xf32>
    %3 = tpu.matmul %2, %1, %cst {dimension_numbers = #tpu.dot_dimension_numbers<[1], [0], [0], [1], [0, 0, 1, 1], [], []>} : vector<32x256xbf16>, vector<256x256xbf16>, vector<32x256xf32> -> vector<32x256xf32>
    %c0_3 = arith.constant 0 : index
    %c0_4 = arith.constant 0 : index
    %4 = vector.load %arg3[%c0_3, %c0_4] : memref<32x256xf32, #tpu.memory_space<vmem>>, vector<32x256xf32>
    %5 = arith.addf %3, %4 : vector<32x256xf32>
    %c0_5 = arith.constant 0 : index
    %c0_6 = arith.constant 0 : index
    %c0_7 = arith.constant 0 : index
    %6 = vector.load %arg4[%c0_5, %c0_6, %c0_7] : memref<2x1x256xf32, #tpu.memory_space<vmem>>, vector<1x1x256xf32>
    %7 = vector.shape_cast %6 : vector<1x1x256xf32> to vector<1x256xf32>
    %c0_8 = arith.constant 0 : index
    %c0_9 = arith.constant 0 : index
    %c0_10 = arith.constant 0 : index
    %8 = vector.load %arg5[%c0_8, %c0_9, %c0_10] : memref<2x1x256xf32, #tpu.memory_space<vmem>>, vector<1x1x256xf32>
    %9 = vector.shape_cast %8 : vector<1x1x256xf32> to vector<1x256xf32>
    %cst_11 = arith.constant dense<0.000000e+00> : vector<32xf32>
    %10 = vector.multi_reduction <add>, %5, %cst_11 [1] : vector<32x256xf32> to vector<32xf32>
    %11 = vector.shape_cast %10 : vector<32xf32> to vector<32x1xf32>
    %cst_12 = arith.constant 2.560000e+02 : f32
    %12 = vector.broadcast %cst_12 : f32 to vector<32x1xf32>
    %13 = arith.divf %11, %12 : vector<32x1xf32>
    %14 = vector.broadcast %13 : vector<32x1xf32> to vector<32x256xf32>
    %15 = arith.subf %5, %14 : vector<32x256xf32>
    %16 = arith.mulf %15, %15 : vector<32x256xf32>
    %cst_13 = arith.constant dense<0.000000e+00> : vector<32xf32>
    %17 = vector.multi_reduction <add>, %16, %cst_13 [1] : vector<32x256xf32> to vector<32xf32>
    %18 = vector.shape_cast %17 : vector<32xf32> to vector<32x1xf32>
    %cst_14 = arith.constant 2.560000e+02 : f32
    %19 = vector.broadcast %cst_14 : f32 to vector<32x1xf32>
    %20 = arith.divf %18, %19 : vector<32x1xf32>
    %21 = vector.broadcast %13 : vector<32x1xf32> to vector<32x256xf32>
    %22 = arith.subf %5, %21 : vector<32x256xf32>
    %cst_15 = arith.constant 9.99999997E-7 : f32
    %23 = vector.broadcast %cst_15 : f32 to vector<32x1xf32>
    %24 = arith.addf %20, %23 : vector<32x1xf32>
    %25 = math.rsqrt %24 : vector<32x1xf32>
    %26 = vector.broadcast %25 : vector<32x1xf32> to vector<32x256xf32>
    %27 = arith.mulf %22, %26 : vector<32x256xf32>
    %28 = vector.broadcast %7 : vector<1x256xf32> to vector<32x256xf32>
    %29 = arith.mulf %27, %28 : vector<32x256xf32>
    %30 = vector.broadcast %9 : vector<1x256xf32> to vector<32x256xf32>
    %31 = arith.addf %29, %30 : vector<32x256xf32>
    %c0_16 = arith.constant 0 : index
    %c0_17 = arith.constant 0 : index
    %c0_18 = arith.constant 0 : index
    %32 = vector.load %arg6[%c0_16, %c0_17, %c0_18] : memref<2x256x768xbf16, #tpu.memory_space<vmem>>, vector<1x256x768xbf16>
    %33 = vector.shape_cast %32 : vector<1x256x768xbf16> to vector<256x768xbf16>
    %34 = arith.truncf %31 : vector<32x256xf32> to vector<32x256xbf16>
    %cst_19 = arith.constant dense<0.000000e+00> : vector<32x768xf32>
    %35 = tpu.matmul %34, %33, %cst_19 {dimension_numbers = #tpu.dot_dimension_numbers<[1], [0], [0], [1], [0, 0, 1, 1], [], []>} : vector<32x256xbf16>, vector<256x768xbf16>, vector<32x768xf32> -> vector<32x768xf32>
    %c0_20 = arith.constant 0 : index
    %c0_21 = arith.constant 0 : index
    %c0_22 = arith.constant 0 : index
    %36 = vector.load %arg7[%c0_20, %c0_21, %c0_22] : memref<2x1x768xf32, #tpu.memory_space<vmem>>, vector<1x1x768xf32>
    %37 = vector.shape_cast %36 : vector<1x1x768xf32> to vector<1x768xf32>
    %38 = vector.broadcast %37 : vector<1x768xf32> to vector<32x768xf32>
    %39 = arith.addf %35, %38 : vector<32x768xf32>
    %40 = arith.truncf %39 : vector<32x768xf32> to vector<32x768xbf16>
    %41 = vector.extract_strided_slice %40 {offsets = [0, 0], sizes = [16, 128], strides = [1, 1]} : vector<32x768xbf16> to vector<16x128xbf16>
    %42 = vector.extract_strided_slice %40 {offsets = [0, 256], sizes = [16, 128], strides = [1, 1]} : vector<32x768xbf16> to vector<16x128xbf16>
    %43 = vector.extract_strided_slice %40 {offsets = [0, 512], sizes = [16, 128], strides = [1, 1]} : vector<32x768xbf16> to vector<16x128xbf16>
    %cst_23 = arith.constant dense<0.000000e+00> : vector<16x16xf32>
    %44 = tpu.matmul %41, %42, %cst_23 {dimension_numbers = #tpu.dot_dimension_numbers<[1], [1], [0], [0], [0, 0, 1, 0], [], []>} : vector<16x128xbf16>, vector<16x128xbf16>, vector<16x16xf32> -> vector<16x16xf32>
    %cst_24 = arith.constant 0.0883883461 : f32
    %45 = vector.broadcast %cst_24 : f32 to vector<16x16xf32>
    %46 = arith.mulf %44, %45 : vector<16x16xf32>
    %cst_25 = arith.constant dense<0xFF800000> : vector<16xf32>
    %47 = vector.multi_reduction <maximumf>, %46, %cst_25 [1] : vector<16x16xf32> to vector<16xf32>
    %48 = vector.shape_cast %47 : vector<16xf32> to vector<16x1xf32>
    %49 = vector.broadcast %48 : vector<16x1xf32> to vector<16x16xf32>
    %50 = arith.subf %46, %49 : vector<16x16xf32>
    %51 = math.exp %50 : vector<16x16xf32>
    %cst_26 = arith.constant dense<0.000000e+00> : vector<16xf32>
    %52 = vector.multi_reduction <add>, %51, %cst_26 [1] : vector<16x16xf32> to vector<16xf32>
    %53 = vector.shape_cast %52 : vector<16xf32> to vector<16x1xf32>
    %54 = vector.broadcast %53 : vector<16x1xf32> to vector<16x16xf32>
    %55 = arith.divf %51, %54 : vector<16x16xf32>
    %56 = arith.truncf %55 : vector<16x16xf32> to vector<16x16xbf16>
    %cst_27 = arith.constant dense<0.000000e+00> : vector<16x128xf32>
    %57 = tpu.matmul %56, %43, %cst_27 {dimension_numbers = #tpu.dot_dimension_numbers<[1], [0], [0], [1], [0, 0, 1, 1], [], []>} : vector<16x16xbf16>, vector<16x128xbf16>, vector<16x128xf32> -> vector<16x128xf32>
    %58 = arith.truncf %57 : vector<16x128xf32> to vector<16x128xbf16>
    %59 = vector.extract_strided_slice %40 {offsets = [0, 128], sizes = [16, 128], strides = [1, 1]} : vector<32x768xbf16> to vector<16x128xbf16>
    %60 = vector.extract_strided_slice %40 {offsets = [0, 384], sizes = [16, 128], strides = [1, 1]} : vector<32x768xbf16> to vector<16x128xbf16>
    %61 = vector.extract_strided_slice %40 {offsets = [0, 640], sizes = [16, 128], strides = [1, 1]} : vector<32x768xbf16> to vector<16x128xbf16>
    %cst_28 = arith.constant dense<0.000000e+00> : vector<16x16xf32>
    %62 = tpu.matmul %59, %60, %cst_28 {dimension_numbers = #tpu.dot_dimension_numbers<[1], [1], [0], [0], [0, 0, 1, 0], [], []>} : vector<16x128xbf16>, vector<16x128xbf16>, vector<16x16xf32> -> vector<16x16xf32>
    %cst_29 = arith.constant 0.0883883461 : f32
    %63 = vector.broadcast %cst_29 : f32 to vector<16x16xf32>
    %64 = arith.mulf %62, %63 : vector<16x16xf32>
    %cst_30 = arith.constant dense<0xFF800000> : vector<16xf32>
    %65 = vector.multi_reduction <maximumf>, %64, %cst_30 [1] : vector<16x16xf32> to vector<16xf32>
    %66 = vector.shape_cast %65 : vector<16xf32> to vector<16x1xf32>
    %67 = vector.broadcast %66 : vector<16x1xf32> to vector<16x16xf32>
    %68 = arith.subf %64, %67 : vector<16x16xf32>
    %69 = math.exp %68 : vector<16x16xf32>
    %cst_31 = arith.constant dense<0.000000e+00> : vector<16xf32>
    %70 = vector.multi_reduction <add>, %69, %cst_31 [1] : vector<16x16xf32> to vector<16xf32>
    %71 = vector.shape_cast %70 : vector<16xf32> to vector<16x1xf32>
    %72 = vector.broadcast %71 : vector<16x1xf32> to vector<16x16xf32>
    %73 = arith.divf %69, %72 : vector<16x16xf32>
    %74 = arith.truncf %73 : vector<16x16xf32> to vector<16x16xbf16>
    %cst_32 = arith.constant dense<0.000000e+00> : vector<16x128xf32>
    %75 = tpu.matmul %74, %61, %cst_32 {dimension_numbers = #tpu.dot_dimension_numbers<[1], [0], [0], [1], [0, 0, 1, 1], [], []>} : vector<16x16xbf16>, vector<16x128xbf16>, vector<16x128xf32> -> vector<16x128xf32>
    %76 = arith.truncf %75 : vector<16x128xf32> to vector<16x128xbf16>
    %77 = tpu.concatenate %58, %76 in 1 : vector<16x128xbf16>, vector<16x128xbf16> -> vector<16x256xbf16>
    %78 = vector.extract_strided_slice %40 {offsets = [16, 0], sizes = [16, 128], strides = [1, 1]} : vector<32x768xbf16> to vector<16x128xbf16>
    %79 = vector.extract_strided_slice %40 {offsets = [16, 256], sizes = [16, 128], strides = [1, 1]} : vector<32x768xbf16> to vector<16x128xbf16>
    %80 = vector.extract_strided_slice %40 {offsets = [16, 512], sizes = [16, 128], strides = [1, 1]} : vector<32x768xbf16> to vector<16x128xbf16>
    %cst_33 = arith.constant dense<0.000000e+00> : vector<16x16xf32>
    %81 = tpu.matmul %78, %79, %cst_33 {dimension_numbers = #tpu.dot_dimension_numbers<[1], [1], [0], [0], [0, 0, 1, 0], [], []>} : vector<16x128xbf16>, vector<16x128xbf16>, vector<16x16xf32> -> vector<16x16xf32>
    %cst_34 = arith.constant 0.0883883461 : f32
    %82 = vector.broadcast %cst_34 : f32 to vector<16x16xf32>
    %83 = arith.mulf %81, %82 : vector<16x16xf32>
    %cst_35 = arith.constant dense<0xFF800000> : vector<16xf32>
    %84 = vector.multi_reduction <maximumf>, %83, %cst_35 [1] : vector<16x16xf32> to vector<16xf32>
    %85 = vector.shape_cast %84 : vector<16xf32> to vector<16x1xf32>
    %86 = vector.broadcast %85 : vector<16x1xf32> to vector<16x16xf32>
    %87 = arith.subf %83, %86 : vector<16x16xf32>
    %88 = math.exp %87 : vector<16x16xf32>
    %cst_36 = arith.constant dense<0.000000e+00> : vector<16xf32>
    %89 = vector.multi_reduction <add>, %88, %cst_36 [1] : vector<16x16xf32> to vector<16xf32>
    %90 = vector.shape_cast %89 : vector<16xf32> to vector<16x1xf32>
    %91 = vector.broadcast %90 : vector<16x1xf32> to vector<16x16xf32>
    %92 = arith.divf %88, %91 : vector<16x16xf32>
    %93 = arith.truncf %92 : vector<16x16xf32> to vector<16x16xbf16>
    %cst_37 = arith.constant dense<0.000000e+00> : vector<16x128xf32>
    %94 = tpu.matmul %93, %80, %cst_37 {dimension_numbers = #tpu.dot_dimension_numbers<[1], [0], [0], [1], [0, 0, 1, 1], [], []>} : vector<16x16xbf16>, vector<16x128xbf16>, vector<16x128xf32> -> vector<16x128xf32>
    %95 = arith.truncf %94 : vector<16x128xf32> to vector<16x128xbf16>
    %96 = vector.extract_strided_slice %40 {offsets = [16, 128], sizes = [16, 128], strides = [1, 1]} : vector<32x768xbf16> to vector<16x128xbf16>
    %97 = vector.extract_strided_slice %40 {offsets = [16, 384], sizes = [16, 128], strides = [1, 1]} : vector<32x768xbf16> to vector<16x128xbf16>
    %98 = vector.extract_strided_slice %40 {offsets = [16, 640], sizes = [16, 128], strides = [1, 1]} : vector<32x768xbf16> to vector<16x128xbf16>
    %cst_38 = arith.constant dense<0.000000e+00> : vector<16x16xf32>
    %99 = tpu.matmul %96, %97, %cst_38 {dimension_numbers = #tpu.dot_dimension_numbers<[1], [1], [0], [0], [0, 0, 1, 0], [], []>} : vector<16x128xbf16>, vector<16x128xbf16>, vector<16x16xf32> -> vector<16x16xf32>
    %cst_39 = arith.constant 0.0883883461 : f32
    %100 = vector.broadcast %cst_39 : f32 to vector<16x16xf32>
    %101 = arith.mulf %99, %100 : vector<16x16xf32>
    %cst_40 = arith.constant dense<0xFF800000> : vector<16xf32>
    %102 = vector.multi_reduction <maximumf>, %101, %cst_40 [1] : vector<16x16xf32> to vector<16xf32>
    %103 = vector.shape_cast %102 : vector<16xf32> to vector<16x1xf32>
    %104 = vector.broadcast %103 : vector<16x1xf32> to vector<16x16xf32>
    %105 = arith.subf %101, %104 : vector<16x16xf32>
    %106 = math.exp %105 : vector<16x16xf32>
    %cst_41 = arith.constant dense<0.000000e+00> : vector<16xf32>
    %107 = vector.multi_reduction <add>, %106, %cst_41 [1] : vector<16x16xf32> to vector<16xf32>
    %108 = vector.shape_cast %107 : vector<16xf32> to vector<16x1xf32>
    %109 = vector.broadcast %108 : vector<16x1xf32> to vector<16x16xf32>
    %110 = arith.divf %106, %109 : vector<16x16xf32>
    %111 = arith.truncf %110 : vector<16x16xf32> to vector<16x16xbf16>
    %cst_42 = arith.constant dense<0.000000e+00> : vector<16x128xf32>
    %112 = tpu.matmul %111, %98, %cst_42 {dimension_numbers = #tpu.dot_dimension_numbers<[1], [0], [0], [1], [0, 0, 1, 1], [], []>} : vector<16x16xbf16>, vector<16x128xbf16>, vector<16x128xf32> -> vector<16x128xf32>
    %113 = arith.truncf %112 : vector<16x128xf32> to vector<16x128xbf16>
    %114 = tpu.concatenate %95, %113 in 1 : vector<16x128xbf16>, vector<16x128xbf16> -> vector<16x256xbf16>
    %115 = tpu.concatenate %77, %114 in 0 : vector<16x256xbf16>, vector<16x256xbf16> -> vector<32x256xbf16>
    %c0_43 = arith.constant 0 : index
    %c0_44 = arith.constant 0 : index
    %c0_45 = arith.constant 0 : index
    %116 = vector.load %arg8[%c0_43, %c0_44, %c0_45] : memref<2x256x256xbf16, #tpu.memory_space<vmem>>, vector<1x256x256xbf16>
    %117 = vector.shape_cast %116 : vector<1x256x256xbf16> to vector<256x256xbf16>
    %cst_46 = arith.constant dense<0.000000e+00> : vector<32x256xf32>
    %118 = tpu.matmul %115, %117, %cst_46 {dimension_numbers = #tpu.dot_dimension_numbers<[1], [0], [0], [1], [0, 0, 1, 1], [], []>} : vector<32x256xbf16>, vector<256x256xbf16>, vector<32x256xf32> -> vector<32x256xf32>
    %119 = arith.addf %5, %118 : vector<32x256xf32>
    %c0_47 = arith.constant 0 : index
    %c0_48 = arith.constant 0 : index
    %c0_49 = arith.constant 0 : index
    %120 = vector.load %arg9[%c0_47, %c0_48, %c0_49] : memref<2x1x256xf32, #tpu.memory_space<vmem>>, vector<1x1x256xf32>
    %121 = vector.shape_cast %120 : vector<1x1x256xf32> to vector<1x256xf32>
    %122 = vector.broadcast %121 : vector<1x256xf32> to vector<32x256xf32>
    %123 = arith.addf %119, %122 : vector<32x256xf32>
    %c0_50 = arith.constant 0 : index
    %c0_51 = arith.constant 0 : index
    %c0_52 = arith.constant 0 : index
    %124 = vector.load %arg10[%c0_50, %c0_51, %c0_52] : memref<2x1x256xf32, #tpu.memory_space<vmem>>, vector<1x1x256xf32>
    %125 = vector.shape_cast %124 : vector<1x1x256xf32> to vector<1x256xf32>
    %c0_53 = arith.constant 0 : index
    %c0_54 = arith.constant 0 : index
    %c0_55 = arith.constant 0 : index
    %126 = vector.load %arg11[%c0_53, %c0_54, %c0_55] : memref<2x1x256xf32, #tpu.memory_space<vmem>>, vector<1x1x256xf32>
    %127 = vector.shape_cast %126 : vector<1x1x256xf32> to vector<1x256xf32>
    %cst_56 = arith.constant dense<0.000000e+00> : vector<32xf32>
    %128 = vector.multi_reduction <add>, %123, %cst_56 [1] : vector<32x256xf32> to vector<32xf32>
    %129 = vector.shape_cast %128 : vector<32xf32> to vector<32x1xf32>
    %cst_57 = arith.constant 2.560000e+02 : f32
    %130 = vector.broadcast %cst_57 : f32 to vector<32x1xf32>
    %131 = arith.divf %129, %130 : vector<32x1xf32>
    %132 = vector.broadcast %131 : vector<32x1xf32> to vector<32x256xf32>
    %133 = arith.subf %123, %132 : vector<32x256xf32>
    %134 = arith.mulf %133, %133 : vector<32x256xf32>
    %cst_58 = arith.constant dense<0.000000e+00> : vector<32xf32>
    %135 = vector.multi_reduction <add>, %134, %cst_58 [1] : vector<32x256xf32> to vector<32xf32>
    %136 = vector.shape_cast %135 : vector<32xf32> to vector<32x1xf32>
    %cst_59 = arith.constant 2.560000e+02 : f32
    %137 = vector.broadcast %cst_59 : f32 to vector<32x1xf32>
    %138 = arith.divf %136, %137 : vector<32x1xf32>
    %139 = vector.broadcast %131 : vector<32x1xf32> to vector<32x256xf32>
    %140 = arith.subf %123, %139 : vector<32x256xf32>
    %cst_60 = arith.constant 9.99999997E-7 : f32
    %141 = vector.broadcast %cst_60 : f32 to vector<32x1xf32>
    %142 = arith.addf %138, %141 : vector<32x1xf32>
    %143 = math.rsqrt %142 : vector<32x1xf32>
    %144 = vector.broadcast %143 : vector<32x1xf32> to vector<32x256xf32>
    %145 = arith.mulf %140, %144 : vector<32x256xf32>
    %146 = vector.broadcast %125 : vector<1x256xf32> to vector<32x256xf32>
    %147 = arith.mulf %145, %146 : vector<32x256xf32>
    %148 = vector.broadcast %127 : vector<1x256xf32> to vector<32x256xf32>
    %149 = arith.addf %147, %148 : vector<32x256xf32>
    %c0_61 = arith.constant 0 : index
    %c0_62 = arith.constant 0 : index
    %c0_63 = arith.constant 0 : index
    %150 = vector.load %arg12[%c0_61, %c0_62, %c0_63] : memref<2x256x512xbf16, #tpu.memory_space<vmem>>, vector<1x256x512xbf16>
    %151 = vector.shape_cast %150 : vector<1x256x512xbf16> to vector<256x512xbf16>
    %152 = arith.truncf %149 : vector<32x256xf32> to vector<32x256xbf16>
    %cst_64 = arith.constant dense<0.000000e+00> : vector<32x512xf32>
    %153 = tpu.matmul %152, %151, %cst_64 {dimension_numbers = #tpu.dot_dimension_numbers<[1], [0], [0], [1], [0, 0, 1, 1], [], []>} : vector<32x256xbf16>, vector<256x512xbf16>, vector<32x512xf32> -> vector<32x512xf32>
    %c0_65 = arith.constant 0 : index
    %c0_66 = arith.constant 0 : index
    %c0_67 = arith.constant 0 : index
    %154 = vector.load %arg13[%c0_65, %c0_66, %c0_67] : memref<2x1x512xf32, #tpu.memory_space<vmem>>, vector<1x1x512xf32>
    %155 = vector.shape_cast %154 : vector<1x1x512xf32> to vector<1x512xf32>
    %156 = vector.broadcast %155 : vector<1x512xf32> to vector<32x512xf32>
    %157 = arith.addf %153, %156 : vector<32x512xf32>
    %cst_68 = arith.constant 5.000000e-01 : f32
    %158 = vector.broadcast %cst_68 : f32 to vector<32x512xf32>
    %159 = arith.mulf %158, %157 : vector<32x512xf32>
    %cst_69 = arith.constant 4.471500e-02 : f32
    %160 = vector.broadcast %cst_69 : f32 to vector<32x512xf32>
    %161 = arith.mulf %160, %157 : vector<32x512xf32>
    %162 = arith.mulf %161, %157 : vector<32x512xf32>
    %163 = arith.mulf %162, %157 : vector<32x512xf32>
    %164 = arith.addf %157, %163 : vector<32x512xf32>
    %cst_70 = arith.constant 0.797884583 : f32
    %165 = vector.broadcast %cst_70 : f32 to vector<32x512xf32>
    %166 = arith.mulf %165, %164 : vector<32x512xf32>
    %167 = math.tanh %166 : vector<32x512xf32>
    %cst_71 = arith.constant 1.000000e+00 : f32
    %168 = vector.broadcast %cst_71 : f32 to vector<32x512xf32>
    %169 = arith.addf %168, %167 : vector<32x512xf32>
    %170 = arith.mulf %159, %169 : vector<32x512xf32>
    %c0_72 = arith.constant 0 : index
    %c0_73 = arith.constant 0 : index
    %c0_74 = arith.constant 0 : index
    %171 = vector.load %arg14[%c0_72, %c0_73, %c0_74] : memref<2x512x256xbf16, #tpu.memory_space<vmem>>, vector<1x512x256xbf16>
    %172 = vector.shape_cast %171 : vector<1x512x256xbf16> to vector<512x256xbf16>
    %173 = arith.truncf %170 : vector<32x512xf32> to vector<32x512xbf16>
    %cst_75 = arith.constant dense<0.000000e+00> : vector<32x256xf32>
    %174 = tpu.matmul %173, %172, %cst_75 {dimension_numbers = #tpu.dot_dimension_numbers<[1], [0], [0], [1], [0, 0, 1, 1], [], []>} : vector<32x512xbf16>, vector<512x256xbf16>, vector<32x256xf32> -> vector<32x256xf32>
    %175 = arith.addf %123, %174 : vector<32x256xf32>
    %c0_76 = arith.constant 0 : index
    %c0_77 = arith.constant 0 : index
    %c0_78 = arith.constant 0 : index
    %176 = vector.load %arg15[%c0_76, %c0_77, %c0_78] : memref<2x1x256xf32, #tpu.memory_space<vmem>>, vector<1x1x256xf32>
    %177 = vector.shape_cast %176 : vector<1x1x256xf32> to vector<1x256xf32>
    %178 = vector.broadcast %177 : vector<1x256xf32> to vector<32x256xf32>
    %179 = arith.addf %175, %178 : vector<32x256xf32>
    %c1 = arith.constant 1 : index
    %c0_79 = arith.constant 0 : index
    %c0_80 = arith.constant 0 : index
    %180 = vector.load %arg4[%c1, %c0_79, %c0_80] : memref<2x1x256xf32, #tpu.memory_space<vmem>>, vector<1x1x256xf32>
    %181 = vector.shape_cast %180 : vector<1x1x256xf32> to vector<1x256xf32>
    %c1_81 = arith.constant 1 : index
    %c0_82 = arith.constant 0 : index
    %c0_83 = arith.constant 0 : index
    %182 = vector.load %arg5[%c1_81, %c0_82, %c0_83] : memref<2x1x256xf32, #tpu.memory_space<vmem>>, vector<1x1x256xf32>
    %183 = vector.shape_cast %182 : vector<1x1x256xf32> to vector<1x256xf32>
    %cst_84 = arith.constant dense<0.000000e+00> : vector<32xf32>
    %184 = vector.multi_reduction <add>, %179, %cst_84 [1] : vector<32x256xf32> to vector<32xf32>
    %185 = vector.shape_cast %184 : vector<32xf32> to vector<32x1xf32>
    %cst_85 = arith.constant 2.560000e+02 : f32
    %186 = vector.broadcast %cst_85 : f32 to vector<32x1xf32>
    %187 = arith.divf %185, %186 : vector<32x1xf32>
    %188 = vector.broadcast %187 : vector<32x1xf32> to vector<32x256xf32>
    %189 = arith.subf %179, %188 : vector<32x256xf32>
    %190 = arith.mulf %189, %189 : vector<32x256xf32>
    %cst_86 = arith.constant dense<0.000000e+00> : vector<32xf32>
    %191 = vector.multi_reduction <add>, %190, %cst_86 [1] : vector<32x256xf32> to vector<32xf32>
    %192 = vector.shape_cast %191 : vector<32xf32> to vector<32x1xf32>
    %cst_87 = arith.constant 2.560000e+02 : f32
    %193 = vector.broadcast %cst_87 : f32 to vector<32x1xf32>
    %194 = arith.divf %192, %193 : vector<32x1xf32>
    %195 = vector.broadcast %187 : vector<32x1xf32> to vector<32x256xf32>
    %196 = arith.subf %179, %195 : vector<32x256xf32>
    %cst_88 = arith.constant 9.99999997E-7 : f32
    %197 = vector.broadcast %cst_88 : f32 to vector<32x1xf32>
    %198 = arith.addf %194, %197 : vector<32x1xf32>
    %199 = math.rsqrt %198 : vector<32x1xf32>
    %200 = vector.broadcast %199 : vector<32x1xf32> to vector<32x256xf32>
    %201 = arith.mulf %196, %200 : vector<32x256xf32>
    %202 = vector.broadcast %181 : vector<1x256xf32> to vector<32x256xf32>
    %203 = arith.mulf %201, %202 : vector<32x256xf32>
    %204 = vector.broadcast %183 : vector<1x256xf32> to vector<32x256xf32>
    %205 = arith.addf %203, %204 : vector<32x256xf32>
    %c1_89 = arith.constant 1 : index
    %c0_90 = arith.constant 0 : index
    %c0_91 = arith.constant 0 : index
    %206 = vector.load %arg6[%c1_89, %c0_90, %c0_91] : memref<2x256x768xbf16, #tpu.memory_space<vmem>>, vector<1x256x768xbf16>
    %207 = vector.shape_cast %206 : vector<1x256x768xbf16> to vector<256x768xbf16>
    %208 = arith.truncf %205 : vector<32x256xf32> to vector<32x256xbf16>
    %cst_92 = arith.constant dense<0.000000e+00> : vector<32x768xf32>
    %209 = tpu.matmul %208, %207, %cst_92 {dimension_numbers = #tpu.dot_dimension_numbers<[1], [0], [0], [1], [0, 0, 1, 1], [], []>} : vector<32x256xbf16>, vector<256x768xbf16>, vector<32x768xf32> -> vector<32x768xf32>
    %c1_93 = arith.constant 1 : index
    %c0_94 = arith.constant 0 : index
    %c0_95 = arith.constant 0 : index
    %210 = vector.load %arg7[%c1_93, %c0_94, %c0_95] : memref<2x1x768xf32, #tpu.memory_space<vmem>>, vector<1x1x768xf32>
    %211 = vector.shape_cast %210 : vector<1x1x768xf32> to vector<1x768xf32>
    %212 = vector.broadcast %211 : vector<1x768xf32> to vector<32x768xf32>
    %213 = arith.addf %209, %212 : vector<32x768xf32>
    %214 = arith.truncf %213 : vector<32x768xf32> to vector<32x768xbf16>
    %215 = vector.extract_strided_slice %214 {offsets = [0, 0], sizes = [16, 128], strides = [1, 1]} : vector<32x768xbf16> to vector<16x128xbf16>
    %216 = vector.extract_strided_slice %214 {offsets = [0, 256], sizes = [16, 128], strides = [1, 1]} : vector<32x768xbf16> to vector<16x128xbf16>
    %217 = vector.extract_strided_slice %214 {offsets = [0, 512], sizes = [16, 128], strides = [1, 1]} : vector<32x768xbf16> to vector<16x128xbf16>
    %cst_96 = arith.constant dense<0.000000e+00> : vector<16x16xf32>
    %218 = tpu.matmul %215, %216, %cst_96 {dimension_numbers = #tpu.dot_dimension_numbers<[1], [1], [0], [0], [0, 0, 1, 0], [], []>} : vector<16x128xbf16>, vector<16x128xbf16>, vector<16x16xf32> -> vector<16x16xf32>
    %cst_97 = arith.constant 0.0883883461 : f32
    %219 = vector.broadcast %cst_97 : f32 to vector<16x16xf32>
    %220 = arith.mulf %218, %219 : vector<16x16xf32>
    %cst_98 = arith.constant dense<0xFF800000> : vector<16xf32>
    %221 = vector.multi_reduction <maximumf>, %220, %cst_98 [1] : vector<16x16xf32> to vector<16xf32>
    %222 = vector.shape_cast %221 : vector<16xf32> to vector<16x1xf32>
    %223 = vector.broadcast %222 : vector<16x1xf32> to vector<16x16xf32>
    %224 = arith.subf %220, %223 : vector<16x16xf32>
    %225 = math.exp %224 : vector<16x16xf32>
    %cst_99 = arith.constant dense<0.000000e+00> : vector<16xf32>
    %226 = vector.multi_reduction <add>, %225, %cst_99 [1] : vector<16x16xf32> to vector<16xf32>
    %227 = vector.shape_cast %226 : vector<16xf32> to vector<16x1xf32>
    %228 = vector.broadcast %227 : vector<16x1xf32> to vector<16x16xf32>
    %229 = arith.divf %225, %228 : vector<16x16xf32>
    %230 = arith.truncf %229 : vector<16x16xf32> to vector<16x16xbf16>
    %cst_100 = arith.constant dense<0.000000e+00> : vector<16x128xf32>
    %231 = tpu.matmul %230, %217, %cst_100 {dimension_numbers = #tpu.dot_dimension_numbers<[1], [0], [0], [1], [0, 0, 1, 1], [], []>} : vector<16x16xbf16>, vector<16x128xbf16>, vector<16x128xf32> -> vector<16x128xf32>
    %232 = arith.truncf %231 : vector<16x128xf32> to vector<16x128xbf16>
    %233 = vector.extract_strided_slice %214 {offsets = [0, 128], sizes = [16, 128], strides = [1, 1]} : vector<32x768xbf16> to vector<16x128xbf16>
    %234 = vector.extract_strided_slice %214 {offsets = [0, 384], sizes = [16, 128], strides = [1, 1]} : vector<32x768xbf16> to vector<16x128xbf16>
    %235 = vector.extract_strided_slice %214 {offsets = [0, 640], sizes = [16, 128], strides = [1, 1]} : vector<32x768xbf16> to vector<16x128xbf16>
    %cst_101 = arith.constant dense<0.000000e+00> : vector<16x16xf32>
    %236 = tpu.matmul %233, %234, %cst_101 {dimension_numbers = #tpu.dot_dimension_numbers<[1], [1], [0], [0], [0, 0, 1, 0], [], []>} : vector<16x128xbf16>, vector<16x128xbf16>, vector<16x16xf32> -> vector<16x16xf32>
    %cst_102 = arith.constant 0.0883883461 : f32
    %237 = vector.broadcast %cst_102 : f32 to vector<16x16xf32>
    %238 = arith.mulf %236, %237 : vector<16x16xf32>
    %cst_103 = arith.constant dense<0xFF800000> : vector<16xf32>
    %239 = vector.multi_reduction <maximumf>, %238, %cst_103 [1] : vector<16x16xf32> to vector<16xf32>
    %240 = vector.shape_cast %239 : vector<16xf32> to vector<16x1xf32>
    %241 = vector.broadcast %240 : vector<16x1xf32> to vector<16x16xf32>
    %242 = arith.subf %238, %241 : vector<16x16xf32>
    %243 = math.exp %242 : vector<16x16xf32>
    %cst_104 = arith.constant dense<0.000000e+00> : vector<16xf32>
    %244 = vector.multi_reduction <add>, %243, %cst_104 [1] : vector<16x16xf32> to vector<16xf32>
    %245 = vector.shape_cast %244 : vector<16xf32> to vector<16x1xf32>
    %246 = vector.broadcast %245 : vector<16x1xf32> to vector<16x16xf32>
    %247 = arith.divf %243, %246 : vector<16x16xf32>
    %248 = arith.truncf %247 : vector<16x16xf32> to vector<16x16xbf16>
    %cst_105 = arith.constant dense<0.000000e+00> : vector<16x128xf32>
    %249 = tpu.matmul %248, %235, %cst_105 {dimension_numbers = #tpu.dot_dimension_numbers<[1], [0], [0], [1], [0, 0, 1, 1], [], []>} : vector<16x16xbf16>, vector<16x128xbf16>, vector<16x128xf32> -> vector<16x128xf32>
    %250 = arith.truncf %249 : vector<16x128xf32> to vector<16x128xbf16>
    %251 = tpu.concatenate %232, %250 in 1 : vector<16x128xbf16>, vector<16x128xbf16> -> vector<16x256xbf16>
    %252 = vector.extract_strided_slice %214 {offsets = [16, 0], sizes = [16, 128], strides = [1, 1]} : vector<32x768xbf16> to vector<16x128xbf16>
    %253 = vector.extract_strided_slice %214 {offsets = [16, 256], sizes = [16, 128], strides = [1, 1]} : vector<32x768xbf16> to vector<16x128xbf16>
    %254 = vector.extract_strided_slice %214 {offsets = [16, 512], sizes = [16, 128], strides = [1, 1]} : vector<32x768xbf16> to vector<16x128xbf16>
    %cst_106 = arith.constant dense<0.000000e+00> : vector<16x16xf32>
    %255 = tpu.matmul %252, %253, %cst_106 {dimension_numbers = #tpu.dot_dimension_numbers<[1], [1], [0], [0], [0, 0, 1, 0], [], []>} : vector<16x128xbf16>, vector<16x128xbf16>, vector<16x16xf32> -> vector<16x16xf32>
    %cst_107 = arith.constant 0.0883883461 : f32
    %256 = vector.broadcast %cst_107 : f32 to vector<16x16xf32>
    %257 = arith.mulf %255, %256 : vector<16x16xf32>
    %cst_108 = arith.constant dense<0xFF800000> : vector<16xf32>
    %258 = vector.multi_reduction <maximumf>, %257, %cst_108 [1] : vector<16x16xf32> to vector<16xf32>
    %259 = vector.shape_cast %258 : vector<16xf32> to vector<16x1xf32>
    %260 = vector.broadcast %259 : vector<16x1xf32> to vector<16x16xf32>
    %261 = arith.subf %257, %260 : vector<16x16xf32>
    %262 = math.exp %261 : vector<16x16xf32>
    %cst_109 = arith.constant dense<0.000000e+00> : vector<16xf32>
    %263 = vector.multi_reduction <add>, %262, %cst_109 [1] : vector<16x16xf32> to vector<16xf32>
    %264 = vector.shape_cast %263 : vector<16xf32> to vector<16x1xf32>
    %265 = vector.broadcast %264 : vector<16x1xf32> to vector<16x16xf32>
    %266 = arith.divf %262, %265 : vector<16x16xf32>
    %267 = arith.truncf %266 : vector<16x16xf32> to vector<16x16xbf16>
    %cst_110 = arith.constant dense<0.000000e+00> : vector<16x128xf32>
    %268 = tpu.matmul %267, %254, %cst_110 {dimension_numbers = #tpu.dot_dimension_numbers<[1], [0], [0], [1], [0, 0, 1, 1], [], []>} : vector<16x16xbf16>, vector<16x128xbf16>, vector<16x128xf32> -> vector<16x128xf32>
    %269 = arith.truncf %268 : vector<16x128xf32> to vector<16x128xbf16>
    %270 = vector.extract_strided_slice %214 {offsets = [16, 128], sizes = [16, 128], strides = [1, 1]} : vector<32x768xbf16> to vector<16x128xbf16>
    %271 = vector.extract_strided_slice %214 {offsets = [16, 384], sizes = [16, 128], strides = [1, 1]} : vector<32x768xbf16> to vector<16x128xbf16>
    %272 = vector.extract_strided_slice %214 {offsets = [16, 640], sizes = [16, 128], strides = [1, 1]} : vector<32x768xbf16> to vector<16x128xbf16>
    %cst_111 = arith.constant dense<0.000000e+00> : vector<16x16xf32>
    %273 = tpu.matmul %270, %271, %cst_111 {dimension_numbers = #tpu.dot_dimension_numbers<[1], [1], [0], [0], [0, 0, 1, 0], [], []>} : vector<16x128xbf16>, vector<16x128xbf16>, vector<16x16xf32> -> vector<16x16xf32>
    %cst_112 = arith.constant 0.0883883461 : f32
    %274 = vector.broadcast %cst_112 : f32 to vector<16x16xf32>
    %275 = arith.mulf %273, %274 : vector<16x16xf32>
    %cst_113 = arith.constant dense<0xFF800000> : vector<16xf32>
    %276 = vector.multi_reduction <maximumf>, %275, %cst_113 [1] : vector<16x16xf32> to vector<16xf32>
    %277 = vector.shape_cast %276 : vector<16xf32> to vector<16x1xf32>
    %278 = vector.broadcast %277 : vector<16x1xf32> to vector<16x16xf32>
    %279 = arith.subf %275, %278 : vector<16x16xf32>
    %280 = math.exp %279 : vector<16x16xf32>
    %cst_114 = arith.constant dense<0.000000e+00> : vector<16xf32>
    %281 = vector.multi_reduction <add>, %280, %cst_114 [1] : vector<16x16xf32> to vector<16xf32>
    %282 = vector.shape_cast %281 : vector<16xf32> to vector<16x1xf32>
    %283 = vector.broadcast %282 : vector<16x1xf32> to vector<16x16xf32>
    %284 = arith.divf %280, %283 : vector<16x16xf32>
    %285 = arith.truncf %284 : vector<16x16xf32> to vector<16x16xbf16>
    %cst_115 = arith.constant dense<0.000000e+00> : vector<16x128xf32>
    %286 = tpu.matmul %285, %272, %cst_115 {dimension_numbers = #tpu.dot_dimension_numbers<[1], [0], [0], [1], [0, 0, 1, 1], [], []>} : vector<16x16xbf16>, vector<16x128xbf16>, vector<16x128xf32> -> vector<16x128xf32>
    %287 = arith.truncf %286 : vector<16x128xf32> to vector<16x128xbf16>
    %288 = tpu.concatenate %269, %287 in 1 : vector<16x128xbf16>, vector<16x128xbf16> -> vector<16x256xbf16>
    %289 = tpu.concatenate %251, %288 in 0 : vector<16x256xbf16>, vector<16x256xbf16> -> vector<32x256xbf16>
    %c1_116 = arith.constant 1 : index
    %c0_117 = arith.constant 0 : index
    %c0_118 = arith.constant 0 : index
    %290 = vector.load %arg8[%c1_116, %c0_117, %c0_118] : memref<2x256x256xbf16, #tpu.memory_space<vmem>>, vector<1x256x256xbf16>
    %291 = vector.shape_cast %290 : vector<1x256x256xbf16> to vector<256x256xbf16>
    %cst_119 = arith.constant dense<0.000000e+00> : vector<32x256xf32>
    %292 = tpu.matmul %289, %291, %cst_119 {dimension_numbers = #tpu.dot_dimension_numbers<[1], [0], [0], [1], [0, 0, 1, 1], [], []>} : vector<32x256xbf16>, vector<256x256xbf16>, vector<32x256xf32> -> vector<32x256xf32>
    %293 = arith.addf %179, %292 : vector<32x256xf32>
    %c1_120 = arith.constant 1 : index
    %c0_121 = arith.constant 0 : index
    %c0_122 = arith.constant 0 : index
    %294 = vector.load %arg9[%c1_120, %c0_121, %c0_122] : memref<2x1x256xf32, #tpu.memory_space<vmem>>, vector<1x1x256xf32>
    %295 = vector.shape_cast %294 : vector<1x1x256xf32> to vector<1x256xf32>
    %296 = vector.broadcast %295 : vector<1x256xf32> to vector<32x256xf32>
    %297 = arith.addf %293, %296 : vector<32x256xf32>
    %c1_123 = arith.constant 1 : index
    %c0_124 = arith.constant 0 : index
    %c0_125 = arith.constant 0 : index
    %298 = vector.load %arg10[%c1_123, %c0_124, %c0_125] : memref<2x1x256xf32, #tpu.memory_space<vmem>>, vector<1x1x256xf32>
    %299 = vector.shape_cast %298 : vector<1x1x256xf32> to vector<1x256xf32>
    %c1_126 = arith.constant 1 : index
    %c0_127 = arith.constant 0 : index
    %c0_128 = arith.constant 0 : index
    %300 = vector.load %arg11[%c1_126, %c0_127, %c0_128] : memref<2x1x256xf32, #tpu.memory_space<vmem>>, vector<1x1x256xf32>
    %301 = vector.shape_cast %300 : vector<1x1x256xf32> to vector<1x256xf32>
    %cst_129 = arith.constant dense<0.000000e+00> : vector<32xf32>
    %302 = vector.multi_reduction <add>, %297, %cst_129 [1] : vector<32x256xf32> to vector<32xf32>
    %303 = vector.shape_cast %302 : vector<32xf32> to vector<32x1xf32>
    %cst_130 = arith.constant 2.560000e+02 : f32
    %304 = vector.broadcast %cst_130 : f32 to vector<32x1xf32>
    %305 = arith.divf %303, %304 : vector<32x1xf32>
    %306 = vector.broadcast %305 : vector<32x1xf32> to vector<32x256xf32>
    %307 = arith.subf %297, %306 : vector<32x256xf32>
    %308 = arith.mulf %307, %307 : vector<32x256xf32>
    %cst_131 = arith.constant dense<0.000000e+00> : vector<32xf32>
    %309 = vector.multi_reduction <add>, %308, %cst_131 [1] : vector<32x256xf32> to vector<32xf32>
    %310 = vector.shape_cast %309 : vector<32xf32> to vector<32x1xf32>
    %cst_132 = arith.constant 2.560000e+02 : f32
    %311 = vector.broadcast %cst_132 : f32 to vector<32x1xf32>
    %312 = arith.divf %310, %311 : vector<32x1xf32>
    %313 = vector.broadcast %305 : vector<32x1xf32> to vector<32x256xf32>
    %314 = arith.subf %297, %313 : vector<32x256xf32>
    %cst_133 = arith.constant 9.99999997E-7 : f32
    %315 = vector.broadcast %cst_133 : f32 to vector<32x1xf32>
    %316 = arith.addf %312, %315 : vector<32x1xf32>
    %317 = math.rsqrt %316 : vector<32x1xf32>
    %318 = vector.broadcast %317 : vector<32x1xf32> to vector<32x256xf32>
    %319 = arith.mulf %314, %318 : vector<32x256xf32>
    %320 = vector.broadcast %299 : vector<1x256xf32> to vector<32x256xf32>
    %321 = arith.mulf %319, %320 : vector<32x256xf32>
    %322 = vector.broadcast %301 : vector<1x256xf32> to vector<32x256xf32>
    %323 = arith.addf %321, %322 : vector<32x256xf32>
    %c1_134 = arith.constant 1 : index
    %c0_135 = arith.constant 0 : index
    %c0_136 = arith.constant 0 : index
    %324 = vector.load %arg12[%c1_134, %c0_135, %c0_136] : memref<2x256x512xbf16, #tpu.memory_space<vmem>>, vector<1x256x512xbf16>
    %325 = vector.shape_cast %324 : vector<1x256x512xbf16> to vector<256x512xbf16>
    %326 = arith.truncf %323 : vector<32x256xf32> to vector<32x256xbf16>
    %cst_137 = arith.constant dense<0.000000e+00> : vector<32x512xf32>
    %327 = tpu.matmul %326, %325, %cst_137 {dimension_numbers = #tpu.dot_dimension_numbers<[1], [0], [0], [1], [0, 0, 1, 1], [], []>} : vector<32x256xbf16>, vector<256x512xbf16>, vector<32x512xf32> -> vector<32x512xf32>
    %c1_138 = arith.constant 1 : index
    %c0_139 = arith.constant 0 : index
    %c0_140 = arith.constant 0 : index
    %328 = vector.load %arg13[%c1_138, %c0_139, %c0_140] : memref<2x1x512xf32, #tpu.memory_space<vmem>>, vector<1x1x512xf32>
    %329 = vector.shape_cast %328 : vector<1x1x512xf32> to vector<1x512xf32>
    %330 = vector.broadcast %329 : vector<1x512xf32> to vector<32x512xf32>
    %331 = arith.addf %327, %330 : vector<32x512xf32>
    %cst_141 = arith.constant 5.000000e-01 : f32
    %332 = vector.broadcast %cst_141 : f32 to vector<32x512xf32>
    %333 = arith.mulf %332, %331 : vector<32x512xf32>
    %cst_142 = arith.constant 4.471500e-02 : f32
    %334 = vector.broadcast %cst_142 : f32 to vector<32x512xf32>
    %335 = arith.mulf %334, %331 : vector<32x512xf32>
    %336 = arith.mulf %335, %331 : vector<32x512xf32>
    %337 = arith.mulf %336, %331 : vector<32x512xf32>
    %338 = arith.addf %331, %337 : vector<32x512xf32>
    %cst_143 = arith.constant 0.797884583 : f32
    %339 = vector.broadcast %cst_143 : f32 to vector<32x512xf32>
    %340 = arith.mulf %339, %338 : vector<32x512xf32>
    %341 = math.tanh %340 : vector<32x512xf32>
    %cst_144 = arith.constant 1.000000e+00 : f32
    %342 = vector.broadcast %cst_144 : f32 to vector<32x512xf32>
    %343 = arith.addf %342, %341 : vector<32x512xf32>
    %344 = arith.mulf %333, %343 : vector<32x512xf32>
    %c1_145 = arith.constant 1 : index
    %c0_146 = arith.constant 0 : index
    %c0_147 = arith.constant 0 : index
    %345 = vector.load %arg14[%c1_145, %c0_146, %c0_147] : memref<2x512x256xbf16, #tpu.memory_space<vmem>>, vector<1x512x256xbf16>
    %346 = vector.shape_cast %345 : vector<1x512x256xbf16> to vector<512x256xbf16>
    %347 = arith.truncf %344 : vector<32x512xf32> to vector<32x512xbf16>
    %cst_148 = arith.constant dense<0.000000e+00> : vector<32x256xf32>
    %348 = tpu.matmul %347, %346, %cst_148 {dimension_numbers = #tpu.dot_dimension_numbers<[1], [0], [0], [1], [0, 0, 1, 1], [], []>} : vector<32x512xbf16>, vector<512x256xbf16>, vector<32x256xf32> -> vector<32x256xf32>
    %349 = arith.addf %297, %348 : vector<32x256xf32>
    %c1_149 = arith.constant 1 : index
    %c0_150 = arith.constant 0 : index
    %c0_151 = arith.constant 0 : index
    %350 = vector.load %arg15[%c1_149, %c0_150, %c0_151] : memref<2x1x256xf32, #tpu.memory_space<vmem>>, vector<1x1x256xf32>
    %351 = vector.shape_cast %350 : vector<1x1x256xf32> to vector<1x256xf32>
    %352 = vector.broadcast %351 : vector<1x256xf32> to vector<32x256xf32>
    %353 = arith.addf %349, %352 : vector<32x256xf32>
    %c0_152 = arith.constant 0 : index
    %c0_153 = arith.constant 0 : index
    %354 = vector.load %arg16[%c0_152, %c0_153] : memref<1x256xf32, #tpu.memory_space<vmem>>, vector<1x256xf32>
    %c0_154 = arith.constant 0 : index
    %c0_155 = arith.constant 0 : index
    %355 = vector.load %arg17[%c0_154, %c0_155] : memref<1x256xf32, #tpu.memory_space<vmem>>, vector<1x256xf32>
    %cst_156 = arith.constant dense<0.000000e+00> : vector<32xf32>
    %356 = vector.multi_reduction <add>, %353, %cst_156 [1] : vector<32x256xf32> to vector<32xf32>
    %357 = vector.shape_cast %356 : vector<32xf32> to vector<32x1xf32>
    %cst_157 = arith.constant 2.560000e+02 : f32
    %358 = vector.broadcast %cst_157 : f32 to vector<32x1xf32>
    %359 = arith.divf %357, %358 : vector<32x1xf32>
    %360 = vector.broadcast %359 : vector<32x1xf32> to vector<32x256xf32>
    %361 = arith.subf %353, %360 : vector<32x256xf32>
    %362 = arith.mulf %361, %361 : vector<32x256xf32>
    %cst_158 = arith.constant dense<0.000000e+00> : vector<32xf32>
    %363 = vector.multi_reduction <add>, %362, %cst_158 [1] : vector<32x256xf32> to vector<32xf32>
    %364 = vector.shape_cast %363 : vector<32xf32> to vector<32x1xf32>
    %cst_159 = arith.constant 2.560000e+02 : f32
    %365 = vector.broadcast %cst_159 : f32 to vector<32x1xf32>
    %366 = arith.divf %364, %365 : vector<32x1xf32>
    %367 = vector.broadcast %359 : vector<32x1xf32> to vector<32x256xf32>
    %368 = arith.subf %353, %367 : vector<32x256xf32>
    %cst_160 = arith.constant 9.99999997E-7 : f32
    %369 = vector.broadcast %cst_160 : f32 to vector<32x1xf32>
    %370 = arith.addf %366, %369 : vector<32x1xf32>
    %371 = math.rsqrt %370 : vector<32x1xf32>
    %372 = vector.broadcast %371 : vector<32x1xf32> to vector<32x256xf32>
    %373 = arith.mulf %368, %372 : vector<32x256xf32>
    %374 = vector.broadcast %354 : vector<1x256xf32> to vector<32x256xf32>
    %375 = arith.mulf %373, %374 : vector<32x256xf32>
    %376 = vector.broadcast %355 : vector<1x256xf32> to vector<32x256xf32>
    %377 = arith.addf %375, %376 : vector<32x256xf32>
    %c0_161 = arith.constant 0 : index
    %c0_162 = arith.constant 0 : index
    %378 = vector.load %arg18[%c0_161, %c0_162] : memref<32x256xf32, #tpu.memory_space<vmem>>, vector<32x256xf32>
    tpu.vector_store %arg18[%c0_161, %c0_162], %377 {strides = array<i32>} : memref<32x256xf32, #tpu.memory_space<vmem>>, vector<32x256xf32>,
    return
  }
  func.func @transform_0(%arg0: i32) -> (i32, i32) {
    %c0_i32 = arith.constant 0 : i32
    %c0_i32_0 = arith.constant 0 : i32
    return %arg0, %c0_i32 : i32, i32
  }
  func.func @transform_1(%arg0: i32) -> (i32, i32) {
    %c0_i32 = arith.constant 0 : i32
    %c0_i32_0 = arith.constant 0 : i32
    %c0_i32_1 = arith.constant 0 : i32
    return %c0_i32, %c0_i32_0 : i32, i32
  }
  func.func @transform_2(%arg0: i32) -> (i32, i32) {
    %c0_i32 = arith.constant 0 : i32
    %c0_i32_0 = arith.constant 0 : i32
    %c0_i32_1 = arith.constant 0 : i32
    return %c0_i32, %c0_i32_0 : i32, i32
  }
  func.func @transform_3(%arg0: i32) -> (i32, i32, i32) {
    %c0_i32 = arith.constant 0 : i32
    %c0_i32_0 = arith.constant 0 : i32
    %c0_i32_1 = arith.constant 0 : i32
    %c0_i32_2 = arith.constant 0 : i32
    return %c0_i32, %c0_i32_0, %c0_i32_1 : i32, i32, i32
  }
  func.func @transform_4(%arg0: i32) -> (i32, i32, i32) {
    %c0_i32 = arith.constant 0 : i32
    %c0_i32_0 = arith.constant 0 : i32
    %c0_i32_1 = arith.constant 0 : i32
    %c0_i32_2 = arith.constant 0 : i32
    return %c0_i32, %c0_i32_0, %c0_i32_1 : i32, i32, i32
  }
  func.func @transform_5(%arg0: i32) -> (i32, i32, i32) {
    %c0_i32 = arith.constant 0 : i32
    %c0_i32_0 = arith.constant 0 : i32
    %c0_i32_1 = arith.constant 0 : i32
    %c0_i32_2 = arith.constant 0 : i32
    return %c0_i32, %c0_i32_0, %c0_i32_1 : i32, i32, i32
  }
  func.func @transform_6(%arg0: i32) -> (i32, i32, i32) {
    %c0_i32 = arith.constant 0 : i32
    %c0_i32_0 = arith.constant 0 : i32
    %c0_i32_1 = arith.constant 0 : i32
    %c0_i32_2 = arith.constant 0 : i32
    return %c0_i32, %c0_i32_0, %c0_i32_1 : i32, i32, i32
  }
  func.func @transform_7(%arg0: i32) -> (i32, i32, i32) {
    %c0_i32 = arith.constant 0 : i32
    %c0_i32_0 = arith.constant 0 : i32
    %c0_i32_1 = arith.constant 0 : i32
    %c0_i32_2 = arith.constant 0 : i32
    return %c0_i32, %c0_i32_0, %c0_i32_1 : i32, i32, i32
  }
  func.func @transform_8(%arg0: i32) -> (i32, i32, i32) {
    %c0_i32 = arith.constant 0 : i32
    %c0_i32_0 = arith.constant 0 : i32
    %c0_i32_1 = arith.constant 0 : i32
    %c0_i32_2 = arith.constant 0 : i32
    return %c0_i32, %c0_i32_0, %c0_i32_1 : i32, i32, i32
  }
  func.func @transform_9(%arg0: i32) -> (i32, i32, i32) {
    %c0_i32 = arith.constant 0 : i32
    %c0_i32_0 = arith.constant 0 : i32
    %c0_i32_1 = arith.constant 0 : i32
    %c0_i32_2 = arith.constant 0 : i32
    return %c0_i32, %c0_i32_0, %c0_i32_1 : i32, i32, i32
  }
  func.func @transform_10(%arg0: i32) -> (i32, i32, i32) {
    %c0_i32 = arith.constant 0 : i32
    %c0_i32_0 = arith.constant 0 : i32
    %c0_i32_1 = arith.constant 0 : i32
    %c0_i32_2 = arith.constant 0 : i32
    return %c0_i32, %c0_i32_0, %c0_i32_1 : i32, i32, i32
  }
  func.func @transform_11(%arg0: i32) -> (i32, i32, i32) {
    %c0_i32 = arith.constant 0 : i32
    %c0_i32_0 = arith.constant 0 : i32
    %c0_i32_1 = arith.constant 0 : i32
    %c0_i32_2 = arith.constant 0 : i32
    return %c0_i32, %c0_i32_0, %c0_i32_1 : i32, i32, i32
  }
  func.func @transform_12(%arg0: i32) -> (i32, i32, i32) {
    %c0_i32 = arith.constant 0 : i32
    %c0_i32_0 = arith.constant 0 : i32
    %c0_i32_1 = arith.constant 0 : i32
    %c0_i32_2 = arith.constant 0 : i32
    return %c0_i32, %c0_i32_0, %c0_i32_1 : i32, i32, i32
  }
  func.func @transform_13(%arg0: i32) -> (i32, i32, i32) {
    %c0_i32 = arith.constant 0 : i32
    %c0_i32_0 = arith.constant 0 : i32
    %c0_i32_1 = arith.constant 0 : i32
    %c0_i32_2 = arith.constant 0 : i32
    return %c0_i32, %c0_i32_0, %c0_i32_1 : i32, i32, i32
  }
  func.func @transform_14(%arg0: i32) -> (i32, i32, i32) {
    %c0_i32 = arith.constant 0 : i32
    %c0_i32_0 = arith.constant 0 : i32
    %c0_i32_1 = arith.constant 0 : i32
    %c0_i32_2 = arith.constant 0 : i32
    return %c0_i32, %c0_i32_0, %c0_i32_1 : i32, i32, i32
  }
  func.func @transform_15(%arg0: i32) -> (i32, i32) {
    %c0_i32 = arith.constant 0 : i32
    %c0_i32_0 = arith.constant 0 : i32
    %c0_i32_1 = arith.constant 0 : i32
    return %c0_i32, %c0_i32_0 : i32, i32
  }
  func.func @transform_16(%arg0: i32) -> (i32, i32) {
    %c0_i32 = arith.constant 0 : i32
    %c0_i32_0 = arith.constant 0 : i32
    %c0_i32_1 = arith.constant 0 : i32
    return %c0_i32, %c0_i32_0 : i32, i32
  }
  func.func @transform_17(%arg0: i32) -> (i32, i32) {
    %c0_i32 = arith.constant 0 : i32
    %c0_i32_0 = arith.constant 0 : i32
    return %arg0, %c0_i32 : i32, i32
  }
}

</mosaic_0001>

<llo_original>
// kernel: siglip_vision_model.1
$region0: #{siglip_vision_model.1}
  #allocation0 [shape = 'u32[]', space=smem, size = 0x4, offset = 0x4, fixed_abs, tag = 'smem constant byte address 0x4 - core index']
  #allocation1 [shape = 'u32[144,128]{1,0:T(1,128)}', space=vmem, size = 0x12000, scoped, tag = 'internal scratch']
  %s0 = inlined_call_operand.vmem [shape: f32[32,256], index: 0, kind: input, shape index: {}]
  %s1 = inlined_call_operand.vmem [shape: bf16[256,256], index: 1, kind: input, shape index: {}]
  %s2 = inlined_call_operand.vmem [shape: f32[32,256], index: 2, kind: input, shape index: {}]
  %s3 = inlined_call_operand.vmem [shape: f32[2,1,256], index: 3, kind: input, shape index: {}]
  %s4 = inlined_call_operand.vmem [shape: f32[2,1,256], index: 4, kind: input, shape index: {}]
  %s5 = inlined_call_operand.vmem [shape: bf16[2,256,768], index: 5, kind: input, shape index: {}]
  %s6 = inlined_call_operand.vmem [shape: f32[2,1,768], index: 6, kind: input, shape index: {}]
  %s7 = inlined_call_operand.hbm [shape: bf16[2,256,256], index: 7, kind: input, shape index: {}]
  %s8 = inlined_call_operand.vmem [shape: f32[2,1,256], index: 8, kind: input, shape index: {}]
  %s9 = inlined_call_operand.vmem [shape: f32[2,1,256], index: 9, kind: input, shape index: {}]
  %s10 = inlined_call_operand.vmem [shape: f32[2,1,256], index: 10, kind: input, shape index: {}]
  %s11 = inlined_call_operand.vmem [shape: bf16[2,256,512], index: 11, kind: input, shape index: {}]
  %s12 = inlined_call_operand.vmem [shape: f32[2,1,512], index: 12, kind: input, shape index: {}]
  %s13 = inlined_call_operand.vmem [shape: bf16[2,512,256], index: 13, kind: input, shape index: {}]
  %s14 = inlined_call_operand.vmem [shape: f32[2,1,256], index: 14, kind: input, shape index: {}]
  %s15 = inlined_call_operand.vmem [shape: f32[1,256], index: 15, kind: input, shape index: {}]
  %s16 = inlined_call_operand.vmem [shape: f32[1,256], index: 16, kind: input, shape index: {}]
  %s17 = inlined_call_operand.hbm [shape: f32[32,256], index: 17, kind: output, shape index: {}]
  %s18 = sld [smem:[#allocation0]]
  $region82: #{siglip_vision_model.1} parent=0
    _
  %s20 = ssub.s32 1, %s18
  %s21 = scalar_select 0, %s20, %s18
  $region1: #{siglip_vision_model.1} parent=0
    #allocation2 [shape = 'u8[262144]{0}', space=vmem, size = 0x40000, scoped, tag = 'input window, operand 7, single buffered']
    #allocation3 [shape = 's32[1]{0}', space=sflag, size = 0x4, scoped, tag = 'scoped memory for siglip_vision_model.1']
    #allocation4 [shape = 's32[1]{0}', space=sflag, size = 0x4, scoped, tag = 'scoped memory for siglip_vision_model.1']
    #allocation5 [shape = 'u8[32768]{0}', space=vmem, size = 0x8000, scoped, tag = 'output window, operand 0, single buffered']
    %22 = vsyncpa [#allocation3], 0
    %23 = vsyncpa [#allocation4], 0
    // Predicated region
    $region2: #{siglip_vision_model.1} parent=1 // pred_check
      _
    $region3: #{siglip_vision_model.1} parent=1 // pred_check_branch
      %25 = sbr.rel (0) target = $region5
    $region4: #{siglip_vision_model.1} parent=1 // pred_region
      _
    $region5: #{siglip_vision_model.1} parent=1 // pred_fallthru
      _
    // Predicated region
    $region6: #{siglip_vision_model.1} parent=1 // pred_check
      _
    $region7: #{siglip_vision_model.1} parent=1 // pred_check_branch
      %27 = sbr.rel (0) target = $region9
    $region8: #{siglip_vision_model.1} parent=1 // pred_region
      _
    $region9: #{siglip_vision_model.1} parent=1 // pred_fallthru
      _
    // Predicated region
    $region10: #{siglip_vision_model.1} parent=1 // pred_check
      _
    $region11: #{siglip_vision_model.1} parent=1 // pred_check_branch
      %29 = sbr.rel (0) target = $region13
    $region12: #{siglip_vision_model.1} parent=1 // pred_region
      _
    $region13: #{siglip_vision_model.1} parent=1 // pred_fallthru
      _
    // Predicated region
    $region14: #{siglip_vision_model.1} parent=1 // pred_check
      _
    $region15: #{siglip_vision_model.1} parent=1 // pred_check_branch
      %31 = sbr.rel (0) target = $region17
    $region16: #{siglip_vision_model.1} parent=1 // pred_region
      _
    $region17: #{siglip_vision_model.1} parent=1 // pred_fallthru
      _
    // Predicated region
    $region18: #{siglip_vision_model.1} parent=1 // pred_check
      _
    $region19: #{siglip_vision_model.1} parent=1 // pred_check_branch
      %33 = sbr.rel (0) target = $region21
    $region20: #{siglip_vision_model.1} parent=1 // pred_region
      _
    $region21: #{siglip_vision_model.1} parent=1 // pred_fallthru
      _
    // Predicated region
    $region22: #{siglip_vision_model.1} parent=1 // pred_check
      _
    $region23: #{siglip_vision_model.1} parent=1 // pred_check_branch
      %35 = sbr.rel (0) target = $region25
    $region24: #{siglip_vision_model.1} parent=1 // pred_region
      _
    $region25: #{siglip_vision_model.1} parent=1 // pred_fallthru
      _
    // Predicated region
    $region26: #{siglip_vision_model.1} parent=1 // pred_check
      _
    $region27: #{siglip_vision_model.1} parent=1 // pred_check_branch
      %37 = sbr.rel (0) target = $region29
    $region28: #{siglip_vision_model.1} parent=1 // pred_region
      _
    $region29: #{siglip_vision_model.1} parent=1 // pred_fallthru
      _
    // Predicated region
    $region30: #{siglip_vision_model.1} parent=1 // pred_check
      _
    $region31: #{siglip_vision_model.1} parent=1 // pred_check_branch
      %39 = sbr.rel (0) target = $region33
    $region32: #{siglip_vision_model.1} parent=1 // pred_region
      %s41 = ssub.s32 8192, 8192
      %42 = vsyncadd [#allocation3], %s41
      %s43 = sshll.u32 [#allocation2], 4
      %s44 = int_to_ptr.vmem [resolvable:$true] %s43
      %49 = dma.hbm_to_vmem [thread:$0]  %s7, 8192, %s44, [#allocation3], 128, 128, 8
    $region33: #{siglip_vision_model.1} parent=1 // pred_fallthru
      _
    // Predicated region
    $region34: #{siglip_vision_model.1} parent=1 // pred_check
      _
    $region35: #{siglip_vision_model.1} parent=1 // pred_check_branch
      %51 = sbr.rel (0) target = $region37
    $region36: #{siglip_vision_model.1} parent=1 // pred_region
      _
    $region37: #{siglip_vision_model.1} parent=1 // pred_fallthru
      _
    // Predicated region
    $region38: #{siglip_vision_model.1} parent=1 // pred_check
      _
    $region39: #{siglip_vision_model.1} parent=1 // pred_check_branch
      %53 = sbr.rel (0) target = $region41
    $region40: #{siglip_vision_model.1} parent=1 // pred_region
      _
    $region41: #{siglip_vision_model.1} parent=1 // pred_fallthru
      _
    // Predicated region
    $region42: #{siglip_vision_model.1} parent=1 // pred_check
      _
    $region43: #{siglip_vision_model.1} parent=1 // pred_check_branch
      %55 = sbr.rel (0) target = $region45
    $region44: #{siglip_vision_model.1} parent=1 // pred_region
      _
    $region45: #{siglip_vision_model.1} parent=1 // pred_fallthru
      _
    // Predicated region
    $region46: #{siglip_vision_model.1} parent=1 // pred_check
      _
    $region47: #{siglip_vision_model.1} parent=1 // pred_check_branch
      %57 = sbr.rel (0) target = $region49
    $region48: #{siglip_vision_model.1} parent=1 // pred_region
      _
    $region49: #{siglip_vision_model.1} parent=1 // pred_fallthru
      _
    // Predicated region
    $region50: #{siglip_vision_model.1} parent=1 // pred_check
      _
    $region51: #{siglip_vision_model.1} parent=1 // pred_check_branch
      %59 = sbr.rel (0) target = $region53
    $region52: #{siglip_vision_model.1} parent=1 // pred_region
      _
    $region53: #{siglip_vision_model.1} parent=1 // pred_fallthru
      _
    // Predicated region
    $region54: #{siglip_vision_model.1} parent=1 // pred_check
      _
    $region55: #{siglip_vision_model.1} parent=1 // pred_check_branch
      %61 = sbr.rel (0) target = $region57
    $region56: #{siglip_vision_model.1} parent=1 // pred_region
      _
    $region57: #{siglip_vision_model.1} parent=1 // pred_fallthru
      _
    // Predicated region
    $region58: #{siglip_vision_model.1} parent=1 // pred_check
      _
    $region59: #{siglip_vision_model.1} parent=1 // pred_check_branch
      %63 = sbr.rel (0) target = $region61
    $region60: #{siglip_vision_model.1} parent=1 // pred_region
      _
    $region61: #{siglip_vision_model.1} parent=1 // pred_fallthru
      _
    // Predicated region
    $region62: #{siglip_vision_model.1} parent=1 // pred_check
      _
    $region63: #{siglip_vision_model.1} parent=1 // pred_check_branch
      %65 = sbr.rel (0) target = $region65
    $region64: #{siglip_vision_model.1} parent=1 // pred_region
      _
    $region65: #{siglip_vision_model.1} parent=1 // pred_fallthru
      _
    // Predicated region
    $region66: #{siglip_vision_model.1} parent=1 // pred_check
      _
    $region67: #{siglip_vision_model.1} parent=1 // pred_check_branch
      %67 = sbr.rel (0) target = $region69
    $region68: #{siglip_vision_model.1} parent=1 // pred_region
      _
    $region69: #{siglip_vision_model.1} parent=1 // pred_fallthru
      _
    // Predicated region
    $region70: #{siglip_vision_model.1} parent=1 // pred_check
      _
    $region71: #{siglip_vision_model.1} parent=1 // pred_check_branch
      %69 = sbr.rel (0) target = $region73
    $region72: #{siglip_vision_model.1} parent=1 // pred_region
      %70 = dma.done [#allocation3], 8192
    $region73: #{siglip_vision_model.1} parent=1 // pred_fallthru
      _
    %v72 = vld [vmem:[%s0] sm:$0xff]
    %v73 = vld [vmem:[%s0 + $0x8] sm:$0xff]
    %v74 = vld [vmem:[%s0 + $0x10] sm:$0xff]
    %v75 = vld [vmem:[%s0 + $0x18] sm:$0xff]
    %v76 = vld [vmem:[%s0 + $0x20] sm:$0xff]
    %v77 = vld [vmem:[%s0 + $0x28] sm:$0xff]
    %v78 = vld [vmem:[%s0 + $0x30] sm:$0xff]
    %v79 = vld [vmem:[%s0 + $0x38] sm:$0xff]
    %v80 = vld [vmem:[%s1] sm:$0xff]
    %v81 = vld [vmem:[%s1 + $0x8] sm:$0xff]
    %v82 = vld [vmem:[%s1 + $0x10] sm:$0xff]
    %v83 = vld [vmem:[%s1 + $0x18] sm:$0xff]
    %v84 = vld [vmem:[%s1 + $0x20] sm:$0xff]
    %v85 = vld [vmem:[%s1 + $0x28] sm:$0xff]
    %v86 = vld [vmem:[%s1 + $0x30] sm:$0xff]
    %v87 = vld [vmem:[%s1 + $0x38] sm:$0xff]
    %v88 = vld [vmem:[%s1 + $0x40] sm:$0xff]
    %v89 = vld [vmem:[%s1 + $0x48] sm:$0xff]
    %v90 = vld [vmem:[%s1 + $0x50] sm:$0xff]
    %v91 = vld [vmem:[%s1 + $0x58] sm:$0xff]
    %v92 = vld [vmem:[%s1 + $0x60] sm:$0xff]
    %v93 = vld [vmem:[%s1 + $0x68] sm:$0xff]
    %v94 = vld [vmem:[%s1 + $0x70] sm:$0xff]
    %v95 = vld [vmem:[%s1 + $0x78] sm:$0xff]
    %v96 = vld [vmem:[%s1 + $0x80] sm:$0xff]
    %v97 = vld [vmem:[%s1 + $0x88] sm:$0xff]
    %v98 = vld [vmem:[%s1 + $0x90] sm:$0xff]
    %v99 = vld [vmem:[%s1 + $0x98] sm:$0xff]
    %v100 = vld [vmem:[%s1 + $0xa0] sm:$0xff]
    %v101 = vld [vmem:[%s1 + $0xa8] sm:$0xff]
    %v102 = vld [vmem:[%s1 + $0xb0] sm:$0xff]
    %v103 = vld [vmem:[%s1 + $0xb8] sm:$0xff]
    %v104 = vld [vmem:[%s1 + $0xc0] sm:$0xff]
    %v105 = vld [vmem:[%s1 + $0xc8] sm:$0xff]
    %v106 = vld [vmem:[%s1 + $0xd0] sm:$0xff]
    %v107 = vld [vmem:[%s1 + $0xd8] sm:$0xff]
    %v108 = vld [vmem:[%s1 + $0xe0] sm:$0xff]
    %v109 = vld [vmem:[%s1 + $0xe8] sm:$0xff]
    %v110 = vld [vmem:[%s1 + $0xf0] sm:$0xff]
    %v111 = vld [vmem:[%s1 + $0xf8] sm:$0xff]
    %v112 = vpack.c.bf16 %v74, %v72
    %v113 = vpack.c.bf16 %v75, %v73
    %v114 = vpack.c.bf16 %v78, %v76
    %v115 = vpack.c.bf16 %v79, %v77
    %v116 = vld [vmem:[%s2] sm:$0xff]
    %v117 = vld [vmem:[%s2 + $0x8] sm:$0xff]
    %v118 = vld [vmem:[%s2 + $0x10] sm:$0xff]
    %v119 = vld [vmem:[%s2 + $0x18] sm:$0xff]
    %v120 = vld [vmem:[%s2 + $0x20] sm:$0xff]
    %v121 = vld [vmem:[%s2 + $0x28] sm:$0xff]
    %v122 = vld [vmem:[%s2 + $0x30] sm:$0xff]
    %v123 = vld [vmem:[%s2 + $0x38] sm:$0xff]
    %v156 = vunpack.c.l.b16 %v80
    %v157 = vunpack.c.h.b16 %v80
    %v158 = vunpack.c.l.b16 %v81
    %v159 = vunpack.c.h.b16 %v81
    %v160 = vunpack.c.l.b16 %v82
    %v161 = vunpack.c.h.b16 %v82
    %v162 = vunpack.c.l.b16 %v83
    %v163 = vunpack.c.h.b16 %v83
    %v164 = vunpack.c.l.b16 %v84
    %v165 = vunpack.c.h.b16 %v84
    %v166 = vunpack.c.l.b16 %v85
    %v167 = vunpack.c.h.b16 %v85
    %v168 = vunpack.c.l.b16 %v86
    %v169 = vunpack.c.h.b16 %v86
    %v170 = vunpack.c.l.b16 %v87
    %v171 = vunpack.c.h.b16 %v87
    %v172 = vunpack.c.l.b16 %v88
    %v173 = vunpack.c.h.b16 %v88
    %v174 = vunpack.c.l.b16 %v89
    %v175 = vunpack.c.h.b16 %v89
    %v176 = vunpack.c.l.b16 %v90
    %v177 = vunpack.c.h.b16 %v90
    %v178 = vunpack.c.l.b16 %v91
    %v179 = vunpack.c.h.b16 %v91
    %v180 = vunpack.c.l.b16 %v92
    %v181 = vunpack.c.h.b16 %v92
    %v182 = vunpack.c.l.b16 %v93
    %v183 = vunpack.c.h.b16 %v93
    %v184 = vunpack.c.l.b16 %v94
    %v185 = vunpack.c.h.b16 %v94
    %v186 = vunpack.c.l.b16 %v95
    %v187 = vunpack.c.h.b16 %v95
    %v188 = vunpack.c.l.b16 %v96
    %v189 = vunpack.c.h.b16 %v96
    %v190 = vunpack.c.l.b16 %v97
    %v191 = vunpack.c.h.b16 %v97
    %v192 = vunpack.c.l.b16 %v98
    %v193 = vunpack.c.h.b16 %v98
    %v194 = vunpack.c.l.b16 %v99
    %v195 = vunpack.c.h.b16 %v99
    %v196 = vunpack.c.l.b16 %v100
    %v197 = vunpack.c.h.b16 %v100
    %v198 = vunpack.c.l.b16 %v101
    %v199 = vunpack.c.h.b16 %v101
    %v200 = vunpack.c.l.b16 %v102
    %v201 = vunpack.c.h.b16 %v102
    %v202 = vunpack.c.l.b16 %v103
    %v203 = vunpack.c.h.b16 %v103
    %v204 = vunpack.c.l.b16 %v104
    %v205 = vunpack.c.h.b16 %v104
    %v206 = vunpack.c.l.b16 %v105
    %v207 = vunpack.c.h.b16 %v105
    %v208 = vunpack.c.l.b16 %v106
    %v209 = vunpack.c.h.b16 %v106
    %v210 = vunpack.c.l.b16 %v107
    %v211 = vunpack.c.h.b16 %v107
    %v212 = vunpack.c.l.b16 %v108
    %v213 = vunpack.c.h.b16 %v108
    %v214 = vunpack.c.l.b16 %v109
    %v215 = vunpack.c.h.b16 %v109
    %v216 = vunpack.c.l.b16 %v110
    %v217 = vunpack.c.h.b16 %v110
    %v218 = vunpack.c.l.b16 %v111
    %v219 = vunpack.c.h.b16 %v111
    %v220 = vpack.c.b16 %v158, %v156
    %v221 = vpack.c.b16 %v159, %v157
    %v222 = vpack.c.b16 %v162, %v160
    %v223 = vpack.c.b16 %v163, %v161
    %v224 = vpack.c.b16 %v166, %v164
    %v225 = vpack.c.b16 %v167, %v165
    %v226 = vpack.c.b16 %v170, %v168
    %v227 = vpack.c.b16 %v171, %v169
    %v228 = vpack.c.b16 %v174, %v172
    %v229 = vpack.c.b16 %v175, %v173
    %v230 = vpack.c.b16 %v178, %v176
    %v231 = vpack.c.b16 %v179, %v177
    %v232 = vpack.c.b16 %v182, %v180
    %v233 = vpack.c.b16 %v183, %v181
    %v234 = vpack.c.b16 %v186, %v184
    %v235 = vpack.c.b16 %v187, %v185
    %v236 = vpack.c.b16 %v190, %v188
    %v237 = vpack.c.b16 %v191, %v189
    %v238 = vpack.c.b16 %v194, %v192
    %v239 = vpack.c.b16 %v195, %v193
    %v240 = vpack.c.b16 %v198, %v196
    %v241 = vpack.c.b16 %v199, %v197
    %v242 = vpack.c.b16 %v202, %v200
    %v243 = vpack.c.b16 %v203, %v201
    %v244 = vpack.c.b16 %v206, %v204
    %v245 = vpack.c.b16 %v207, %v205
    %v246 = vpack.c.b16 %v210, %v208
    %v247 = vpack.c.b16 %v211, %v209
    %v248 = vpack.c.b16 %v214, %v212
    %v249 = vpack.c.b16 %v215, %v213
    %v250 = vpack.c.b16 %v218, %v216
    %v251 = vpack.c.b16 %v219, %v217
    %284 = vmatprep.subr.bf16.mxu0 %v235
    %285 = vmatpush1.bf16.msra.mxu0 %v234
    %286 = vmatprep.subr.bf16.mxu0 %v233
    %287 = vmatpush1.bf16.msra.mxu0 %v232
    %288 = vmatprep.subr.bf16.mxu0 %v231
    %289 = vmatpush1.bf16.msra.mxu0 %v230
    %290 = vmatprep.subr.bf16.mxu0 %v229
    %291 = vmatpush1.bf16.msra.mxu0 %v228
    %292 = vmatprep.subr.bf16.mxu0 %v227
    %293 = vmatpush1.bf16.msra.mxu0 %v226
    %294 = vmatprep.subr.bf16.mxu0 %v225
    %295 = vmatpush1.bf16.msra.mxu0 %v224
    %296 = vmatprep.subr.bf16.mxu0 %v223
    %297 = vmatpush1.bf16.msra.mxu0 %v222
    %298 = vmatprep.subr.bf16.mxu0 %v221
    %299 = vmatpush1.bf16.msra.mxu0 %v220
    %300 = vmatprep.subr.bf16.mxu0 %v251
    %301 = vmatpush2.bf16.msra.mxu0 %v250
    %302 = vmatprep.subr.bf16.mxu0 %v249
    %303 = vmatpush2.bf16.msra.mxu0 %v248
    %304 = vmatprep.subr.bf16.mxu0 %v247
    %305 = vmatpush2.bf16.msra.mxu0 %v246
    %306 = vmatprep.subr.bf16.mxu0 %v245
    %307 = vmatpush2.bf16.msra.mxu0 %v244
    %308 = vmatprep.subr.bf16.mxu0 %v243
    %309 = vmatpush2.bf16.msra.mxu0 %v242
    %310 = vmatprep.subr.bf16.mxu0 %v241
    %311 = vmatpush2.bf16.msra.mxu0 %v240
    %312 = vmatprep.subr.bf16.mxu0 %v239
    %313 = vmatpush2.bf16.msra.mxu0 %v238
    %314 = vmatprep.subr.bf16.mxu0 %v237
    %315 = vmatpush2.bf16.msra.mxu0 %v236
    %316 = vmatprep.mubr.bf16.mxu0 %v113
    %317 = vmatmul.mubr.bf16.gmra.mxu0 %v112
    %v318 = vpop.f32.mrf.mxu0
    %v319 = vadd.f32 %v116, %v318
    %v320 = vpop.f32.mrf.mxu0
    %v321 = vadd.f32 %v117, %v320
    %v322 = vpop.f32.mrf.mxu0
    %v323 = vadd.f32 %v118, %v322
    %v324 = vpop.f32.mrf.mxu0
    %v325 = vadd.f32 %v119, %v324
    %326 = vmatprep.mubr.bf16.mxu0 %v115
    %327 = vmatmul.mubr.bf16.gmra.mxu0 %v114
    %v328 = vpop.f32.mrf.mxu0
    %v329 = vadd.f32 %v120, %v328
    %v330 = vpop.f32.mrf.mxu0
    %v331 = vadd.f32 %v121, %v330
    %v332 = vpop.f32.mrf.mxu0
    %v333 = vadd.f32 %v122, %v332
    %v334 = vpop.f32.mrf.mxu0
    %v335 = vadd.f32 %v123, %v334
    %336 = vdwg.mxu0
    %v337 = vld [vmem:[%s3] sm:$0x3]
    %v338 = vld [vmem:[%s4] sm:$0x3]
    %v339 = vadd.f32 %v319, %v321
    %340 = vadd.xlane.f32.xlu0 %v339
    %v341 = vpop.xlane.xlu0 %340
    %v342 = vadd.f32 %v323, %v325
    %343 = vadd.xlane.f32.xlu0 %v342
    %v344 = vpop.xlane.xlu0 %343
    %v345 = vadd.f32 %v329, %v331
    %346 = vadd.xlane.f32.xlu0 %v345
    %v347 = vpop.xlane.xlu0 %346
    %v348 = vadd.f32 %v333, %v335
    %349 = vadd.xlane.f32.xlu0 %v348
    %v350 = vpop.xlane.xlu0 %349
    %v351 = vrcp.pop 256.0
    %v352 = vmul.f32 %v341, %v351
    %v353 = vmul.f32 %v344, %v351
    %v354 = vmul.f32 %v347, %v351
    %v355 = vmul.f32 %v350, %v351
    %v356 = vsub.f32 %v319, %v352
    %v357 = vsub.f32 %v321, %v352
    %v358 = vsub.f32 %v323, %v353
    %v359 = vsub.f32 %v325, %v353
    %v360 = vsub.f32 %v329, %v354
    %v361 = vsub.f32 %v331, %v354
    %v362 = vsub.f32 %v333, %v355
    %v363 = vsub.f32 %v335, %v355
    %v364 = vmul.f32 %v356, %v356
    %v365 = vmul.f32 %v357, %v357
    %v366 = vmul.f32 %v358, %v358
    %v367 = vmul.f32 %v359, %v359
    %v368 = vmul.f32 %v360, %v360
    %v369 = vmul.f32 %v361, %v361
    %v370 = vmul.f32 %v362, %v362
    %v371 = vmul.f32 %v363, %v363
    %v372 = vadd.f32 %v364, %v365
    %373 = vadd.xlane.f32.xlu0 %v372
    %v374 = vpop.xlane.xlu0 %373
    %v375 = vadd.f32 %v366, %v367
    %376 = vadd.xlane.f32.xlu0 %v375
    %v377 = vpop.xlane.xlu0 %376
    %v378 = vadd.f32 %v368, %v369
    %379 = vadd.xlane.f32.xlu0 %v378
    %v380 = vpop.xlane.xlu0 %379
    %v381 = vadd.f32 %v370, %v371
    %382 = vadd.xlane.f32.xlu0 %v381
    %v383 = vpop.xlane.xlu0 %382
    %v384 = vmul.f32 %v374, %v351
    %v385 = vmul.f32 %v377, %v351
    %v386 = vmul.f32 %v380, %v351
    %v387 = vmul.f32 %v383, %v351
    %v388 = vadd.f32 %v384, 1e-06
    %v389 = vadd.f32 %v385, 1e-06
    %v390 = vadd.f32 %v386, 1e-06
    %v391 = vadd.f32 %v387, 1e-06
    %v392 = vrsqrt.pop %v388
    %v393 = vrsqrt.pop %v389
    %v394 = vrsqrt.pop %v390
    %v395 = vrsqrt.pop %v391
    %v396 = vmul.f32 %v356, %v392
    %v397 = vmul.f32 %v357, %v392
    %v398 = vmul.f32 %v358, %v393
    %v399 = vmul.f32 %v359, %v393
    %v400 = vmul.f32 %v360, %v394
    %v401 = vmul.f32 %v361, %v394
    %v402 = vmul.f32 %v362, %v395
    %v403 = vmul.f32 %v363, %v395
    %v405 = vlaneseq
    %v406 = vshrl.u32 %v405, 7
    %v407 = vsub.s32 0, %v406
    %v408 = vrot.slane %v337, %v407
    %v409 = vlaneseq
    %v410 = vshrl.u32 %v409, 7
    %v411 = vsub.s32 1, %v410
    %v412 = vrot.slane %v337, %v411
    %v415 = vmul.f32 %v396, %v408
    %v416 = vmul.f32 %v397, %v412
    %v417 = vmul.f32 %v398, %v408
    %v418 = vmul.f32 %v399, %v412
    %v419 = vmul.f32 %v400, %v408
    %v420 = vmul.f32 %v401, %v412
    %v421 = vmul.f32 %v402, %v408
    %v422 = vmul.f32 %v403, %v412
    %v424 = vlaneseq
    %v425 = vshrl.u32 %v424, 7
    %v426 = vsub.s32 0, %v425
    %v427 = vrot.slane %v338, %v426
    %v428 = vlaneseq
    %v429 = vshrl.u32 %v428, 7
    %v430 = vsub.s32 1, %v429
    %v431 = vrot.slane %v338, %v430
    %v434 = vadd.f32 %v415, %v427
    %v435 = vadd.f32 %v416, %v431
    %v436 = vadd.f32 %v417, %v427
    %v437 = vadd.f32 %v418, %v431
    %v438 = vadd.f32 %v419, %v427
    %v439 = vadd.f32 %v420, %v431
    %v440 = vadd.f32 %v421, %v427
    %v441 = vadd.f32 %v422, %v431
    %v442 = vld [vmem:[%s5] sm:$0xff]
    %v443 = vld [vmem:[%s5 + $0x8] sm:$0xff]
    %v444 = vld [vmem:[%s5 + $0x10] sm:$0xff]
    %v445 = vld [vmem:[%s5 + $0x18] sm:$0xff]
    %v446 = vld [vmem:[%s5 + $0x20] sm:$0xff]
    %v447 = vld [vmem:[%s5 + $0x28] sm:$0xff]
    %v448 = vld [vmem:[%s5 + $0x30] sm:$0xff]
    %v449 = vld [vmem:[%s5 + $0x38] sm:$0xff]
    %v450 = vld [vmem:[%s5 + $0x40] sm:$0xff]
    %v451 = vld [vmem:[%s5 + $0x48] sm:$0xff]
    %v452 = vld [vmem:[%s5 + $0x50] sm:$0xff]
    %v453 = vld [vmem:[%s5 + $0x58] sm:$0xff]
    %v454 = vld [vmem:[%s5 + $0x60] sm:$0xff]
    %v455 = vld [vmem:[%s5 + $0x68] sm:$0xff]
    %v456 = vld [vmem:[%s5 + $0x70] sm:$0xff]
    %v457 = vld [vmem:[%s5 + $0x78] sm:$0xff]
    %v458 = vld [vmem:[%s5 + $0x80] sm:$0xff]
    %v459 = vld [vmem:[%s5 + $0x88] sm:$0xff]
    %v460 = vld [vmem:[%s5 + $0x90] sm:$0xff]
    %v461 = vld [vmem:[%s5 + $0x98] sm:$0xff]
    %v462 = vld [vmem:[%s5 + $0xa0] sm:$0xff]
    %v463 = vld [vmem:[%s5 + $0xa8] sm:$0xff]
    %v464 = vld [vmem:[%s5 + $0xb0] sm:$0xff]
    %v465 = vld [vmem:[%s5 + $0xb8] sm:$0xff]
    %v466 = vld [vmem:[%s5 + $0xc0] sm:$0xff]
    %v467 = vld [vmem:[%s5 + $0xc8] sm:$0xff]
    %v468 = vld [vmem:[%s5 + $0xd0] sm:$0xff]
    %v469 = vld [vmem:[%s5 + $0xd8] sm:$0xff]
    %v470 = vld [vmem:[%s5 + $0xe0] sm:$0xff]
    %v471 = vld [vmem:[%s5 + $0xe8] sm:$0xff]
    %v472 = vld [vmem:[%s5 + $0xf0] sm:$0xff]
    %v473 = vld [vmem:[%s5 + $0xf8] sm:$0xff]
    %v474 = vld [vmem:[%s5 + $0x100] sm:$0xff]
    %v475 = vld [vmem:[%s5 + $0x108] sm:$0xff]
    %v476 = vld [vmem:[%s5 + $0x110] sm:$0xff]
    %v477 = vld [vmem:[%s5 + $0x118] sm:$0xff]
    %v478 = vld [vmem:[%s5 + $0x120] sm:$0xff]
    %v479 = vld [vmem:[%s5 + $0x128] sm:$0xff]
    %v480 = vld [vmem:[%s5 + $0x130] sm:$0xff]
    %v481 = vld [vmem:[%s5 + $0x138] sm:$0xff]
    %v482 = vld [vmem:[%s5 + $0x140] sm:$0xff]
    %v483 = vld [vmem:[%s5 + $0x148] sm:$0xff]
    %v484 = vld [vmem:[%s5 + $0x150] sm:$0xff]
    %v485 = vld [vmem:[%s5 + $0x158] sm:$0xff]
    %v486 = vld [vmem:[%s5 + $0x160] sm:$0xff]
    %v487 = vld [vmem:[%s5 + $0x168] sm:$0xff]
    %v488 = vld [vmem:[%s5 + $0x170] sm:$0xff]
    %v489 = vld [vmem:[%s5 + $0x178] sm:$0xff]
    %v490 = vld [vmem:[%s5 + $0x180] sm:$0xff]
    %v491 = vld [vmem:[%s5 + $0x188] sm:$0xff]
    %v492 = vld [vmem:[%s5 + $0x190] sm:$0xff]
    %v493 = vld [vmem:[%s5 + $0x198] sm:$0xff]
    %v494 = vld [vmem:[%s5 + $0x1a0] sm:$0xff]
    %v495 = vld [vmem:[%s5 + $0x1a8] sm:$0xff]
    %v496 = vld [vmem:[%s5 + $0x1b0] sm:$0xff]
    %v497 = vld [vmem:[%s5 + $0x1b8] sm:$0xff]
    %v498 = vld [vmem:[%s5 + $0x1c0] sm:$0xff]
    %v499 = vld [vmem:[%s5 + $0x1c8] sm:$0xff]
    %v500 = vld [vmem:[%s5 + $0x1d0] sm:$0xff]
    %v501 = vld [vmem:[%s5 + $0x1d8] sm:$0xff]
    %v502 = vld [vmem:[%s5 + $0x1e0] sm:$0xff]
    %v503 = vld [vmem:[%s5 + $0x1e8] sm:$0xff]
    %v504 = vld [vmem:[%s5 + $0x1f0] sm:$0xff]
    %v505 = vld [vmem:[%s5 + $0x1f8] sm:$0xff]
    %v506 = vld [vmem:[%s5 + $0x200] sm:$0xff]
    %v507 = vld [vmem:[%s5 + $0x208] sm:$0xff]
    %v508 = vld [vmem:[%s5 + $0x210] sm:$0xff]
    %v509 = vld [vmem:[%s5 + $0x218] sm:$0xff]
    %v510 = vld [vmem:[%s5 + $0x220] sm:$0xff]
    %v511 = vld [vmem:[%s5 + $0x228] sm:$0xff]
    %v512 = vld [vmem:[%s5 + $0x230] sm:$0xff]
    %v513 = vld [vmem:[%s5 + $0x238] sm:$0xff]
    %v514 = vld [vmem:[%s5 + $0x240] sm:$0xff]
    %v515 = vld [vmem:[%s5 + $0x248] sm:$0xff]
    %v516 = vld [vmem:[%s5 + $0x250] sm:$0xff]
    %v517 = vld [vmem:[%s5 + $0x258] sm:$0xff]
    %v518 = vld [vmem:[%s5 + $0x260] sm:$0xff]
    %v519 = vld [vmem:[%s5 + $0x268] sm:$0xff]
    %v520 = vld [vmem:[%s5 + $0x270] sm:$0xff]
    %v521 = vld [vmem:[%s5 + $0x278] sm:$0xff]
    %v522 = vld [vmem:[%s5 + $0x280] sm:$0xff]
    %v523 = vld [vmem:[%s5 + $0x288] sm:$0xff]
    %v524 = vld [vmem:[%s5 + $0x290] sm:$0xff]
    %v525 = vld [vmem:[%s5 + $0x298] sm:$0xff]
    %v526 = vld [vmem:[%s5 + $0x2a0] sm:$0xff]
    %v527 = vld [vmem:[%s5 + $0x2a8] sm:$0xff]
    %v528 = vld [vmem:[%s5 + $0x2b0] sm:$0xff]
    %v529 = vld [vmem:[%s5 + $0x2b8] sm:$0xff]
    %v530 = vld [vmem:[%s5 + $0x2c0] sm:$0xff]
    %v531 = vld [vmem:[%s5 + $0x2c8] sm:$0xff]
    %v532 = vld [vmem:[%s5 + $0x2d0] sm:$0xff]
    %v533 = vld [vmem:[%s5 + $0x2d8] sm:$0xff]
    %v534 = vld [vmem:[%s5 + $0x2e0] sm:$0xff]
    %v535 = vld [vmem:[%s5 + $0x2e8] sm:$0xff]
    %v536 = vld [vmem:[%s5 + $0x2f0] sm:$0xff]
    %v537 = vld [vmem:[%s5 + $0x2f8] sm:$0xff]
    %v538 = vpack.c.bf16 %v436, %v434
    %v539 = vpack.c.bf16 %v437, %v435
    %v540 = vpack.c.bf16 %v440, %v438
    %v541 = vpack.c.bf16 %v441, %v439
    %v542 = vld [vmem:[%s6] sm:$0x3f]
    %v544 = vlaneseq
    %v545 = vshrl.u32 %v544, 7
    %v546 = vsub.s32 0, %v545
    %v547 = vrot.slane %v542, %v546
    %v548 = vlaneseq
    %v549 = vshrl.u32 %v548, 7
    %v550 = vsub.s32 1, %v549
    %v551 = vrot.slane %v542, %v550
    %v552 = vlaneseq
    %v553 = vshrl.u32 %v552, 7
    %v554 = vsub.s32 2, %v553
    %v555 = vrot.slane %v542, %v554
    %v556 = vlaneseq
    %v557 = vshrl.u32 %v556, 7
    %v558 = vsub.s32 3, %v557
    %v559 = vrot.slane %v542, %v558
    %v560 = vlaneseq
    %v561 = vshrl.u32 %v560, 7
    %v562 = vsub.s32 4, %v561
    %v563 = vrot.slane %v542, %v562
    %v564 = vlaneseq
    %v565 = vshrl.u32 %v564, 7
    %v566 = vsub.s32 5, %v565
    %v567 = vrot.slane %v542, %v566
    %v670 = vunpack.c.l.b16 %v442
    %v671 = vunpack.c.h.b16 %v442
    %v672 = vunpack.c.l.b16 %v443
    %v673 = vunpack.c.h.b16 %v443
    %v674 = vunpack.c.l.b16 %v444
    %v675 = vunpack.c.h.b16 %v444
    %v676 = vunpack.c.l.b16 %v445
    %v677 = vunpack.c.h.b16 %v445
    %v678 = vunpack.c.l.b16 %v446
    %v679 = vunpack.c.h.b16 %v446
    %v680 = vunpack.c.l.b16 %v447
    %v681 = vunpack.c.h.b16 %v447
    %v682 = vunpack.c.l.b16 %v448
    %v683 = vunpack.c.h.b16 %v448
    %v684 = vunpack.c.l.b16 %v449
    %v685 = vunpack.c.h.b16 %v449
    %v686 = vunpack.c.l.b16 %v450
    %v687 = vunpack.c.h.b16 %v450
    %v688 = vunpack.c.l.b16 %v451
    %v689 = vunpack.c.h.b16 %v451
    %v690 = vunpack.c.l.b16 %v452
    %v691 = vunpack.c.h.b16 %v452
    %v692 = vunpack.c.l.b16 %v453
    %v693 = vunpack.c.h.b16 %v453
    %v694 = vunpack.c.l.b16 %v454
    %v695 = vunpack.c.h.b16 %v454
    %v696 = vunpack.c.l.b16 %v455
    %v697 = vunpack.c.h.b16 %v455
    %v698 = vunpack.c.l.b16 %v456
    %v699 = vunpack.c.h.b16 %v456
    %v700 = vunpack.c.l.b16 %v457
    %v701 = vunpack.c.h.b16 %v457
    %v702 = vunpack.c.l.b16 %v458
    %v703 = vunpack.c.h.b16 %v458
    %v704 = vunpack.c.l.b16 %v459
    %v705 = vunpack.c.h.b16 %v459
    %v706 = vunpack.c.l.b16 %v460
    %v707 = vunpack.c.h.b16 %v460
    %v708 = vunpack.c.l.b16 %v461
    %v709 = vunpack.c.h.b16 %v461
    %v710 = vunpack.c.l.b16 %v462
    %v711 = vunpack.c.h.b16 %v462
    %v712 = vunpack.c.l.b16 %v463
    %v713 = vunpack.c.h.b16 %v463
    %v714 = vunpack.c.l.b16 %v464
    %v715 = vunpack.c.h.b16 %v464
    %v716 = vunpack.c.l.b16 %v465
    %v717 = vunpack.c.h.b16 %v465
    %v718 = vunpack.c.l.b16 %v466
    %v719 = vunpack.c.h.b16 %v466
    %v720 = vunpack.c.l.b16 %v467
    %v721 = vunpack.c.h.b16 %v467
    %v722 = vunpack.c.l.b16 %v468
    %v723 = vunpack.c.h.b16 %v468
    %v724 = vunpack.c.l.b16 %v469
    %v725 = vunpack.c.h.b16 %v469
    %v726 = vunpack.c.l.b16 %v470
    %v727 = vunpack.c.h.b16 %v470
    %v728 = vunpack.c.l.b16 %v471
    %v729 = vunpack.c.h.b16 %v471
    %v730 = vunpack.c.l.b16 %v472
    %v731 = vunpack.c.h.b16 %v472
    %v732 = vunpack.c.l.b16 %v473
    %v733 = vunpack.c.h.b16 %v473
    %v734 = vunpack.c.l.b16 %v474
    %v735 = vunpack.c.h.b16 %v474
    %v736 = vunpack.c.l.b16 %v475
    %v737 = vunpack.c.h.b16 %v475
    %v738 = vunpack.c.l.b16 %v476
    %v739 = vunpack.c.h.b16 %v476
    %v740 = vunpack.c.l.b16 %v477
    %v741 = vunpack.c.h.b16 %v477
    %v742 = vunpack.c.l.b16 %v478
    %v743 = vunpack.c.h.b16 %v478
    %v744 = vunpack.c.l.b16 %v479
    %v745 = vunpack.c.h.b16 %v479
    %v746 = vunpack.c.l.b16 %v480
    %v747 = vunpack.c.h.b16 %v480
    %v748 = vunpack.c.l.b16 %v481
    %v749 = vunpack.c.h.b16 %v481
    %v750 = vunpack.c.l.b16 %v482
    %v751 = vunpack.c.h.b16 %v482
    %v752 = vunpack.c.l.b16 %v483
    %v753 = vunpack.c.h.b16 %v483
    %v754 = vunpack.c.l.b16 %v484
    %v755 = vunpack.c.h.b16 %v484
    %v756 = vunpack.c.l.b16 %v485
    %v757 = vunpack.c.h.b16 %v485
    %v758 = vunpack.c.l.b16 %v486
    %v759 = vunpack.c.h.b16 %v486
    %v760 = vunpack.c.l.b16 %v487
    %v761 = vunpack.c.h.b16 %v487
    %v762 = vunpack.c.l.b16 %v488
    %v763 = vunpack.c.h.b16 %v488
    %v764 = vunpack.c.l.b16 %v489
    %v765 = vunpack.c.h.b16 %v489
    %v766 = vunpack.c.l.b16 %v490
    %v767 = vunpack.c.h.b16 %v490
    %v768 = vunpack.c.l.b16 %v491
    %v769 = vunpack.c.h.b16 %v491
    %v770 = vunpack.c.l.b16 %v492
    %v771 = vunpack.c.h.b16 %v492
    %v772 = vunpack.c.l.b16 %v493
    %v773 = vunpack.c.h.b16 %v493
    %v774 = vunpack.c.l.b16 %v494
    %v775 = vunpack.c.h.b16 %v494
    %v776 = vunpack.c.l.b16 %v495
    %v777 = vunpack.c.h.b16 %v495
    %v778 = vunpack.c.l.b16 %v496
    %v779 = vunpack.c.h.b16 %v496
    %v780 = vunpack.c.l.b16 %v497
    %v781 = vunpack.c.h.b16 %v497
    %v782 = vunpack.c.l.b16 %v498
    %v783 = vunpack.c.h.b16 %v498
    %v784 = vunpack.c.l.b16 %v499
    %v785 = vunpack.c.h.b16 %v499
    %v786 = vunpack.c.l.b16 %v500
    %v787 = vunpack.c.h.b16 %v500
    %v788 = vunpack.c.l.b16 %v501
    %v789 = vunpack.c.h.b16 %v501
    %v790 = vunpack.c.l.b16 %v502
    %v791 = vunpack.c.h.b16 %v502
    %v792 = vunpack.c.l.b16 %v503
    %v793 = vunpack.c.h.b16 %v503
    %v794 = vunpack.c.l.b16 %v504
    %v795 = vunpack.c.h.b16 %v504
    %v796 = vunpack.c.l.b16 %v505
    %v797 = vunpack.c.h.b16 %v505
    %v798 = vunpack.c.l.b16 %v506
    %v799 = vunpack.c.h.b16 %v506
    %v800 = vunpack.c.l.b16 %v507
    %v801 = vunpack.c.h.b16 %v507
    %v802 = vunpack.c.l.b16 %v508
    %v803 = vunpack.c.h.b16 %v508
    %v804 = vunpack.c.l.b16 %v509
    %v805 = vunpack.c.h.b16 %v509
    %v806 = vunpack.c.l.b16 %v510
    %v807 = vunpack.c.h.b16 %v510
    %v808 = vunpack.c.l.b16 %v511
    %v809 = vunpack.c.h.b16 %v511
    %v810 = vunpack.c.l.b16 %v512
    %v811 = vunpack.c.h.b16 %v512
    %v812 = vunpack.c.l.b16 %v513
    %v813 = vunpack.c.h.b16 %v513
    %v814 = vunpack.c.l.b16 %v514
    %v815 = vunpack.c.h.b16 %v514
    %v816 = vunpack.c.l.b16 %v515
    %v817 = vunpack.c.h.b16 %v515
    %v818 = vunpack.c.l.b16 %v516
    %v819 = vunpack.c.h.b16 %v516
    %v820 = vunpack.c.l.b16 %v517
    %v821 = vunpack.c.h.b16 %v517
    %v822 = vunpack.c.l.b16 %v518
    %v823 = vunpack.c.h.b16 %v518
    %v824 = vunpack.c.l.b16 %v519
    %v825 = vunpack.c.h.b16 %v519
    %v826 = vunpack.c.l.b16 %v520
    %v827 = vunpack.c.h.b16 %v520
    %v828 = vunpack.c.l.b16 %v521
    %v829 = vunpack.c.h.b16 %v521
    %v830 = vunpack.c.l.b16 %v522
    %v831 = vunpack.c.h.b16 %v522
    %v832 = vunpack.c.l.b16 %v523
    %v833 = vunpack.c.h.b16 %v523
    %v834 = vunpack.c.l.b16 %v524
    %v835 = vunpack.c.h.b16 %v524
    %v836 = vunpack.c.l.b16 %v525
    %v837 = vunpack.c.h.b16 %v525
    %v838 = vunpack.c.l.b16 %v526
    %v839 = vunpack.c.h.b16 %v526
    %v840 = vunpack.c.l.b16 %v527
    %v841 = vunpack.c.h.b16 %v527
    %v842 = vunpack.c.l.b16 %v528
    %v843 = vunpack.c.h.b16 %v528
    %v844 = vunpack.c.l.b16 %v529
    %v845 = vunpack.c.h.b16 %v529
    %v846 = vunpack.c.l.b16 %v530
    %v847 = vunpack.c.h.b16 %v530
    %v848 = vunpack.c.l.b16 %v531
    %v849 = vunpack.c.h.b16 %v531
    %v850 = vunpack.c.l.b16 %v532
    %v851 = vunpack.c.h.b16 %v532
    %v852 = vunpack.c.l.b16 %v533
    %v853 = vunpack.c.h.b16 %v533
    %v854 = vunpack.c.l.b16 %v534
    %v855 = vunpack.c.h.b16 %v534
    %v856 = vunpack.c.l.b16 %v535
    %v857 = vunpack.c.h.b16 %v535
    %v858 = vunpack.c.l.b16 %v536
    %v859 = vunpack.c.h.b16 %v536
    %v860 = vunpack.c.l.b16 %v537
    %v861 = vunpack.c.h.b16 %v537
    %v862 = vpack.c.b16 %v676, %v670
    %v863 = vpack.c.b16 %v677, %v671
    %v864 = vpack.c.b16 %v678, %v672
    %v865 = vpack.c.b16 %v679, %v673
    %v866 = vpack.c.b16 %v680, %v674
    %v867 = vpack.c.b16 %v681, %v675
    %v868 = vpack.c.b16 %v688, %v682
    %v869 = vpack.c.b16 %v689, %v683
    %v870 = vpack.c.b16 %v690, %v684
    %v871 = vpack.c.b16 %v691, %v685
    %v872 = vpack.c.b16 %v692, %v686
    %v873 = vpack.c.b16 %v693, %v687
    %v874 = vpack.c.b16 %v700, %v694
    %v875 = vpack.c.b16 %v701, %v695
    %v876 = vpack.c.b16 %v702, %v696
    %v877 = vpack.c.b16 %v703, %v697
    %v878 = vpack.c.b16 %v704, %v698
    %v879 = vpack.c.b16 %v705, %v699
    %v880 = vpack.c.b16 %v712, %v706
    %v881 = vpack.c.b16 %v713, %v707
    %v882 = vpack.c.b16 %v714, %v708
    %v883 = vpack.c.b16 %v715, %v709
    %v884 = vpack.c.b16 %v716, %v710
    %v885 = vpack.c.b16 %v717, %v711
    %v886 = vpack.c.b16 %v724, %v718
    %v887 = vpack.c.b16 %v725, %v719
    %v888 = vpack.c.b16 %v726, %v720
    %v889 = vpack.c.b16 %v727, %v721
    %v890 = vpack.c.b16 %v728, %v722
    %v891 = vpack.c.b16 %v729, %v723
    %v892 = vpack.c.b16 %v736, %v730
    %v893 = vpack.c.b16 %v737, %v731
    %v894 = vpack.c.b16 %v738, %v732
    %v895 = vpack.c.b16 %v739, %v733
    %v896 = vpack.c.b16 %v740, %v734
    %v897 = vpack.c.b16 %v741, %v735
    %v898 = vpack.c.b16 %v748, %v742
    %v899 = vpack.c.b16 %v749, %v743
    %v900 = vpack.c.b16 %v750, %v744
    %v901 = vpack.c.b16 %v751, %v745
    %v902 = vpack.c.b16 %v752, %v746
    %v903 = vpack.c.b16 %v753, %v747
    %v904 = vpack.c.b16 %v760, %v754
    %v905 = vpack.c.b16 %v761, %v755
    %v906 = vpack.c.b16 %v762, %v756
    %v907 = vpack.c.b16 %v763, %v757
    %v908 = vpack.c.b16 %v764, %v758
    %v909 = vpack.c.b16 %v765, %v759
    %v910 = vpack.c.b16 %v772, %v766
    %v911 = vpack.c.b16 %v773, %v767
    %v912 = vpack.c.b16 %v774, %v768
    %v913 = vpack.c.b16 %v775, %v769
    %v914 = vpack.c.b16 %v776, %v770
    %v915 = vpack.c.b16 %v777, %v771
    %v916 = vpack.c.b16 %v784, %v778
    %v917 = vpack.c.b16 %v785, %v779
    %v918 = vpack.c.b16 %v786, %v780
    %v919 = vpack.c.b16 %v787, %v781
    %v920 = vpack.c.b16 %v788, %v782
    %v921 = vpack.c.b16 %v789, %v783
    %v922 = vpack.c.b16 %v796, %v790
    %v923 = vpack.c.b16 %v797, %v791
    %v924 = vpack.c.b16 %v798, %v792
    %v925 = vpack.c.b16 %v799, %v793
    %v926 = vpack.c.b16 %v800, %v794
    %v927 = vpack.c.b16 %v801, %v795
    %v928 = vpack.c.b16 %v808, %v802
    %v929 = vpack.c.b16 %v809, %v803
    %v930 = vpack.c.b16 %v810, %v804
    %v931 = vpack.c.b16 %v811, %v805
    %v932 = vpack.c.b16 %v812, %v806
    %v933 = vpack.c.b16 %v813, %v807
    %v934 = vpack.c.b16 %v820, %v814
    %v935 = vpack.c.b16 %v821, %v815
    %v936 = vpack.c.b16 %v822, %v816
    %v937 = vpack.c.b16 %v823, %v817
    %v938 = vpack.c.b16 %v824, %v818
    %v939 = vpack.c.b16 %v825, %v819
    %v940 = vpack.c.b16 %v832, %v826
    %v941 = vpack.c.b16 %v833, %v827
    %v942 = vpack.c.b16 %v834, %v828
    %v943 = vpack.c.b16 %v835, %v829
    %v944 = vpack.c.b16 %v836, %v830
    %v945 = vpack.c.b16 %v837, %v831
    %v946 = vpack.c.b16 %v844, %v838
    %v947 = vpack.c.b16 %v845, %v839
    %v948 = vpack.c.b16 %v846, %v840
    %v949 = vpack.c.b16 %v847, %v841
    %v950 = vpack.c.b16 %v848, %v842
    %v951 = vpack.c.b16 %v849, %v843
    %v952 = vpack.c.b16 %v856, %v850
    %v953 = vpack.c.b16 %v857, %v851
    %v954 = vpack.c.b16 %v858, %v852
    %v955 = vpack.c.b16 %v859, %v853
    %v956 = vpack.c.b16 %v860, %v854
    %v957 = vpack.c.b16 %v861, %v855
    %1054 = vmatprep.subr.bf16.mxu0 %v905
    %1055 = vmatpush1.bf16.msra.mxu0 %v904
    %1056 = vmatprep.subr.bf16.mxu0 %v899
    %1057 = vmatpush1.bf16.msra.mxu0 %v898
    %1058 = vmatprep.subr.bf16.mxu0 %v893
    %1059 = vmatpush1.bf16.msra.mxu0 %v892
    %1060 = vmatprep.subr.bf16.mxu0 %v887
    %1061 = vmatpush1.bf16.msra.mxu0 %v886
    %1062 = vmatprep.subr.bf16.mxu0 %v881
    %1063 = vmatpush1.bf16.msra.mxu0 %v880
    %1064 = vmatprep.subr.bf16.mxu0 %v875
    %1065 = vmatpush1.bf16.msra.mxu0 %v874
    %1066 = vmatprep.subr.bf16.mxu0 %v869
    %1067 = vmatpush1.bf16.msra.mxu0 %v868
    %1068 = vmatprep.subr.bf16.mxu0 %v863
    %1069 = vmatpush1.bf16.msra.mxu0 %v862
    %1070 = vmatprep.subr.bf16.mxu0 %v953
    %1071 = vmatpush2.bf16.msra.mxu0 %v952
    %1072 = vmatprep.subr.bf16.mxu0 %v947
    %1073 = vmatpush2.bf16.msra.mxu0 %v946
    %1074 = vmatprep.subr.bf16.mxu0 %v941
    %1075 = vmatpush2.bf16.msra.mxu0 %v940
    %1076 = vmatprep.subr.bf16.mxu0 %v935
    %1077 = vmatpush2.bf16.msra.mxu0 %v934
    %1078 = vmatprep.subr.bf16.mxu0 %v929
    %1079 = vmatpush2.bf16.msra.mxu0 %v928
    %1080 = vmatprep.subr.bf16.mxu0 %v923
    %1081 = vmatpush2.bf16.msra.mxu0 %v922
    %1082 = vmatprep.subr.bf16.mxu0 %v917
    %1083 = vmatpush2.bf16.msra.mxu0 %v916
    %1084 = vmatprep.subr.bf16.mxu0 %v911
    %1085 = vmatpush2.bf16.msra.mxu0 %v910
    %1086 = vmatprep.mubr.bf16.mxu0 %v539
    %1087 = vmatmul.mubr.bf16.gmra.mxu0 %v538
    %v1088 = vpop.f32.mrf.mxu0
    %v1089 = vadd.f32 %v547, %v1088
    %v1090 = vpop.f32.mrf.mxu0
    %v1091 = vadd.f32 %v551, %v1090
    %v1092 = vpop.f32.mrf.mxu0
    %v1093 = vadd.f32 %v547, %v1092
    %v1094 = vpop.f32.mrf.mxu0
    %v1095 = vadd.f32 %v551, %v1094
    %1096 = vmatprep.mubr.bf16.mxu0 %v541
    %1097 = vmatmul.mubr.bf16.gmra.mxu0 %v540
    %v1098 = vpop.f32.mrf.mxu0
    %v1099 = vadd.f32 %v547, %v1098
    %v1100 = vpop.f32.mrf.mxu0
    %v1101 = vadd.f32 %v551, %v1100
    %v1102 = vpop.f32.mrf.mxu0
    %v1103 = vadd.f32 %v547, %v1102
    %v1104 = vpop.f32.mrf.mxu0
    %v1105 = vadd.f32 %v551, %v1104
    %1106 = vdwg.mxu0
    %1107 = vmatprep.subr.bf16.mxu0 %v907
    %1108 = vmatpush1.bf16.msra.mxu0 %v906
    %1109 = vmatprep.subr.bf16.mxu0 %v901
    %1110 = vmatpush1.bf16.msra.mxu0 %v900
    %1111 = vmatprep.subr.bf16.mxu0 %v895
    %1112 = vmatpush1.bf16.msra.mxu0 %v894
    %1113 = vmatprep.subr.bf16.mxu0 %v889
    %1114 = vmatpush1.bf16.msra.mxu0 %v888
    %1115 = vmatprep.subr.bf16.mxu0 %v883
    %1116 = vmatpush1.bf16.msra.mxu0 %v882
    %1117 = vmatprep.subr.bf16.mxu0 %v877
    %1118 = vmatpush1.bf16.msra.mxu0 %v876
    %1119 = vmatprep.subr.bf16.mxu0 %v871
    %1120 = vmatpush1.bf16.msra.mxu0 %v870
    %1121 = vmatprep.subr.bf16.mxu0 %v865
    %1122 = vmatpush1.bf16.msra.mxu0 %v864
    %1123 = vmatprep.subr.bf16.mxu0 %v955
    %1124 = vmatpush2.bf16.msra.mxu0 %v954
    %1125 = vmatprep.subr.bf16.mxu0 %v949
    %1126 = vmatpush2.bf16.msra.mxu0 %v948
    %1127 = vmatprep.subr.bf16.mxu0 %v943
    %1128 = vmatpush2.bf16.msra.mxu0 %v942
    %1129 = vmatprep.subr.bf16.mxu0 %v937
    %1130 = vmatpush2.bf16.msra.mxu0 %v936
    %1131 = vmatprep.subr.bf16.mxu0 %v931
    %1132 = vmatpush2.bf16.msra.mxu0 %v930
    %1133 = vmatprep.subr.bf16.mxu0 %v925
    %1134 = vmatpush2.bf16.msra.mxu0 %v924
    %1135 = vmatprep.subr.bf16.mxu0 %v919
    %1136 = vmatpush2.bf16.msra.mxu0 %v918
    %1137 = vmatprep.subr.bf16.mxu0 %v913
    %1138 = vmatpush2.bf16.msra.mxu0 %v912
    %1139 = vmatprep.mubr.bf16.mxu0 %v539
    %1140 = vmatmul.mubr.bf16.gmra.mxu0 %v538
    %v1141 = vpop.f32.mrf.mxu0
    %v1142 = vadd.f32 %v555, %v1141
    %v1143 = vpop.f32.mrf.mxu0
    %v1144 = vadd.f32 %v559, %v1143
    %v1145 = vpop.f32.mrf.mxu0
    %v1146 = vadd.f32 %v555, %v1145
    %v1147 = vpop.f32.mrf.mxu0
    %v1148 = vadd.f32 %v559, %v1147
    %1149 = vmatprep.mubr.bf16.mxu0 %v541
    %1150 = vmatmul.mubr.bf16.gmra.mxu0 %v540
    %v1151 = vpop.f32.mrf.mxu0
    %v1152 = vadd.f32 %v555, %v1151
    %v1153 = vpop.f32.mrf.mxu0
    %v1154 = vadd.f32 %v559, %v1153
    %v1155 = vpop.f32.mrf.mxu0
    %v1156 = vadd.f32 %v555, %v1155
    %v1157 = vpop.f32.mrf.mxu0
    %v1158 = vadd.f32 %v559, %v1157
    %1159 = vdwg.mxu0
    %1160 = vmatprep.subr.bf16.mxu0 %v909
    %1161 = vmatpush1.bf16.msra.mxu0 %v908
    %1162 = vmatprep.subr.bf16.mxu0 %v903
    %1163 = vmatpush1.bf16.msra.mxu0 %v902
    %1164 = vmatprep.subr.bf16.mxu0 %v897
    %1165 = vmatpush1.bf16.msra.mxu0 %v896
    %1166 = vmatprep.subr.bf16.mxu0 %v891
    %1167 = vmatpush1.bf16.msra.mxu0 %v890
    %1168 = vmatprep.subr.bf16.mxu0 %v885
    %1169 = vmatpush1.bf16.msra.mxu0 %v884
    %1170 = vmatprep.subr.bf16.mxu0 %v879
    %1171 = vmatpush1.bf16.msra.mxu0 %v878
    %1172 = vmatprep.subr.bf16.mxu0 %v873
    %1173 = vmatpush1.bf16.msra.mxu0 %v872
    %1174 = vmatprep.subr.bf16.mxu0 %v867
    %1175 = vmatpush1.bf16.msra.mxu0 %v866
    %1176 = vmatprep.subr.bf16.mxu0 %v957
    %1177 = vmatpush2.bf16.msra.mxu0 %v956
    %1178 = vmatprep.subr.bf16.mxu0 %v951
    %1179 = vmatpush2.bf16.msra.mxu0 %v950
    %1180 = vmatprep.subr.bf16.mxu0 %v945
    %1181 = vmatpush2.bf16.msra.mxu0 %v944
    %1182 = vmatprep.subr.bf16.mxu0 %v939
    %1183 = vmatpush2.bf16.msra.mxu0 %v938
    %1184 = vmatprep.subr.bf16.mxu0 %v933
    %1185 = vmatpush2.bf16.msra.mxu0 %v932
    %1186 = vmatprep.subr.bf16.mxu0 %v927
    %1187 = vmatpush2.bf16.msra.mxu0 %v926
    %1188 = vmatprep.subr.bf16.mxu0 %v921
    %1189 = vmatpush2.bf16.msra.mxu0 %v920
    %1190 = vmatprep.subr.bf16.mxu0 %v915
    %1191 = vmatpush2.bf16.msra.mxu0 %v914
    %1192 = vmatprep.mubr.bf16.mxu0 %v539
    %1193 = vmatmul.mubr.bf16.gmra.mxu0 %v538
    %v1194 = vpop.f32.mrf.mxu0
    %v1195 = vadd.f32 %v563, %v1194
    %v1196 = vpop.f32.mrf.mxu0
    %v1197 = vadd.f32 %v567, %v1196
    %v1198 = vpop.f32.mrf.mxu0
    %v1199 = vadd.f32 %v563, %v1198
    %v1200 = vpop.f32.mrf.mxu0
    %v1201 = vadd.f32 %v567, %v1200
    %1202 = vmatprep.mubr.bf16.mxu0 %v541
    %1203 = vmatmul.mubr.bf16.gmra.mxu0 %v540
    %v1204 = vpop.f32.mrf.mxu0
    %v1205 = vadd.f32 %v563, %v1204
    %v1206 = vpop.f32.mrf.mxu0
    %v1207 = vadd.f32 %v567, %v1206
    %v1208 = vpop.f32.mrf.mxu0
    %v1209 = vadd.f32 %v563, %v1208
    %v1210 = vpop.f32.mrf.mxu0
    %v1211 = vadd.f32 %v567, %v1210
    %1212 = vdwg.mxu0
    %v1213 = vpack.c.bf16 %v1093, %v1089
    %v1214 = vpack.c.bf16 %v1095, %v1091
    %v1215 = vpack.c.bf16 %v1146, %v1142
    %v1216 = vpack.c.bf16 %v1148, %v1144
    %v1217 = vpack.c.bf16 %v1199, %v1195
    %v1218 = vpack.c.bf16 %v1201, %v1197
    %v1219 = vpack.c.bf16 %v1103, %v1099
    %v1220 = vpack.c.bf16 %v1105, %v1101
    %v1221 = vpack.c.bf16 %v1156, %v1152
    %v1222 = vpack.c.bf16 %v1158, %v1154
    %v1223 = vpack.c.bf16 %v1209, %v1205
    %v1224 = vpack.c.bf16 %v1211, %v1207
    %1225 = vmatprep.subr.bf16.mxu0 0
    %1226 = vmatpush1.bf16.xpose.msra.mxu0 0
    %1227 = vmatprep.subr.bf16.mxu0 0
    %1228 = vmatpush1.bf16.xpose.msra.mxu0 0
    %1229 = vmatprep.subr.bf16.mxu0 0
    %1230 = vmatpush1.bf16.xpose.msra.mxu0 0
    %1231 = vmatprep.subr.bf16.mxu0 0
    %1232 = vmatpush1.bf16.xpose.msra.mxu0 0
    %1233 = vmatprep.subr.bf16.mxu0 0
    %1234 = vmatpush1.bf16.xpose.msra.mxu0 0
    %1235 = vmatprep.subr.bf16.mxu0 0
    %1236 = vmatpush1.bf16.xpose.msra.mxu0 0
    %1237 = vmatprep.subr.bf16.mxu0 0
    %1238 = vmatpush1.bf16.xpose.msra.mxu0 0
    %1239 = vmatprep.subr.bf16.mxu0 0
    %1240 = vmatpush1.bf16.xpose.msra.mxu0 %v1215
    %1241 = vmatprep.subr.bf16.mxu0 0
    %1242 = vmatpush2.bf16.xpose.msra.mxu0 0
    %1243 = vmatprep.subr.bf16.mxu0 0
    %1244 = vmatpush2.bf16.xpose.msra.mxu0 0
    %1245 = vmatprep.subr.bf16.mxu0 0
    %1246 = vmatpush2.bf16.xpose.msra.mxu0 0
    %1247 = vmatprep.subr.bf16.mxu0 0
    %1248 = vmatpush2.bf16.xpose.msra.mxu0 0
    %1249 = vmatprep.subr.bf16.mxu0 0
    %1250 = vmatpush2.bf16.xpose.msra.mxu0 0
    %1251 = vmatprep.subr.bf16.mxu0 0
    %1252 = vmatpush2.bf16.xpose.msra.mxu0 0
    %1253 = vmatprep.subr.bf16.mxu0 0
    %1254 = vmatpush2.bf16.xpose.msra.mxu0 0
    %1255 = vmatprep.subr.bf16.mxu0 0
    %1256 = vmatpush2.bf16.xpose.msra.mxu0 0
    %1257 = vmatprep.mubr.bf16.mxu0 0
    %1258 = vmatmul.mubr.bf16.gmra.mxu0 %v1213
    %v1259 = vpop.f32.mrf.mxu0
    %v1260 = vadd.f32 0.0, %v1259
    %v1261 = vpop.f32.mrf.mxu0
    %v1262 = vpop.f32.mrf.mxu0
    %v1263 = vadd.f32 0.0, %v1262
    %v1264 = vpop.f32.mrf.mxu0
    %1265 = vdwg.mxu0
    %v1266 = vmul.f32 %v1260, 0.088388346
    %v1267 = vmul.f32 %v1263, 0.088388346
    %vm1268 = vcmask 130048
    %v1269 = vsel %vm1268, %v1266, -inf
    %1270 = vmax.xlane.f32.xlu0 %v1269
    %v1271 = vpop.xlane.xlu0 %1270
    %v1272 = vsel %vm1268, %v1267, -inf
    %1273 = vmax.xlane.f32.xlu0 %v1272
    %v1274 = vpop.xlane.xlu0 %1273
    %v1275 = vsub.f32 %v1266, %v1271
    %v1276 = vsub.f32 %v1267, %v1274
    %v1277 = vmul.f32 %v1275, 1.442695
    %v1278 = vpow.pop %v1277
    %v1279 = vmul.f32 %v1276, 1.442695
    %v1280 = vpow.pop %v1279
    %v1281 = vsel %vm1268, %v1278, 0.0
    %1282 = vadd.xlane.f32.xlu0 %v1281
    %v1283 = vpop.xlane.xlu0 %1282
    %v1284 = vsel %vm1268, %v1280, 0.0
    %1285 = vadd.xlane.f32.xlu0 %v1284
    %v1286 = vpop.xlane.xlu0 %1285
    %v1287 = vrcp.pop %v1283
    %v1288 = vmul.f32 %v1278, %v1287
    %v1289 = vrcp.pop %v1286
    %v1290 = vmul.f32 %v1280, %v1289
    %v1291 = vpack.c.bf16 %v1290, %v1288
    %v1293 = vsel %vm1268, %v1291, 0
    %1295 = vmatprep.subr.bf16.mxu0 0
    %1296 = vmatpush1.bf16.msra.mxu0 0
    %1297 = vmatprep.subr.bf16.mxu0 0
    %1298 = vmatpush1.bf16.msra.mxu0 0
    %1299 = vmatprep.subr.bf16.mxu0 0
    %1300 = vmatpush1.bf16.msra.mxu0 0
    %1301 = vmatprep.subr.bf16.mxu0 0
    %1302 = vmatpush1.bf16.msra.mxu0 0
    %1303 = vmatprep.subr.bf16.mxu0 0
    %1304 = vmatpush1.bf16.msra.mxu0 0
    %1305 = vmatprep.subr.bf16.mxu0 0
    %1306 = vmatpush1.bf16.msra.mxu0 0
    %1307 = vmatprep.subr.bf16.mxu0 0
    %1308 = vmatpush1.bf16.msra.mxu0 0
    %1309 = vmatprep.subr.bf16.mxu0 0
    %1310 = vmatpush1.bf16.msra.mxu0 %v1217
    %1311 = vmatprep.subr.bf16.mxu0 0
    %1312 = vmatpush2.bf16.msra.mxu0 0
    %1313 = vmatprep.subr.bf16.mxu0 0
    %1314 = vmatpush2.bf16.msra.mxu0 0
    %1315 = vmatprep.subr.bf16.mxu0 0
    %1316 = vmatpush2.bf16.msra.mxu0 0
    %1317 = vmatprep.subr.bf16.mxu0 0
    %1318 = vmatpush2.bf16.msra.mxu0 0
    %1319 = vmatprep.subr.bf16.mxu0 0
    %1320 = vmatpush2.bf16.msra.mxu0 0
    %1321 = vmatprep.subr.bf16.mxu0 0
    %1322 = vmatpush2.bf16.msra.mxu0 0
    %1323 = vmatprep.subr.bf16.mxu0 0
    %1324 = vmatpush2.bf16.msra.mxu0 0
    %1325 = vmatprep.subr.bf16.mxu0 0
    %1326 = vmatpush2.bf16.msra.mxu0 0
    %1327 = vmatprep.mubr.bf16.mxu0 0
    %1328 = vmatmul.mubr.bf16.gmra.mxu0 %v1293
    %v1329 = vpop.f32.mrf.mxu0
    %v1330 = vadd.f32 0.0, %v1329
    %v1331 = vpop.f32.mrf.mxu0
    %v1332 = vpop.f32.mrf.mxu0
    %v1333 = vadd.f32 0.0, %v1332
    %v1334 = vpop.f32.mrf.mxu0
    %1335 = vdwg.mxu0
    %v1336 = vpack.c.bf16 %v1333, %v1330
    %1337 = vmatprep.subr.bf16.mxu0 0
    %1338 = vmatpush1.bf16.xpose.msra.mxu0 0
    %1339 = vmatprep.subr.bf16.mxu0 0
    %1340 = vmatpush1.bf16.xpose.msra.mxu0 0
    %1341 = vmatprep.subr.bf16.mxu0 0
    %1342 = vmatpush1.bf16.xpose.msra.mxu0 0
    %1343 = vmatprep.subr.bf16.mxu0 0
    %1344 = vmatpush1.bf16.xpose.msra.mxu0 0
    %1345 = vmatprep.subr.bf16.mxu0 0
    %1346 = vmatpush1.bf16.xpose.msra.mxu0 0
    %1347 = vmatprep.subr.bf16.mxu0 0
    %1348 = vmatpush1.bf16.xpose.msra.mxu0 0
    %1349 = vmatprep.subr.bf16.mxu0 0
    %1350 = vmatpush1.bf16.xpose.msra.mxu0 0
    %1351 = vmatprep.subr.bf16.mxu0 0
    %1352 = vmatpush1.bf16.xpose.msra.mxu0 %v1216
    %1353 = vmatprep.subr.bf16.mxu0 0
    %1354 = vmatpush2.bf16.xpose.msra.mxu0 0
    %1355 = vmatprep.subr.bf16.mxu0 0
    %1356 = vmatpush2.bf16.xpose.msra.mxu0 0
    %1357 = vmatprep.subr.bf16.mxu0 0
    %1358 = vmatpush2.bf16.xpose.msra.mxu0 0
    %1359 = vmatprep.subr.bf16.mxu0 0
    %1360 = vmatpush2.bf16.xpose.msra.mxu0 0
    %1361 = vmatprep.subr.bf16.mxu0 0
    %1362 = vmatpush2.bf16.xpose.msra.mxu0 0
    %1363 = vmatprep.subr.bf16.mxu0 0
    %1364 = vmatpush2.bf16.xpose.msra.mxu0 0
    %1365 = vmatprep.subr.bf16.mxu0 0
    %1366 = vmatpush2.bf16.xpose.msra.mxu0 0
    %1367 = vmatprep.subr.bf16.mxu0 0
    %1368 = vmatpush2.bf16.xpose.msra.mxu0 0
    %1369 = vmatprep.mubr.bf16.mxu0 0
    %1370 = vmatmul.mubr.bf16.gmra.mxu0 %v1214
    %v1371 = vpop.f32.mrf.mxu0
    %v1372 = vadd.f32 0.0, %v1371
    %v1373 = vpop.f32.mrf.mxu0
    %v1374 = vpop.f32.mrf.mxu0
    %v1375 = vadd.f32 0.0, %v1374
    %v1376 = vpop.f32.mrf.mxu0
    %1377 = vdwg.mxu0
    %v1378 = vmul.f32 %v1372, 0.088388346
    %v1379 = vmul.f32 %v1375, 0.088388346
    %v1380 = vsel %vm1268, %v1378, -inf
    %1381 = vmax.xlane.f32.xlu0 %v1380
    %v1382 = vpop.xlane.xlu0 %1381
    %v1383 = vsel %vm1268, %v1379, -inf
    %1384 = vmax.xlane.f32.xlu0 %v1383
    %v1385 = vpop.xlane.xlu0 %1384
    %v1386 = vsub.f32 %v1378, %v1382
    %v1387 = vsub.f32 %v1379, %v1385
    %v1388 = vmul.f32 %v1386, 1.442695
    %v1389 = vpow.pop %v1388
    %v1390 = vmul.f32 %v1387, 1.442695
    %v1391 = vpow.pop %v1390
    %v1392 = vsel %vm1268, %v1389, 0.0
    %1393 = vadd.xlane.f32.xlu0 %v1392
    %v1394 = vpop.xlane.xlu0 %1393
    %v1395 = vsel %vm1268, %v1391, 0.0
    %1396 = vadd.xlane.f32.xlu0 %v1395
    %v1397 = vpop.xlane.xlu0 %1396
    %v1398 = vrcp.pop %v1394
    %v1399 = vmul.f32 %v1389, %v1398
    %v1400 = vrcp.pop %v1397
    %v1401 = vmul.f32 %v1391, %v1400
    %v1402 = vpack.c.bf16 %v1401, %v1399
    %v1404 = vsel %vm1268, %v1402, 0
    %1406 = vmatprep.subr.bf16.mxu0 0
    %1407 = vmatpush1.bf16.msra.mxu0 0
    %1408 = vmatprep.subr.bf16.mxu0 0
    %1409 = vmatpush1.bf16.msra.mxu0 0
    %1410 = vmatprep.subr.bf16.mxu0 0
    %1411 = vmatpush1.bf16.msra.mxu0 0
    %1412 = vmatprep.subr.bf16.mxu0 0
    %1413 = vmatpush1.bf16.msra.mxu0 0
    %1414 = vmatprep.subr.bf16.mxu0 0
    %1415 = vmatpush1.bf16.msra.mxu0 0
    %1416 = vmatprep.subr.bf16.mxu0 0
    %1417 = vmatpush1.bf16.msra.mxu0 0
    %1418 = vmatprep.subr.bf16.mxu0 0
    %1419 = vmatpush1.bf16.msra.mxu0 0
    %1420 = vmatprep.subr.bf16.mxu0 0
    %1421 = vmatpush1.bf16.msra.mxu0 %v1218
    %1422 = vmatprep.subr.bf16.mxu0 0
    %1423 = vmatpush2.bf16.msra.mxu0 0
    %1424 = vmatprep.subr.bf16.mxu0 0
    %1425 = vmatpush2.bf16.msra.mxu0 0
    %1426 = vmatprep.subr.bf16.mxu0 0
    %1427 = vmatpush2.bf16.msra.mxu0 0
    %1428 = vmatprep.subr.bf16.mxu0 0
    %1429 = vmatpush2.bf16.msra.mxu0 0
    %1430 = vmatprep.subr.bf16.mxu0 0
    %1431 = vmatpush2.bf16.msra.mxu0 0
    %1432 = vmatprep.subr.bf16.mxu0 0
    %1433 = vmatpush2.bf16.msra.mxu0 0
    %1434 = vmatprep.subr.bf16.mxu0 0
    %1435 = vmatpush2.bf16.msra.mxu0 0
    %1436 = vmatprep.subr.bf16.mxu0 0
    %1437 = vmatpush2.bf16.msra.mxu0 0
    %1438 = vmatprep.mubr.bf16.mxu0 0
    %1439 = vmatmul.mubr.bf16.gmra.mxu0 %v1404
    %v1440 = vpop.f32.mrf.mxu0
    %v1441 = vadd.f32 0.0, %v1440
    %v1442 = vpop.f32.mrf.mxu0
    %v1443 = vpop.f32.mrf.mxu0
    %v1444 = vadd.f32 0.0, %v1443
    %v1445 = vpop.f32.mrf.mxu0
    %1446 = vdwg.mxu0
    %v1447 = vpack.c.bf16 %v1444, %v1441
    %1448 = vmatprep.subr.bf16.mxu0 0
    %1449 = vmatpush1.bf16.xpose.msra.mxu0 0
    %1450 = vmatprep.subr.bf16.mxu0 0
    %1451 = vmatpush1.bf16.xpose.msra.mxu0 0
    %1452 = vmatprep.subr.bf16.mxu0 0
    %1453 = vmatpush1.bf16.xpose.msra.mxu0 0
    %1454 = vmatprep.subr.bf16.mxu0 0
    %1455 = vmatpush1.bf16.xpose.msra.mxu0 0
    %1456 = vmatprep.subr.bf16.mxu0 0
    %1457 = vmatpush1.bf16.xpose.msra.mxu0 0
    %1458 = vmatprep.subr.bf16.mxu0 0
    %1459 = vmatpush1.bf16.xpose.msra.mxu0 0
    %1460 = vmatprep.subr.bf16.mxu0 0
    %1461 = vmatpush1.bf16.xpose.msra.mxu0 0
    %1462 = vmatprep.subr.bf16.mxu0 0
    %1463 = vmatpush1.bf16.xpose.msra.mxu0 %v1221
    %1464 = vmatprep.subr.bf16.mxu0 0
    %1465 = vmatpush2.bf16.xpose.msra.mxu0 0
    %1466 = vmatprep.subr.bf16.mxu0 0
    %1467 = vmatpush2.bf16.xpose.msra.mxu0 0
    %1468 = vmatprep.subr.bf16.mxu0 0
    %1469 = vmatpush2.bf16.xpose.msra.mxu0 0
    %1470 = vmatprep.subr.bf16.mxu0 0
    %1471 = vmatpush2.bf16.xpose.msra.mxu0 0
    %1472 = vmatprep.subr.bf16.mxu0 0
    %1473 = vmatpush2.bf16.xpose.msra.mxu0 0
    %1474 = vmatprep.subr.bf16.mxu0 0
    %1475 = vmatpush2.bf16.xpose.msra.mxu0 0
    %1476 = vmatprep.subr.bf16.mxu0 0
    %1477 = vmatpush2.bf16.xpose.msra.mxu0 0
    %1478 = vmatprep.subr.bf16.mxu0 0
    %1479 = vmatpush2.bf16.xpose.msra.mxu0 0
    %1480 = vmatprep.mubr.bf16.mxu0 0
    %1481 = vmatmul.mubr.bf16.gmra.mxu0 %v1219
    %v1482 = vpop.f32.mrf.mxu0
    %v1483 = vadd.f32 0.0, %v1482
    %v1484 = vpop.f32.mrf.mxu0
    %v1485 = vpop.f32.mrf.mxu0
    %v1486 = vadd.f32 0.0, %v1485
    %v1487 = vpop.f32.mrf.mxu0
    %1488 = vdwg.mxu0
    %v1489 = vmul.f32 %v1483, 0.088388346
    %v1490 = vmul.f32 %v1486, 0.088388346
    %v1491 = vsel %vm1268, %v1489, -inf
    %1492 = vmax.xlane.f32.xlu0 %v1491
    %v1493 = vpop.xlane.xlu0 %1492
    %v1494 = vsel %vm1268, %v1490, -inf
    %1495 = vmax.xlane.f32.xlu0 %v1494
    %v1496 = vpop.xlane.xlu0 %1495
    %v1497 = vsub.f32 %v1489, %v1493
    %v1498 = vsub.f32 %v1490, %v1496
    %v1499 = vmul.f32 %v1497, 1.442695
    %v1500 = vpow.pop %v1499
    %v1501 = vmul.f32 %v1498, 1.442695
    %v1502 = vpow.pop %v1501
    %v1503 = vsel %vm1268, %v1500, 0.0
    %1504 = vadd.xlane.f32.xlu0 %v1503
    %v1505 = vpop.xlane.xlu0 %1504
    %v1506 = vsel %vm1268, %v1502, 0.0
    %1507 = vadd.xlane.f32.xlu0 %v1506
    %v1508 = vpop.xlane.xlu0 %1507
    %v1509 = vrcp.pop %v1505
    %v1510 = vmul.f32 %v1500, %v1509
    %v1511 = vrcp.pop %v1508
    %v1512 = vmul.f32 %v1502, %v1511
    %v1513 = vpack.c.bf16 %v1512, %v1510
    %v1515 = vsel %vm1268, %v1513, 0
    %1517 = vmatprep.subr.bf16.mxu0 0
    %1518 = vmatpush1.bf16.msra.mxu0 0
    %1519 = vmatprep.subr.bf16.mxu0 0
    %1520 = vmatpush1.bf16.msra.mxu0 0
    %1521 = vmatprep.subr.bf16.mxu0 0
    %1522 = vmatpush1.bf16.msra.mxu0 0
    %1523 = vmatprep.subr.bf16.mxu0 0
    %1524 = vmatpush1.bf16.msra.mxu0 0
    %1525 = vmatprep.subr.bf16.mxu0 0
    %1526 = vmatpush1.bf16.msra.mxu0 0
    %1527 = vmatprep.subr.bf16.mxu0 0
    %1528 = vmatpush1.bf16.msra.mxu0 0
    %1529 = vmatprep.subr.bf16.mxu0 0
    %1530 = vmatpush1.bf16.msra.mxu0 0
    %1531 = vmatprep.subr.bf16.mxu0 0
    %1532 = vmatpush1.bf16.msra.mxu0 %v1223
    %1533 = vmatprep.subr.bf16.mxu0 0
    %1534 = vmatpush2.bf16.msra.mxu0 0
    %1535 = vmatprep.subr.bf16.mxu0 0
    %1536 = vmatpush2.bf16.msra.mxu0 0
    %1537 = vmatprep.subr.bf16.mxu0 0
    %1538 = vmatpush2.bf16.msra.mxu0 0
    %1539 = vmatprep.subr.bf16.mxu0 0
    %1540 = vmatpush2.bf16.msra.mxu0 0
    %1541 = vmatprep.subr.bf16.mxu0 0
    %1542 = vmatpush2.bf16.msra.mxu0 0
    %1543 = vmatprep.subr.bf16.mxu0 0
    %1544 = vmatpush2.bf16.msra.mxu0 0
    %1545 = vmatprep.subr.bf16.mxu0 0
    %1546 = vmatpush2.bf16.msra.mxu0 0
    %1547 = vmatprep.subr.bf16.mxu0 0
    %1548 = vmatpush2.bf16.msra.mxu0 0
    %1549 = vmatprep.mubr.bf16.mxu0 0
    %1550 = vmatmul.mubr.bf16.gmra.mxu0 %v1515
    %v1551 = vpop.f32.mrf.mxu0
    %v1552 = vadd.f32 0.0, %v1551
    %v1553 = vpop.f32.mrf.mxu0
    %v1554 = vpop.f32.mrf.mxu0
    %v1555 = vadd.f32 0.0, %v1554
    %v1556 = vpop.f32.mrf.mxu0
    %1557 = vdwg.mxu0
    %v1558 = vpack.c.bf16 %v1555, %v1552
    %1559 = vmatprep.subr.bf16.mxu0 0
    %1560 = vmatpush1.bf16.xpose.msra.mxu0 0
    %1561 = vmatprep.subr.bf16.mxu0 0
    %1562 = vmatpush1.bf16.xpose.msra.mxu0 0
    %1563 = vmatprep.subr.bf16.mxu0 0
    %1564 = vmatpush1.bf16.xpose.msra.mxu0 0
    %1565 = vmatprep.subr.bf16.mxu0 0
    %1566 = vmatpush1.bf16.xpose.msra.mxu0 0
    %1567 = vmatprep.subr.bf16.mxu0 0
    %1568 = vmatpush1.bf16.xpose.msra.mxu0 0
    %1569 = vmatprep.subr.bf16.mxu0 0
    %1570 = vmatpush1.bf16.xpose.msra.mxu0 0
    %1571 = vmatprep.subr.bf16.mxu0 0
    %1572 = vmatpush1.bf16.xpose.msra.mxu0 0
    %1573 = vmatprep.subr.bf16.mxu0 0
    %1574 = vmatpush1.bf16.xpose.msra.mxu0 %v1222
    %1575 = vmatprep.subr.bf16.mxu0 0
    %1576 = vmatpush2.bf16.xpose.msra.mxu0 0
    %1577 = vmatprep.subr.bf16.mxu0 0
    %1578 = vmatpush2.bf16.xpose.msra.mxu0 0
    %1579 = vmatprep.subr.bf16.mxu0 0
    %1580 = vmatpush2.bf16.xpose.msra.mxu0 0
    %1581 = vmatprep.subr.bf16.mxu0 0
    %1582 = vmatpush2.bf16.xpose.msra.mxu0 0
    %1583 = vmatprep.subr.bf16.mxu0 0
    %1584 = vmatpush2.bf16.xpose.msra.mxu0 0
    %1585 = vmatprep.subr.bf16.mxu0 0
    %1586 = vmatpush2.bf16.xpose.msra.mxu0 0
    %1587 = vmatprep.subr.bf16.mxu0 0
    %1588 = vmatpush2.bf16.xpose.msra.mxu0 0
    %1589 = vmatprep.subr.bf16.mxu0 0
    %1590 = vmatpush2.bf16.xpose.msra.mxu0 0
    %1591 = vmatprep.mubr.bf16.mxu0 0
    %1592 = vmatmul.mubr.bf16.gmra.mxu0 %v1220
    %v1593 = vpop.f32.mrf.mxu0
    %v1594 = vadd.f32 0.0, %v1593
    %v1595 = vpop.f32.mrf.mxu0
    %v1596 = vpop.f32.mrf.mxu0
    %v1597 = vadd.f32 0.0, %v1596
    %v1598 = vpop.f32.mrf.mxu0
    %1599 = vdwg.mxu0
    %v1600 = vmul.f32 %v1594, 0.088388346
    %v1601 = vmul.f32 %v1597, 0.088388346
    %v1602 = vsel %vm1268, %v1600, -inf
    %1603 = vmax.xlane.f32.xlu0 %v1602
    %v1604 = vpop.xlane.xlu0 %1603
    %v1605 = vsel %vm1268, %v1601, -inf
    %1606 = vmax.xlane.f32.xlu0 %v1605
    %v1607 = vpop.xlane.xlu0 %1606
    %v1608 = vsub.f32 %v1600, %v1604
    %v1609 = vsub.f32 %v1601, %v1607
    %v1610 = vmul.f32 %v1608, 1.442695
    %v1611 = vpow.pop %v1610
    %v1612 = vmul.f32 %v1609, 1.442695
    %v1613 = vpow.pop %v1612
    %v1614 = vsel %vm1268, %v1611, 0.0
    %1615 = vadd.xlane.f32.xlu0 %v1614
    %v1616 = vpop.xlane.xlu0 %1615
    %v1617 = vsel %vm1268, %v1613, 0.0
    %1618 = vadd.xlane.f32.xlu0 %v1617
    %v1619 = vpop.xlane.xlu0 %1618
    %v1620 = vrcp.pop %v1616
    %v1621 = vmul.f32 %v1611, %v1620
    %v1622 = vrcp.pop %v1619
    %v1623 = vmul.f32 %v1613, %v1622
    %v1624 = vpack.c.bf16 %v1623, %v1621
    %v1626 = vsel %vm1268, %v1624, 0
    %1628 = vmatprep.subr.bf16.mxu0 0
    %1629 = vmatpush1.bf16.msra.mxu0 0
    %1630 = vmatprep.subr.bf16.mxu0 0
    %1631 = vmatpush1.bf16.msra.mxu0 0
    %1632 = vmatprep.subr.bf16.mxu0 0
    %1633 = vmatpush1.bf16.msra.mxu0 0
    %1634 = vmatprep.subr.bf16.mxu0 0
    %1635 = vmatpush1.bf16.msra.mxu0 0
    %1636 = vmatprep.subr.bf16.mxu0 0
    %1637 = vmatpush1.bf16.msra.mxu0 0
    %1638 = vmatprep.subr.bf16.mxu0 0
    %1639 = vmatpush1.bf16.msra.mxu0 0
    %1640 = vmatprep.subr.bf16.mxu0 0
    %1641 = vmatpush1.bf16.msra.mxu0 0
    %1642 = vmatprep.subr.bf16.mxu0 0
    %1643 = vmatpush1.bf16.msra.mxu0 %v1224
    %1644 = vmatprep.subr.bf16.mxu0 0
    %1645 = vmatpush2.bf16.msra.mxu0 0
    %1646 = vmatprep.subr.bf16.mxu0 0
    %1647 = vmatpush2.bf16.msra.mxu0 0
    %1648 = vmatprep.subr.bf16.mxu0 0
    %1649 = vmatpush2.bf16.msra.mxu0 0
    %1650 = vmatprep.subr.bf16.mxu0 0
    %1651 = vmatpush2.bf16.msra.mxu0 0
    %1652 = vmatprep.subr.bf16.mxu0 0
    %1653 = vmatpush2.bf16.msra.mxu0 0
    %1654 = vmatprep.subr.bf16.mxu0 0
    %1655 = vmatpush2.bf16.msra.mxu0 0
    %1656 = vmatprep.subr.bf16.mxu0 0
    %1657 = vmatpush2.bf16.msra.mxu0 0
    %1658 = vmatprep.subr.bf16.mxu0 0
    %1659 = vmatpush2.bf16.msra.mxu0 0
    %1660 = vmatprep.mubr.bf16.mxu0 0
    %1661 = vmatmul.mubr.bf16.gmra.mxu0 %v1626
    %v1662 = vpop.f32.mrf.mxu0
    %v1663 = vadd.f32 0.0, %v1662
    %v1664 = vpop.f32.mrf.mxu0
    %v1665 = vpop.f32.mrf.mxu0
    %v1666 = vadd.f32 0.0, %v1665
    %v1667 = vpop.f32.mrf.mxu0
    %1668 = vdwg.mxu0
    %v1669 = vpack.c.bf16 %v1666, %v1663
    %v1670 = vld [vmem:[#allocation2] sm:$0xff]
    %v1671 = vld [vmem:[#allocation2 + $0x8] sm:$0xff]
    %v1672 = vld [vmem:[#allocation2 + $0x10] sm:$0xff]
    %v1673 = vld [vmem:[#allocation2 + $0x18] sm:$0xff]
    %v1674 = vld [vmem:[#allocation2 + $0x20] sm:$0xff]
    %v1675 = vld [vmem:[#allocation2 + $0x28] sm:$0xff]
    %v1676 = vld [vmem:[#allocation2 + $0x30] sm:$0xff]
    %v1677 = vld [vmem:[#allocation2 + $0x38] sm:$0xff]
    %v1678 = vld [vmem:[#allocation2 + $0x40] sm:$0xff]
    %v1679 = vld [vmem:[#allocation2 + $0x48] sm:$0xff]
    %v1680 = vld [vmem:[#allocation2 + $0x50] sm:$0xff]
    %v1681 = vld [vmem:[#allocation2 + $0x58] sm:$0xff]
    %v1682 = vld [vmem:[#allocation2 + $0x60] sm:$0xff]
    %v1683 = vld [vmem:[#allocation2 + $0x68] sm:$0xff]
    %v1684 = vld [vmem:[#allocation2 + $0x70] sm:$0xff]
    %v1685 = vld [vmem:[#allocation2 + $0x78] sm:$0xff]
    %v1686 = vld [vmem:[#allocation2 + $0x80] sm:$0xff]
    %v1687 = vld [vmem:[#allocation2 + $0x88] sm:$0xff]
    %v1688 = vld [vmem:[#allocation2 + $0x90] sm:$0xff]
    %v1689 = vld [vmem:[#allocation2 + $0x98] sm:$0xff]
    %v1690 = vld [vmem:[#allocation2 + $0xa0] sm:$0xff]
    %v1691 = vld [vmem:[#allocation2 + $0xa8] sm:$0xff]
    %v1692 = vld [vmem:[#allocation2 + $0xb0] sm:$0xff]
    %v1693 = vld [vmem:[#allocation2 + $0xb8] sm:$0xff]
    %v1694 = vld [vmem:[#allocation2 + $0xc0] sm:$0xff]
    %v1695 = vld [vmem:[#allocation2 + $0xc8] sm:$0xff]
    %v1696 = vld [vmem:[#allocation2 + $0xd0] sm:$0xff]
    %v1697 = vld [vmem:[#allocation2 + $0xd8] sm:$0xff]
    %v1698 = vld [vmem:[#allocation2 + $0xe0] sm:$0xff]
    %v1699 = vld [vmem:[#allocation2 + $0xe8] sm:$0xff]
    %v1700 = vld [vmem:[#allocation2 + $0xf0] sm:$0xff]
    %v1701 = vld [vmem:[#allocation2 + $0xf8] sm:$0xff]
    %v1734 = vunpack.c.l.b16 %v1670
    %v1735 = vunpack.c.h.b16 %v1670
    %v1736 = vunpack.c.l.b16 %v1671
    %v1737 = vunpack.c.h.b16 %v1671
    %v1738 = vunpack.c.l.b16 %v1672
    %v1739 = vunpack.c.h.b16 %v1672
    %v1740 = vunpack.c.l.b16 %v1673
    %v1741 = vunpack.c.h.b16 %v1673
    %v1742 = vunpack.c.l.b16 %v1674
    %v1743 = vunpack.c.h.b16 %v1674
    %v1744 = vunpack.c.l.b16 %v1675
    %v1745 = vunpack.c.h.b16 %v1675
    %v1746 = vunpack.c.l.b16 %v1676
    %v1747 = vunpack.c.h.b16 %v1676
    %v1748 = vunpack.c.l.b16 %v1677
    %v1749 = vunpack.c.h.b16 %v1677
    %v1750 = vunpack.c.l.b16 %v1678
    %v1751 = vunpack.c.h.b16 %v1678
    %v1752 = vunpack.c.l.b16 %v1679
    %v1753 = vunpack.c.h.b16 %v1679
    %v1754 = vunpack.c.l.b16 %v1680
    %v1755 = vunpack.c.h.b16 %v1680
    %v1756 = vunpack.c.l.b16 %v1681
    %v1757 = vunpack.c.h.b16 %v1681
    %v1758 = vunpack.c.l.b16 %v1682
    %v1759 = vunpack.c.h.b16 %v1682
    %v1760 = vunpack.c.l.b16 %v1683
    %v1761 = vunpack.c.h.b16 %v1683
    %v1762 = vunpack.c.l.b16 %v1684
    %v1763 = vunpack.c.h.b16 %v1684
    %v1764 = vunpack.c.l.b16 %v1685
    %v1765 = vunpack.c.h.b16 %v1685
    %v1766 = vunpack.c.l.b16 %v1686
    %v1767 = vunpack.c.h.b16 %v1686
    %v1768 = vunpack.c.l.b16 %v1687
    %v1769 = vunpack.c.h.b16 %v1687
    %v1770 = vunpack.c.l.b16 %v1688
    %v1771 = vunpack.c.h.b16 %v1688
    %v1772 = vunpack.c.l.b16 %v1689
    %v1773 = vunpack.c.h.b16 %v1689
    %v1774 = vunpack.c.l.b16 %v1690
    %v1775 = vunpack.c.h.b16 %v1690
    %v1776 = vunpack.c.l.b16 %v1691
    %v1777 = vunpack.c.h.b16 %v1691
    %v1778 = vunpack.c.l.b16 %v1692
    %v1779 = vunpack.c.h.b16 %v1692
    %v1780 = vunpack.c.l.b16 %v1693
    %v1781 = vunpack.c.h.b16 %v1693
    %v1782 = vunpack.c.l.b16 %v1694
    %v1783 = vunpack.c.h.b16 %v1694
    %v1784 = vunpack.c.l.b16 %v1695
    %v1785 = vunpack.c.h.b16 %v1695
    %v1786 = vunpack.c.l.b16 %v1696
    %v1787 = vunpack.c.h.b16 %v1696
    %v1788 = vunpack.c.l.b16 %v1697
    %v1789 = vunpack.c.h.b16 %v1697
    %v1790 = vunpack.c.l.b16 %v1698
    %v1791 = vunpack.c.h.b16 %v1698
    %v1792 = vunpack.c.l.b16 %v1699
    %v1793 = vunpack.c.h.b16 %v1699
    %v1794 = vunpack.c.l.b16 %v1700
    %v1795 = vunpack.c.h.b16 %v1700
    %v1796 = vunpack.c.l.b16 %v1701
    %v1797 = vunpack.c.h.b16 %v1701
    %v1798 = vpack.c.b16 %v1736, %v1734
    %v1799 = vpack.c.b16 %v1737, %v1735
    %v1800 = vpack.c.b16 %v1740, %v1738
    %v1801 = vpack.c.b16 %v1741, %v1739
    %v1802 = vpack.c.b16 %v1744, %v1742
    %v1803 = vpack.c.b16 %v1745, %v1743
    %v1804 = vpack.c.b16 %v1748, %v1746
    %v1805 = vpack.c.b16 %v1749, %v1747
    %v1806 = vpack.c.b16 %v1752, %v1750
    %v1807 = vpack.c.b16 %v1753, %v1751
    %v1808 = vpack.c.b16 %v1756, %v1754
    %v1809 = vpack.c.b16 %v1757, %v1755
    %v1810 = vpack.c.b16 %v1760, %v1758
    %v1811 = vpack.c.b16 %v1761, %v1759
    %v1812 = vpack.c.b16 %v1764, %v1762
    %v1813 = vpack.c.b16 %v1765, %v1763
    %v1814 = vpack.c.b16 %v1768, %v1766
    %v1815 = vpack.c.b16 %v1769, %v1767
    %v1816 = vpack.c.b16 %v1772, %v1770
    %v1817 = vpack.c.b16 %v1773, %v1771
    %v1818 = vpack.c.b16 %v1776, %v1774
    %v1819 = vpack.c.b16 %v1777, %v1775
    %v1820 = vpack.c.b16 %v1780, %v1778
    %v1821 = vpack.c.b16 %v1781, %v1779
    %v1822 = vpack.c.b16 %v1784, %v1782
    %v1823 = vpack.c.b16 %v1785, %v1783
    %v1824 = vpack.c.b16 %v1788, %v1786
    %v1825 = vpack.c.b16 %v1789, %v1787
    %v1826 = vpack.c.b16 %v1792, %v1790
    %v1827 = vpack.c.b16 %v1793, %v1791
    %v1828 = vpack.c.b16 %v1796, %v1794
    %v1829 = vpack.c.b16 %v1797, %v1795
    %1862 = vmatprep.subr.bf16.mxu0 %v1813
    %1863 = vmatpush1.bf16.msra.mxu0 %v1812
    %1864 = vmatprep.subr.bf16.mxu0 %v1811
    %1865 = vmatpush1.bf16.msra.mxu0 %v1810
    %1866 = vmatprep.subr.bf16.mxu0 %v1809
    %1867 = vmatpush1.bf16.msra.mxu0 %v1808
    %1868 = vmatprep.subr.bf16.mxu0 %v1807
    %1869 = vmatpush1.bf16.msra.mxu0 %v1806
    %1870 = vmatprep.subr.bf16.mxu0 %v1805
    %1871 = vmatpush1.bf16.msra.mxu0 %v1804
    %1872 = vmatprep.subr.bf16.mxu0 %v1803
    %1873 = vmatpush1.bf16.msra.mxu0 %v1802
    %1874 = vmatprep.subr.bf16.mxu0 %v1801
    %1875 = vmatpush1.bf16.msra.mxu0 %v1800
    %1876 = vmatprep.subr.bf16.mxu0 %v1799
    %1877 = vmatpush1.bf16.msra.mxu0 %v1798
    %1878 = vmatprep.subr.bf16.mxu0 %v1829
    %1879 = vmatpush2.bf16.msra.mxu0 %v1828
    %1880 = vmatprep.subr.bf16.mxu0 %v1827
    %1881 = vmatpush2.bf16.msra.mxu0 %v1826
    %1882 = vmatprep.subr.bf16.mxu0 %v1825
    %1883 = vmatpush2.bf16.msra.mxu0 %v1824
    %1884 = vmatprep.subr.bf16.mxu0 %v1823
    %1885 = vmatpush2.bf16.msra.mxu0 %v1822
    %1886 = vmatprep.subr.bf16.mxu0 %v1821
    %1887 = vmatpush2.bf16.msra.mxu0 %v1820
    %1888 = vmatprep.subr.bf16.mxu0 %v1819
    %1889 = vmatpush2.bf16.msra.mxu0 %v1818
    %1890 = vmatprep.subr.bf16.mxu0 %v1817
    %1891 = vmatpush2.bf16.msra.mxu0 %v1816
    %1892 = vmatprep.subr.bf16.mxu0 %v1815
    %1893 = vmatpush2.bf16.msra.mxu0 %v1814
    %1894 = vmatprep.mubr.bf16.mxu0 %v1447
    %1895 = vmatmul.mubr.bf16.gmra.mxu0 %v1336
    %v1896 = vpop.f32.mrf.mxu0
    %v1897 = vadd.f32 0.0, %v1896
    %v1898 = vpop.f32.mrf.mxu0
    %v1899 = vadd.f32 0.0, %v1898
    %v1900 = vpop.f32.mrf.mxu0
    %v1901 = vadd.f32 0.0, %v1900
    %v1902 = vpop.f32.mrf.mxu0
    %v1903 = vadd.f32 0.0, %v1902
    %1904 = vmatprep.mubr.bf16.mxu0 %v1669
    %1905 = vmatmul.mubr.bf16.gmra.mxu0 %v1558
    %v1906 = vpop.f32.mrf.mxu0
    %v1907 = vadd.f32 0.0, %v1906
    %v1908 = vpop.f32.mrf.mxu0
    %v1909 = vadd.f32 0.0, %v1908
    %v1910 = vpop.f32.mrf.mxu0
    %v1911 = vadd.f32 0.0, %v1910
    %v1912 = vpop.f32.mrf.mxu0
    %v1913 = vadd.f32 0.0, %v1912
    %1914 = vdwg.mxu0
    %v1915 = vadd.f32 %v319, %v1897
    %v1916 = vadd.f32 %v321, %v1899
    %v1917 = vadd.f32 %v323, %v1901
    %v1918 = vadd.f32 %v325, %v1903
    %v1919 = vadd.f32 %v329, %v1907
    %v1920 = vadd.f32 %v331, %v1909
    %v1921 = vadd.f32 %v333, %v1911
    %v1922 = vadd.f32 %v335, %v1913
    %v1923 = vld [vmem:[%s8] sm:$0x3]
    %v1925 = vlaneseq
    %v1926 = vshrl.u32 %v1925, 7
    %v1927 = vsub.s32 0, %v1926
    %v1928 = vrot.slane %v1923, %v1927
    %v1929 = vlaneseq
    %v1930 = vshrl.u32 %v1929, 7
    %v1931 = vsub.s32 1, %v1930
    %v1932 = vrot.slane %v1923, %v1931
    %v1935 = vadd.f32 %v1915, %v1928
    %v1936 = vadd.f32 %v1916, %v1932
    %v1937 = vadd.f32 %v1917, %v1928
    %v1938 = vadd.f32 %v1918, %v1932
    %v1939 = vadd.f32 %v1919, %v1928
    %v1940 = vadd.f32 %v1920, %v1932
    %v1941 = vadd.f32 %v1921, %v1928
    %v1942 = vadd.f32 %v1922, %v1932
    %v1943 = vld [vmem:[%s9] sm:$0x3]
    %v1944 = vld [vmem:[%s10] sm:$0x3]
    %v1945 = vadd.f32 %v1935, %v1936
    %1946 = vadd.xlane.f32.xlu0 %v1945
    %v1947 = vpop.xlane.xlu0 %1946
    %v1948 = vadd.f32 %v1937, %v1938
    %1949 = vadd.xlane.f32.xlu0 %v1948
    %v1950 = vpop.xlane.xlu0 %1949
    %v1951 = vadd.f32 %v1939, %v1940
    %1952 = vadd.xlane.f32.xlu0 %v1951
    %v1953 = vpop.xlane.xlu0 %1952
    %v1954 = vadd.f32 %v1941, %v1942
    %1955 = vadd.xlane.f32.xlu0 %v1954
    %v1956 = vpop.xlane.xlu0 %1955
    %v1957 = vmul.f32 %v1947, %v351
    %v1958 = vmul.f32 %v1950, %v351
    %v1959 = vmul.f32 %v1953, %v351
    %v1960 = vmul.f32 %v1956, %v351
    %v1961 = vsub.f32 %v1935, %v1957
    %v1962 = vsub.f32 %v1936, %v1957
    %v1963 = vsub.f32 %v1937, %v1958
    %v1964 = vsub.f32 %v1938, %v1958
    %v1965 = vsub.f32 %v1939, %v1959
    %v1966 = vsub.f32 %v1940, %v1959
    %v1967 = vsub.f32 %v1941, %v1960
    %v1968 = vsub.f32 %v1942, %v1960
    %v1969 = vmul.f32 %v1961, %v1961
    %v1970 = vmul.f32 %v1962, %v1962
    %v1971 = vmul.f32 %v1963, %v1963
    %v1972 = vmul.f32 %v1964, %v1964
    %v1973 = vmul.f32 %v1965, %v1965
    %v1974 = vmul.f32 %v1966, %v1966
    %v1975 = vmul.f32 %v1967, %v1967
    %v1976 = vmul.f32 %v1968, %v1968
    %v1977 = vadd.f32 %v1969, %v1970
    %1978 = vadd.xlane.f32.xlu0 %v1977
    %v1979 = vpop.xlane.xlu0 %1978
    %v1980 = vadd.f32 %v1971, %v1972
    %1981 = vadd.xlane.f32.xlu0 %v1980
    %v1982 = vpop.xlane.xlu0 %1981
    %v1983 = vadd.f32 %v1973, %v1974
    %1984 = vadd.xlane.f32.xlu0 %v1983
    %v1985 = vpop.xlane.xlu0 %1984
    %v1986 = vadd.f32 %v1975, %v1976
    %1987 = vadd.xlane.f32.xlu0 %v1986
    %v1988 = vpop.xlane.xlu0 %1987
    %v1989 = vmul.f32 %v1979, %v351
    %v1990 = vmul.f32 %v1982, %v351
    %v1991 = vmul.f32 %v1985, %v351
    %v1992 = vmul.f32 %v1988, %v351
    %v1993 = vadd.f32 %v1989, 1e-06
    %v1994 = vadd.f32 %v1990, 1e-06
    %v1995 = vadd.f32 %v1991, 1e-06
    %v1996 = vadd.f32 %v1992, 1e-06
    %v1997 = vrsqrt.pop %v1993
    %v1998 = vrsqrt.pop %v1994
    %v1999 = vrsqrt.pop %v1995
    %v2000 = vrsqrt.pop %v1996
    %v2001 = vmul.f32 %v1961, %v1997
    %v2002 = vmul.f32 %v1962, %v1997
    %v2003 = vmul.f32 %v1963, %v1998
    %v2004 = vmul.f32 %v1964, %v1998
    %v2005 = vmul.f32 %v1965, %v1999
    %v2006 = vmul.f32 %v1966, %v1999
    %v2007 = vmul.f32 %v1967, %v2000
    %v2008 = vmul.f32 %v1968, %v2000
    %v2010 = vlaneseq
    %v2011 = vshrl.u32 %v2010, 7
    %v2012 = vsub.s32 0, %v2011
    %v2013 = vrot.slane %v1943, %v2012
    %v2014 = vlaneseq
    %v2015 = vshrl.u32 %v2014, 7
    %v2016 = vsub.s32 1, %v2015
    %v2017 = vrot.slane %v1943, %v2016
    %v2020 = vmul.f32 %v2001, %v2013
    %v2021 = vmul.f32 %v2002, %v2017
    %v2022 = vmul.f32 %v2003, %v2013
    %v2023 = vmul.f32 %v2004, %v2017
    %v2024 = vmul.f32 %v2005, %v2013
    %v2025 = vmul.f32 %v2006, %v2017
    %v2026 = vmul.f32 %v2007, %v2013
    %v2027 = vmul.f32 %v2008, %v2017
    %v2029 = vlaneseq
    %v2030 = vshrl.u32 %v2029, 7
    %v2031 = vsub.s32 0, %v2030
    %v2032 = vrot.slane %v1944, %v2031
    %v2033 = vlaneseq
    %v2034 = vshrl.u32 %v2033, 7
    %v2035 = vsub.s32 1, %v2034
    %v2036 = vrot.slane %v1944, %v2035
    %v2039 = vadd.f32 %v2020, %v2032
    %v2040 = vadd.f32 %v2021, %v2036
    %v2041 = vadd.f32 %v2022, %v2032
    %v2042 = vadd.f32 %v2023, %v2036
    %v2043 = vadd.f32 %v2024, %v2032
    %v2044 = vadd.f32 %v2025, %v2036
    %v2045 = vadd.f32 %v2026, %v2032
    %v2046 = vadd.f32 %v2027, %v2036
    %v2047 = vld [vmem:[%s11] sm:$0xff]
    %v2048 = vld [vmem:[%s11 + $0x8] sm:$0xff]
    %v2049 = vld [vmem:[%s11 + $0x10] sm:$0xff]
    %v2050 = vld [vmem:[%s11 + $0x18] sm:$0xff]
    %v2051 = vld [vmem:[%s11 + $0x20] sm:$0xff]
    %v2052 = vld [vmem:[%s11 + $0x28] sm:$0xff]
    %v2053 = vld [vmem:[%s11 + $0x30] sm:$0xff]
    %v2054 = vld [vmem:[%s11 + $0x38] sm:$0xff]
    %v2055 = vld [vmem:[%s11 + $0x40] sm:$0xff]
    %v2056 = vld [vmem:[%s11 + $0x48] sm:$0xff]
    %v2057 = vld [vmem:[%s11 + $0x50] sm:$0xff]
    %v2058 = vld [vmem:[%s11 + $0x58] sm:$0xff]
    %v2059 = vld [vmem:[%s11 + $0x60] sm:$0xff]
    %v2060 = vld [vmem:[%s11 + $0x68] sm:$0xff]
    %v2061 = vld [vmem:[%s11 + $0x70] sm:$0xff]
    %v2062 = vld [vmem:[%s11 + $0x78] sm:$0xff]
    %v2063 = vld [vmem:[%s11 + $0x80] sm:$0xff]
    %v2064 = vld [vmem:[%s11 + $0x88] sm:$0xff]
    %v2065 = vld [vmem:[%s11 + $0x90] sm:$0xff]
    %v2066 = vld [vmem:[%s11 + $0x98] sm:$0xff]
    %v2067 = vld [vmem:[%s11 + $0xa0] sm:$0xff]
    %v2068 = vld [vmem:[%s11 + $0xa8] sm:$0xff]
    %v2069 = vld [vmem:[%s11 + $0xb0] sm:$0xff]
    %v2070 = vld [vmem:[%s11 + $0xb8] sm:$0xff]
    %v2071 = vld [vmem:[%s11 + $0xc0] sm:$0xff]
    %v2072 = vld [vmem:[%s11 + $0xc8] sm:$0xff]
    %v2073 = vld [vmem:[%s11 + $0xd0] sm:$0xff]
    %v2074 = vld [vmem:[%s11 + $0xd8] sm:$0xff]
    %v2075 = vld [vmem:[%s11 + $0xe0] sm:$0xff]
    %v2076 = vld [vmem:[%s11 + $0xe8] sm:$0xff]
    %v2077 = vld [vmem:[%s11 + $0xf0] sm:$0xff]
    %v2078 = vld [vmem:[%s11 + $0xf8] sm:$0xff]
    %v2079 = vld [vmem:[%s11 + $0x100] sm:$0xff]
    %v2080 = vld [vmem:[%s11 + $0x108] sm:$0xff]
    %v2081 = vld [vmem:[%s11 + $0x110] sm:$0xff]
    %v2082 = vld [vmem:[%s11 + $0x118] sm:$0xff]
    %v2083 = vld [vmem:[%s11 + $0x120] sm:$0xff]
    %v2084 = vld [vmem:[%s11 + $0x128] sm:$0xff]
    %v2085 = vld [vmem:[%s11 + $0x130] sm:$0xff]
    %v2086 = vld [vmem:[%s11 + $0x138] sm:$0xff]
    %v2087 = vld [vmem:[%s11 + $0x140] sm:$0xff]
    %v2088 = vld [vmem:[%s11 + $0x148] sm:$0xff]
    %v2089 = vld [vmem:[%s11 + $0x150] sm:$0xff]
    %v2090 = vld [vmem:[%s11 + $0x158] sm:$0xff]
    %v2091 = vld [vmem:[%s11 + $0x160] sm:$0xff]
    %v2092 = vld [vmem:[%s11 + $0x168] sm:$0xff]
    %v2093 = vld [vmem:[%s11 + $0x170] sm:$0xff]
    %v2094 = vld [vmem:[%s11 + $0x178] sm:$0xff]
    %v2095 = vld [vmem:[%s11 + $0x180] sm:$0xff]
    %v2096 = vld [vmem:[%s11 + $0x188] sm:$0xff]
    %v2097 = vld [vmem:[%s11 + $0x190] sm:$0xff]
    %v2098 = vld [vmem:[%s11 + $0x198] sm:$0xff]
    %v2099 = vld [vmem:[%s11 + $0x1a0] sm:$0xff]
    %v2100 = vld [vmem:[%s11 + $0x1a8] sm:$0xff]
    %v2101 = vld [vmem:[%s11 + $0x1b0] sm:$0xff]
    %v2102 = vld [vmem:[%s11 + $0x1b8] sm:$0xff]
    %v2103 = vld [vmem:[%s11 + $0x1c0] sm:$0xff]
    %v2104 = vld [vmem:[%s11 + $0x1c8] sm:$0xff]
    %v2105 = vld [vmem:[%s11 + $0x1d0] sm:$0xff]
    %v2106 = vld [vmem:[%s11 + $0x1d8] sm:$0xff]
    %v2107 = vld [vmem:[%s11 + $0x1e0] sm:$0xff]
    %v2108 = vld [vmem:[%s11 + $0x1e8] sm:$0xff]
    %v2109 = vld [vmem:[%s11 + $0x1f0] sm:$0xff]
    %v2110 = vld [vmem:[%s11 + $0x1f8] sm:$0xff]
    %v2111 = vpack.c.bf16 %v2041, %v2039
    %v2112 = vpack.c.bf16 %v2042, %v2040
    %v2113 = vpack.c.bf16 %v2045, %v2043
    %v2114 = vpack.c.bf16 %v2046, %v2044
    %v2115 = vld [vmem:[%s12] sm:$0xf]
    %v2117 = vlaneseq
    %v2118 = vshrl.u32 %v2117, 7
    %v2119 = vsub.s32 0, %v2118
    %v2120 = vrot.slane %v2115, %v2119
    %v2121 = vlaneseq
    %v2122 = vshrl.u32 %v2121, 7
    %v2123 = vsub.s32 1, %v2122
    %v2124 = vrot.slane %v2115, %v2123
    %v2125 = vlaneseq
    %v2126 = vshrl.u32 %v2125, 7
    %v2127 = vsub.s32 2, %v2126
    %v2128 = vrot.slane %v2115, %v2127
    %v2129 = vlaneseq
    %v2130 = vshrl.u32 %v2129, 7
    %v2131 = vsub.s32 3, %v2130
    %v2132 = vrot.slane %v2115, %v2131
    %v2201 = vunpack.c.l.b16 %v2047
    %v2202 = vunpack.c.h.b16 %v2047
    %v2203 = vunpack.c.l.b16 %v2048
    %v2204 = vunpack.c.h.b16 %v2048
    %v2205 = vunpack.c.l.b16 %v2049
    %v2206 = vunpack.c.h.b16 %v2049
    %v2207 = vunpack.c.l.b16 %v2050
    %v2208 = vunpack.c.h.b16 %v2050
    %v2209 = vunpack.c.l.b16 %v2051
    %v2210 = vunpack.c.h.b16 %v2051
    %v2211 = vunpack.c.l.b16 %v2052
    %v2212 = vunpack.c.h.b16 %v2052
    %v2213 = vunpack.c.l.b16 %v2053
    %v2214 = vunpack.c.h.b16 %v2053
    %v2215 = vunpack.c.l.b16 %v2054
    %v2216 = vunpack.c.h.b16 %v2054
    %v2217 = vunpack.c.l.b16 %v2055
    %v2218 = vunpack.c.h.b16 %v2055
    %v2219 = vunpack.c.l.b16 %v2056
    %v2220 = vunpack.c.h.b16 %v2056
    %v2221 = vunpack.c.l.b16 %v2057
    %v2222 = vunpack.c.h.b16 %v2057
    %v2223 = vunpack.c.l.b16 %v2058
    %v2224 = vunpack.c.h.b16 %v2058
    %v2225 = vunpack.c.l.b16 %v2059
    %v2226 = vunpack.c.h.b16 %v2059
    %v2227 = vunpack.c.l.b16 %v2060
    %v2228 = vunpack.c.h.b16 %v2060
    %v2229 = vunpack.c.l.b16 %v2061
    %v2230 = vunpack.c.h.b16 %v2061
    %v2231 = vunpack.c.l.b16 %v2062
    %v2232 = vunpack.c.h.b16 %v2062
    %v2233 = vunpack.c.l.b16 %v2063
    %v2234 = vunpack.c.h.b16 %v2063
    %v2235 = vunpack.c.l.b16 %v2064
    %v2236 = vunpack.c.h.b16 %v2064
    %v2237 = vunpack.c.l.b16 %v2065
    %v2238 = vunpack.c.h.b16 %v2065
    %v2239 = vunpack.c.l.b16 %v2066
    %v2240 = vunpack.c.h.b16 %v2066
    %v2241 = vunpack.c.l.b16 %v2067
    %v2242 = vunpack.c.h.b16 %v2067
    %v2243 = vunpack.c.l.b16 %v2068
    %v2244 = vunpack.c.h.b16 %v2068
    %v2245 = vunpack.c.l.b16 %v2069
    %v2246 = vunpack.c.h.b16 %v2069
    %v2247 = vunpack.c.l.b16 %v2070
    %v2248 = vunpack.c.h.b16 %v2070
    %v2249 = vunpack.c.l.b16 %v2071
    %v2250 = vunpack.c.h.b16 %v2071
    %v2251 = vunpack.c.l.b16 %v2072
    %v2252 = vunpack.c.h.b16 %v2072
    %v2253 = vunpack.c.l.b16 %v2073
    %v2254 = vunpack.c.h.b16 %v2073
    %v2255 = vunpack.c.l.b16 %v2074
    %v2256 = vunpack.c.h.b16 %v2074
    %v2257 = vunpack.c.l.b16 %v2075
    %v2258 = vunpack.c.h.b16 %v2075
    %v2259 = vunpack.c.l.b16 %v2076
    %v2260 = vunpack.c.h.b16 %v2076
    %v2261 = vunpack.c.l.b16 %v2077
    %v2262 = vunpack.c.h.b16 %v2077
    %v2263 = vunpack.c.l.b16 %v2078
    %v2264 = vunpack.c.h.b16 %v2078
    %v2265 = vunpack.c.l.b16 %v2079
    %v2266 = vunpack.c.h.b16 %v2079
    %v2267 = vunpack.c.l.b16 %v2080
    %v2268 = vunpack.c.h.b16 %v2080
    %v2269 = vunpack.c.l.b16 %v2081
    %v2270 = vunpack.c.h.b16 %v2081
    %v2271 = vunpack.c.l.b16 %v2082
    %v2272 = vunpack.c.h.b16 %v2082
    %v2273 = vunpack.c.l.b16 %v2083
    %v2274 = vunpack.c.h.b16 %v2083
    %v2275 = vunpack.c.l.b16 %v2084
    %v2276 = vunpack.c.h.b16 %v2084
    %v2277 = vunpack.c.l.b16 %v2085
    %v2278 = vunpack.c.h.b16 %v2085
    %v2279 = vunpack.c.l.b16 %v2086
    %v2280 = vunpack.c.h.b16 %v2086
    %v2281 = vunpack.c.l.b16 %v2087
    %v2282 = vunpack.c.h.b16 %v2087
    %v2283 = vunpack.c.l.b16 %v2088
    %v2284 = vunpack.c.h.b16 %v2088
    %v2285 = vunpack.c.l.b16 %v2089
    %v2286 = vunpack.c.h.b16 %v2089
    %v2287 = vunpack.c.l.b16 %v2090
    %v2288 = vunpack.c.h.b16 %v2090
    %v2289 = vunpack.c.l.b16 %v2091
    %v2290 = vunpack.c.h.b16 %v2091
    %v2291 = vunpack.c.l.b16 %v2092
    %v2292 = vunpack.c.h.b16 %v2092
    %v2293 = vunpack.c.l.b16 %v2093
    %v2294 = vunpack.c.h.b16 %v2093
    %v2295 = vunpack.c.l.b16 %v2094
    %v2296 = vunpack.c.h.b16 %v2094
    %v2297 = vunpack.c.l.b16 %v2095
    %v2298 = vunpack.c.h.b16 %v2095
    %v2299 = vunpack.c.l.b16 %v2096
    %v2300 = vunpack.c.h.b16 %v2096
    %v2301 = vunpack.c.l.b16 %v2097
    %v2302 = vunpack.c.h.b16 %v2097
    %v2303 = vunpack.c.l.b16 %v2098
    %v2304 = vunpack.c.h.b16 %v2098
    %v2305 = vunpack.c.l.b16 %v2099
    %v2306 = vunpack.c.h.b16 %v2099
    %v2307 = vunpack.c.l.b16 %v2100
    %v2308 = vunpack.c.h.b16 %v2100
    %v2309 = vunpack.c.l.b16 %v2101
    %v2310 = vunpack.c.h.b16 %v2101
    %v2311 = vunpack.c.l.b16 %v2102
    %v2312 = vunpack.c.h.b16 %v2102
    %v2313 = vunpack.c.l.b16 %v2103
    %v2314 = vunpack.c.h.b16 %v2103
    %v2315 = vunpack.c.l.b16 %v2104
    %v2316 = vunpack.c.h.b16 %v2104
    %v2317 = vunpack.c.l.b16 %v2105
    %v2318 = vunpack.c.h.b16 %v2105
    %v2319 = vunpack.c.l.b16 %v2106
    %v2320 = vunpack.c.h.b16 %v2106
    %v2321 = vunpack.c.l.b16 %v2107
    %v2322 = vunpack.c.h.b16 %v2107
    %v2323 = vunpack.c.l.b16 %v2108
    %v2324 = vunpack.c.h.b16 %v2108
    %v2325 = vunpack.c.l.b16 %v2109
    %v2326 = vunpack.c.h.b16 %v2109
    %v2327 = vunpack.c.l.b16 %v2110
    %v2328 = vunpack.c.h.b16 %v2110
    %v2329 = vpack.c.b16 %v2205, %v2201
    %v2330 = vpack.c.b16 %v2206, %v2202
    %v2331 = vpack.c.b16 %v2207, %v2203
    %v2332 = vpack.c.b16 %v2208, %v2204
    %v2333 = vpack.c.b16 %v2213, %v2209
    %v2334 = vpack.c.b16 %v2214, %v2210
    %v2335 = vpack.c.b16 %v2215, %v2211
    %v2336 = vpack.c.b16 %v2216, %v2212
    %v2337 = vpack.c.b16 %v2221, %v2217
    %v2338 = vpack.c.b16 %v2222, %v2218
    %v2339 = vpack.c.b16 %v2223, %v2219
    %v2340 = vpack.c.b16 %v2224, %v2220
    %v2341 = vpack.c.b16 %v2229, %v2225
    %v2342 = vpack.c.b16 %v2230, %v2226
    %v2343 = vpack.c.b16 %v2231, %v2227
    %v2344 = vpack.c.b16 %v2232, %v2228
    %v2345 = vpack.c.b16 %v2237, %v2233
    %v2346 = vpack.c.b16 %v2238, %v2234
    %v2347 = vpack.c.b16 %v2239, %v2235
    %v2348 = vpack.c.b16 %v2240, %v2236
    %v2349 = vpack.c.b16 %v2245, %v2241
    %v2350 = vpack.c.b16 %v2246, %v2242
    %v2351 = vpack.c.b16 %v2247, %v2243
    %v2352 = vpack.c.b16 %v2248, %v2244
    %v2353 = vpack.c.b16 %v2253, %v2249
    %v2354 = vpack.c.b16 %v2254, %v2250
    %v2355 = vpack.c.b16 %v2255, %v2251
    %v2356 = vpack.c.b16 %v2256, %v2252
    %v2357 = vpack.c.b16 %v2261, %v2257
    %v2358 = vpack.c.b16 %v2262, %v2258
    %v2359 = vpack.c.b16 %v2263, %v2259
    %v2360 = vpack.c.b16 %v2264, %v2260
    %v2361 = vpack.c.b16 %v2269, %v2265
    %v2362 = vpack.c.b16 %v2270, %v2266
    %v2363 = vpack.c.b16 %v2271, %v2267
    %v2364 = vpack.c.b16 %v2272, %v2268
    %v2365 = vpack.c.b16 %v2277, %v2273
    %v2366 = vpack.c.b16 %v2278, %v2274
    %v2367 = vpack.c.b16 %v2279, %v2275
    %v2368 = vpack.c.b16 %v2280, %v2276
    %v2369 = vpack.c.b16 %v2285, %v2281
    %v2370 = vpack.c.b16 %v2286, %v2282
    %v2371 = vpack.c.b16 %v2287, %v2283
    %v2372 = vpack.c.b16 %v2288, %v2284
    %v2373 = vpack.c.b16 %v2293, %v2289
    %v2374 = vpack.c.b16 %v2294, %v2290
    %v2375 = vpack.c.b16 %v2295, %v2291
    %v2376 = vpack.c.b16 %v2296, %v2292
    %v2377 = vpack.c.b16 %v2301, %v2297
    %v2378 = vpack.c.b16 %v2302, %v2298
    %v2379 = vpack.c.b16 %v2303, %v2299
    %v2380 = vpack.c.b16 %v2304, %v2300
    %v2381 = vpack.c.b16 %v2309, %v2305
    %v2382 = vpack.c.b16 %v2310, %v2306
    %v2383 = vpack.c.b16 %v2311, %v2307
    %v2384 = vpack.c.b16 %v2312, %v2308
    %v2385 = vpack.c.b16 %v2317, %v2313
    %v2386 = vpack.c.b16 %v2318, %v2314
    %v2387 = vpack.c.b16 %v2319, %v2315
    %v2388 = vpack.c.b16 %v2320, %v2316
    %v2389 = vpack.c.b16 %v2325, %v2321
    %v2390 = vpack.c.b16 %v2326, %v2322
    %v2391 = vpack.c.b16 %v2327, %v2323
    %v2392 = vpack.c.b16 %v2328, %v2324
    %2457 = vmatprep.subr.bf16.mxu0 %v2358
    %2458 = vmatpush1.bf16.msra.mxu0 %v2357
    %2459 = vmatprep.subr.bf16.mxu0 %v2354
    %2460 = vmatpush1.bf16.msra.mxu0 %v2353
    %2461 = vmatprep.subr.bf16.mxu0 %v2350
    %2462 = vmatpush1.bf16.msra.mxu0 %v2349
    %2463 = vmatprep.subr.bf16.mxu0 %v2346
    %2464 = vmatpush1.bf16.msra.mxu0 %v2345
    %2465 = vmatprep.subr.bf16.mxu0 %v2342
    %2466 = vmatpush1.bf16.msra.mxu0 %v2341
    %2467 = vmatprep.subr.bf16.mxu0 %v2338
    %2468 = vmatpush1.bf16.msra.mxu0 %v2337
    %2469 = vmatprep.subr.bf16.mxu0 %v2334
    %2470 = vmatpush1.bf16.msra.mxu0 %v2333
    %2471 = vmatprep.subr.bf16.mxu0 %v2330
    %2472 = vmatpush1.bf16.msra.mxu0 %v2329
    %2473 = vmatprep.subr.bf16.mxu0 %v2390
    %2474 = vmatpush2.bf16.msra.mxu0 %v2389
    %2475 = vmatprep.subr.bf16.mxu0 %v2386
    %2476 = vmatpush2.bf16.msra.mxu0 %v2385
    %2477 = vmatprep.subr.bf16.mxu0 %v2382
    %2478 = vmatpush2.bf16.msra.mxu0 %v2381
    %2479 = vmatprep.subr.bf16.mxu0 %v2378
    %2480 = vmatpush2.bf16.msra.mxu0 %v2377
    %2481 = vmatprep.subr.bf16.mxu0 %v2374
    %2482 = vmatpush2.bf16.msra.mxu0 %v2373
    %2483 = vmatprep.subr.bf16.mxu0 %v2370
    %2484 = vmatpush2.bf16.msra.mxu0 %v2369
    %2485 = vmatprep.subr.bf16.mxu0 %v2366
    %2486 = vmatpush2.bf16.msra.mxu0 %v2365
    %2487 = vmatprep.subr.bf16.mxu0 %v2362
    %2488 = vmatpush2.bf16.msra.mxu0 %v2361
    %2489 = vmatprep.mubr.bf16.mxu0 %v2112
    %2490 = vmatmul.mubr.bf16.gmra.mxu0 %v2111
    %v2491 = vpop.f32.mrf.mxu0
    %v2492 = vadd.f32 %v2120, %v2491
    %v2493 = vpop.f32.mrf.mxu0
    %v2494 = vadd.f32 %v2124, %v2493
    %v2495 = vpop.f32.mrf.mxu0
    %v2496 = vadd.f32 %v2120, %v2495
    %v2497 = vpop.f32.mrf.mxu0
    %v2498 = vadd.f32 %v2124, %v2497
    %2499 = vmatprep.mubr.bf16.mxu0 %v2114
    %2500 = vmatmul.mubr.bf16.gmra.mxu0 %v2113
    %v2501 = vpop.f32.mrf.mxu0
    %v2502 = vadd.f32 %v2120, %v2501
    %v2503 = vpop.f32.mrf.mxu0
    %v2504 = vadd.f32 %v2124, %v2503
    %v2505 = vpop.f32.mrf.mxu0
    %v2506 = vadd.f32 %v2120, %v2505
    %v2507 = vpop.f32.mrf.mxu0
    %v2508 = vadd.f32 %v2124, %v2507
    %2509 = vdwg.mxu0
    %2510 = vmatprep.subr.bf16.mxu0 %v2360
    %2511 = vmatpush1.bf16.msra.mxu0 %v2359
    %2512 = vmatprep.subr.bf16.mxu0 %v2356
    %2513 = vmatpush1.bf16.msra.mxu0 %v2355
    %2514 = vmatprep.subr.bf16.mxu0 %v2352
    %2515 = vmatpush1.bf16.msra.mxu0 %v2351
    %2516 = vmatprep.subr.bf16.mxu0 %v2348
    %2517 = vmatpush1.bf16.msra.mxu0 %v2347
    %2518 = vmatprep.subr.bf16.mxu0 %v2344
    %2519 = vmatpush1.bf16.msra.mxu0 %v2343
    %2520 = vmatprep.subr.bf16.mxu0 %v2340
    %2521 = vmatpush1.bf16.msra.mxu0 %v2339
    %2522 = vmatprep.subr.bf16.mxu0 %v2336
    %2523 = vmatpush1.bf16.msra.mxu0 %v2335
    %2524 = vmatprep.subr.bf16.mxu0 %v2332
    %2525 = vmatpush1.bf16.msra.mxu0 %v2331
    %2526 = vmatprep.subr.bf16.mxu0 %v2392
    %2527 = vmatpush2.bf16.msra.mxu0 %v2391
    %2528 = vmatprep.subr.bf16.mxu0 %v2388
    %2529 = vmatpush2.bf16.msra.mxu0 %v2387
    %2530 = vmatprep.subr.bf16.mxu0 %v2384
    %2531 = vmatpush2.bf16.msra.mxu0 %v2383
    %2532 = vmatprep.subr.bf16.mxu0 %v2380
    %2533 = vmatpush2.bf16.msra.mxu0 %v2379
    %2534 = vmatprep.subr.bf16.mxu0 %v2376
    %2535 = vmatpush2.bf16.msra.mxu0 %v2375
    %2536 = vmatprep.subr.bf16.mxu0 %v2372
    %2537 = vmatpush2.bf16.msra.mxu0 %v2371
    %2538 = vmatprep.subr.bf16.mxu0 %v2368
    %2539 = vmatpush2.bf16.msra.mxu0 %v2367
    %2540 = vmatprep.subr.bf16.mxu0 %v2364
    %2541 = vmatpush2.bf16.msra.mxu0 %v2363
    %2542 = vmatprep.mubr.bf16.mxu0 %v2112
    %2543 = vmatmul.mubr.bf16.gmra.mxu0 %v2111
    %v2544 = vpop.f32.mrf.mxu0
    %v2545 = vadd.f32 %v2128, %v2544
    %v2546 = vpop.f32.mrf.mxu0
    %v2547 = vadd.f32 %v2132, %v2546
    %v2548 = vpop.f32.mrf.mxu0
    %v2549 = vadd.f32 %v2128, %v2548
    %v2550 = vpop.f32.mrf.mxu0
    %v2551 = vadd.f32 %v2132, %v2550
    %2552 = vmatprep.mubr.bf16.mxu0 %v2114
    %2553 = vmatmul.mubr.bf16.gmra.mxu0 %v2113
    %v2554 = vpop.f32.mrf.mxu0
    %v2555 = vadd.f32 %v2128, %v2554
    %v2556 = vpop.f32.mrf.mxu0
    %v2557 = vadd.f32 %v2132, %v2556
    %v2558 = vpop.f32.mrf.mxu0
    %v2559 = vadd.f32 %v2128, %v2558
    %v2560 = vpop.f32.mrf.mxu0
    %v2561 = vadd.f32 %v2132, %v2560
    %2562 = vdwg.mxu0
    %v2563 = vmul.f32 %v2492, 0.5
    %v2564 = vmul.f32 %v2494, 0.5
    %v2565 = vmul.f32 %v2545, 0.5
    %v2566 = vmul.f32 %v2547, 0.5
    %v2567 = vmul.f32 %v2496, 0.5
    %v2568 = vmul.f32 %v2498, 0.5
    %v2569 = vmul.f32 %v2549, 0.5
    %v2570 = vmul.f32 %v2551, 0.5
    %v2571 = vmul.f32 %v2502, 0.5
    %v2572 = vmul.f32 %v2504, 0.5
    %v2573 = vmul.f32 %v2555, 0.5
    %v2574 = vmul.f32 %v2557, 0.5
    %v2575 = vmul.f32 %v2506, 0.5
    %v2576 = vmul.f32 %v2508, 0.5
    %v2577 = vmul.f32 %v2559, 0.5
    %v2578 = vmul.f32 %v2561, 0.5
    %v2579 = vmul.f32 %v2492, 0.044715
    %v2580 = vmul.f32 %v2494, 0.044715
    %v2581 = vmul.f32 %v2545, 0.044715
    %v2582 = vmul.f32 %v2547, 0.044715
    %v2583 = vmul.f32 %v2496, 0.044715
    %v2584 = vmul.f32 %v2498, 0.044715
    %v2585 = vmul.f32 %v2549, 0.044715
    %v2586 = vmul.f32 %v2551, 0.044715
    %v2587 = vmul.f32 %v2502, 0.044715
    %v2588 = vmul.f32 %v2504, 0.044715
    %v2589 = vmul.f32 %v2555, 0.044715
    %v2590 = vmul.f32 %v2557, 0.044715
    %v2591 = vmul.f32 %v2506, 0.044715
    %v2592 = vmul.f32 %v2508, 0.044715
    %v2593 = vmul.f32 %v2559, 0.044715
    %v2594 = vmul.f32 %v2561, 0.044715
    %v2595 = vmul.f32 %v2579, %v2492
    %v2596 = vmul.f32 %v2580, %v2494
    %v2597 = vmul.f32 %v2581, %v2545
    %v2598 = vmul.f32 %v2582, %v2547
    %v2599 = vmul.f32 %v2583, %v2496
    %v2600 = vmul.f32 %v2584, %v2498
    %v2601 = vmul.f32 %v2585, %v2549
    %v2602 = vmul.f32 %v2586, %v2551
    %v2603 = vmul.f32 %v2587, %v2502
    %v2604 = vmul.f32 %v2588, %v2504
    %v2605 = vmul.f32 %v2589, %v2555
    %v2606 = vmul.f32 %v2590, %v2557
    %v2607 = vmul.f32 %v2591, %v2506
    %v2608 = vmul.f32 %v2592, %v2508
    %v2609 = vmul.f32 %v2593, %v2559
    %v2610 = vmul.f32 %v2594, %v2561
    %v2611 = vmul.f32 %v2595, %v2492
    %v2612 = vmul.f32 %v2596, %v2494
    %v2613 = vmul.f32 %v2597, %v2545
    %v2614 = vmul.f32 %v2598, %v2547
    %v2615 = vmul.f32 %v2599, %v2496
    %v2616 = vmul.f32 %v2600, %v2498
    %v2617 = vmul.f32 %v2601, %v2549
    %v2618 = vmul.f32 %v2602, %v2551
    %v2619 = vmul.f32 %v2603, %v2502
    %v2620 = vmul.f32 %v2604, %v2504
    %v2621 = vmul.f32 %v2605, %v2555
    %v2622 = vmul.f32 %v2606, %v2557
    %v2623 = vmul.f32 %v2607, %v2506
    %v2624 = vmul.f32 %v2608, %v2508
    %v2625 = vmul.f32 %v2609, %v2559
    %v2626 = vmul.f32 %v2610, %v2561
    %v2627 = vadd.f32 %v2492, %v2611
    %v2628 = vadd.f32 %v2494, %v2612
    %v2629 = vadd.f32 %v2545, %v2613
    %v2630 = vadd.f32 %v2547, %v2614
    %v2631 = vadd.f32 %v2496, %v2615
    %v2632 = vadd.f32 %v2498, %v2616
    %v2633 = vadd.f32 %v2549, %v2617
    %v2634 = vadd.f32 %v2551, %v2618
    %v2635 = vadd.f32 %v2502, %v2619
    %v2636 = vadd.f32 %v2504, %v2620
    %v2637 = vadd.f32 %v2555, %v2621
    %v2638 = vadd.f32 %v2557, %v2622
    %v2639 = vadd.f32 %v2506, %v2623
    %v2640 = vadd.f32 %v2508, %v2624
    %v2641 = vadd.f32 %v2559, %v2625
    %v2642 = vadd.f32 %v2561, %v2626
    %v2643 = vmul.f32 %v2627, 0.7978846
    %v2644 = vmul.f32 %v2628, 0.7978846
    %v2645 = vmul.f32 %v2629, 0.7978846
    %v2646 = vmul.f32 %v2630, 0.7978846
    %v2647 = vmul.f32 %v2631, 0.7978846
    %v2648 = vmul.f32 %v2632, 0.7978846
    %v2649 = vmul.f32 %v2633, 0.7978846
    %v2650 = vmul.f32 %v2634, 0.7978846
    %v2651 = vmul.f32 %v2635, 0.7978846
    %v2652 = vmul.f32 %v2636, 0.7978846
    %v2653 = vmul.f32 %v2637, 0.7978846
    %v2654 = vmul.f32 %v2638, 0.7978846
    %v2655 = vmul.f32 %v2639, 0.7978846
    %v2656 = vmul.f32 %v2640, 0.7978846
    %v2657 = vmul.f32 %v2641, 0.7978846
    %v2658 = vmul.f32 %v2642, 0.7978846
    %v2659 = vtanh.pop %v2643
    %v2660 = vtanh.pop %v2644
    %v2661 = vtanh.pop %v2645
    %v2662 = vtanh.pop %v2646
    %v2663 = vtanh.pop %v2647
    %v2664 = vtanh.pop %v2648
    %v2665 = vtanh.pop %v2649
    %v2666 = vtanh.pop %v2650
    %v2667 = vtanh.pop %v2651
    %v2668 = vtanh.pop %v2652
    %v2669 = vtanh.pop %v2653
    %v2670 = vtanh.pop %v2654
    %v2671 = vtanh.pop %v2655
    %v2672 = vtanh.pop %v2656
    %v2673 = vtanh.pop %v2657
    %v2674 = vtanh.pop %v2658
    %v2675 = vadd.f32 %v2659, 1.0
    %v2676 = vadd.f32 %v2660, 1.0
    %v2677 = vadd.f32 %v2661, 1.0
    %v2678 = vadd.f32 %v2662, 1.0
    %v2679 = vadd.f32 %v2663, 1.0
    %v2680 = vadd.f32 %v2664, 1.0
    %v2681 = vadd.f32 %v2665, 1.0
    %v2682 = vadd.f32 %v2666, 1.0
    %v2683 = vadd.f32 %v2667, 1.0
    %v2684 = vadd.f32 %v2668, 1.0
    %v2685 = vadd.f32 %v2669, 1.0
    %v2686 = vadd.f32 %v2670, 1.0
    %v2687 = vadd.f32 %v2671, 1.0
    %v2688 = vadd.f32 %v2672, 1.0
    %v2689 = vadd.f32 %v2673, 1.0
    %v2690 = vadd.f32 %v2674, 1.0
    %v2691 = vmul.f32 %v2563, %v2675
    %v2692 = vmul.f32 %v2564, %v2676
    %v2693 = vmul.f32 %v2565, %v2677
    %v2694 = vmul.f32 %v2566, %v2678
    %v2695 = vmul.f32 %v2567, %v2679
    %v2696 = vmul.f32 %v2568, %v2680
    %v2697 = vmul.f32 %v2569, %v2681
    %v2698 = vmul.f32 %v2570, %v2682
    %v2699 = vmul.f32 %v2571, %v2683
    %v2700 = vmul.f32 %v2572, %v2684
    %v2701 = vmul.f32 %v2573, %v2685
    %v2702 = vmul.f32 %v2574, %v2686
    %v2703 = vmul.f32 %v2575, %v2687
    %v2704 = vmul.f32 %v2576, %v2688
    %v2705 = vmul.f32 %v2577, %v2689
    %v2706 = vmul.f32 %v2578, %v2690
    %v2707 = vld [vmem:[%s13] sm:$0xff]
    %v2708 = vld [vmem:[%s13 + $0x8] sm:$0xff]
    %v2709 = vld [vmem:[%s13 + $0x10] sm:$0xff]
    %v2710 = vld [vmem:[%s13 + $0x18] sm:$0xff]
    %v2711 = vld [vmem:[%s13 + $0x20] sm:$0xff]
    %v2712 = vld [vmem:[%s13 + $0x28] sm:$0xff]
    %v2713 = vld [vmem:[%s13 + $0x30] sm:$0xff]
    %v2714 = vld [vmem:[%s13 + $0x38] sm:$0xff]
    %v2715 = vld [vmem:[%s13 + $0x40] sm:$0xff]
    %v2716 = vld [vmem:[%s13 + $0x48] sm:$0xff]
    %v2717 = vld [vmem:[%s13 + $0x50] sm:$0xff]
    %v2718 = vld [vmem:[%s13 + $0x58] sm:$0xff]
    %v2719 = vld [vmem:[%s13 + $0x60] sm:$0xff]
    %v2720 = vld [vmem:[%s13 + $0x68] sm:$0xff]
    %v2721 = vld [vmem:[%s13 + $0x70] sm:$0xff]
    %v2722 = vld [vmem:[%s13 + $0x78] sm:$0xff]
    %v2723 = vld [vmem:[%s13 + $0x80] sm:$0xff]
    %v2724 = vld [vmem:[%s13 + $0x88] sm:$0xff]
    %v2725 = vld [vmem:[%s13 + $0x90] sm:$0xff]
    %v2726 = vld [vmem:[%s13 + $0x98] sm:$0xff]
    %v2727 = vld [vmem:[%s13 + $0xa0] sm:$0xff]
    %v2728 = vld [vmem:[%s13 + $0xa8] sm:$0xff]
    %v2729 = vld [vmem:[%s13 + $0xb0] sm:$0xff]
    %v2730 = vld [vmem:[%s13 + $0xb8] sm:$0xff]
    %v2731 = vld [vmem:[%s13 + $0xc0] sm:$0xff]
    %v2732 = vld [vmem:[%s13 + $0xc8] sm:$0xff]
    %v2733 = vld [vmem:[%s13 + $0xd0] sm:$0xff]
    %v2734 = vld [vmem:[%s13 + $0xd8] sm:$0xff]
    %v2735 = vld [vmem:[%s13 + $0xe0] sm:$0xff]
    %v2736 = vld [vmem:[%s13 + $0xe8] sm:$0xff]
    %v2737 = vld [vmem:[%s13 + $0xf0] sm:$0xff]
    %v2738 = vld [vmem:[%s13 + $0xf8] sm:$0xff]
    %v2739 = vld [vmem:[%s13 + $0x100] sm:$0xff]
    %v2740 = vld [vmem:[%s13 + $0x108] sm:$0xff]
    %v2741 = vld [vmem:[%s13 + $0x110] sm:$0xff]
    %v2742 = vld [vmem:[%s13 + $0x118] sm:$0xff]
    %v2743 = vld [vmem:[%s13 + $0x120] sm:$0xff]
    %v2744 = vld [vmem:[%s13 + $0x128] sm:$0xff]
    %v2745 = vld [vmem:[%s13 + $0x130] sm:$0xff]
    %v2746 = vld [vmem:[%s13 + $0x138] sm:$0xff]
    %v2747 = vld [vmem:[%s13 + $0x140] sm:$0xff]
    %v2748 = vld [vmem:[%s13 + $0x148] sm:$0xff]
    %v2749 = vld [vmem:[%s13 + $0x150] sm:$0xff]
    %v2750 = vld [vmem:[%s13 + $0x158] sm:$0xff]
    %v2751 = vld [vmem:[%s13 + $0x160] sm:$0xff]
    %v2752 = vld [vmem:[%s13 + $0x168] sm:$0xff]
    %v2753 = vld [vmem:[%s13 + $0x170] sm:$0xff]
    %v2754 = vld [vmem:[%s13 + $0x178] sm:$0xff]
    %v2755 = vld [vmem:[%s13 + $0x180] sm:$0xff]
    %v2756 = vld [vmem:[%s13 + $0x188] sm:$0xff]
    %v2757 = vld [vmem:[%s13 + $0x190] sm:$0xff]
    %v2758 = vld [vmem:[%s13 + $0x198] sm:$0xff]
    %v2759 = vld [vmem:[%s13 + $0x1a0] sm:$0xff]
    %v2760 = vld [vmem:[%s13 + $0x1a8] sm:$0xff]
    %v2761 = vld [vmem:[%s13 + $0x1b0] sm:$0xff]
    %v2762 = vld [vmem:[%s13 + $0x1b8] sm:$0xff]
    %v2763 = vld [vmem:[%s13 + $0x1c0] sm:$0xff]
    %v2764 = vld [vmem:[%s13 + $0x1c8] sm:$0xff]
    %v2765 = vld [vmem:[%s13 + $0x1d0] sm:$0xff]
    %v2766 = vld [vmem:[%s13 + $0x1d8] sm:$0xff]
    %v2767 = vld [vmem:[%s13 + $0x1e0] sm:$0xff]
    %v2768 = vld [vmem:[%s13 + $0x1e8] sm:$0xff]
    %v2769 = vld [vmem:[%s13 + $0x1f0] sm:$0xff]
    %v2770 = vld [vmem:[%s13 + $0x1f8] sm:$0xff]
    %v2771 = vpack.c.bf16 %v2695, %v2691
    %v2772 = vpack.c.bf16 %v2696, %v2692
    %v2773 = vpack.c.bf16 %v2697, %v2693
    %v2774 = vpack.c.bf16 %v2698, %v2694
    %v2775 = vpack.c.bf16 %v2703, %v2699
    %v2776 = vpack.c.bf16 %v2704, %v2700
    %v2777 = vpack.c.bf16 %v2705, %v2701
    %v2778 = vpack.c.bf16 %v2706, %v2702
    %v2843 = vunpack.c.l.b16 %v2707
    %v2844 = vunpack.c.h.b16 %v2707
    %v2845 = vunpack.c.l.b16 %v2708
    %v2846 = vunpack.c.h.b16 %v2708
    %v2847 = vunpack.c.l.b16 %v2709
    %v2848 = vunpack.c.h.b16 %v2709
    %v2849 = vunpack.c.l.b16 %v2710
    %v2850 = vunpack.c.h.b16 %v2710
    %v2851 = vunpack.c.l.b16 %v2711
    %v2852 = vunpack.c.h.b16 %v2711
    %v2853 = vunpack.c.l.b16 %v2712
    %v2854 = vunpack.c.h.b16 %v2712
    %v2855 = vunpack.c.l.b16 %v2713
    %v2856 = vunpack.c.h.b16 %v2713
    %v2857 = vunpack.c.l.b16 %v2714
    %v2858 = vunpack.c.h.b16 %v2714
    %v2859 = vunpack.c.l.b16 %v2715
    %v2860 = vunpack.c.h.b16 %v2715
    %v2861 = vunpack.c.l.b16 %v2716
    %v2862 = vunpack.c.h.b16 %v2716
    %v2863 = vunpack.c.l.b16 %v2717
    %v2864 = vunpack.c.h.b16 %v2717
    %v2865 = vunpack.c.l.b16 %v2718
    %v2866 = vunpack.c.h.b16 %v2718
    %v2867 = vunpack.c.l.b16 %v2719
    %v2868 = vunpack.c.h.b16 %v2719
    %v2869 = vunpack.c.l.b16 %v2720
    %v2870 = vunpack.c.h.b16 %v2720
    %v2871 = vunpack.c.l.b16 %v2721
    %v2872 = vunpack.c.h.b16 %v2721
    %v2873 = vunpack.c.l.b16 %v2722
    %v2874 = vunpack.c.h.b16 %v2722
    %v2875 = vunpack.c.l.b16 %v2723
    %v2876 = vunpack.c.h.b16 %v2723
    %v2877 = vunpack.c.l.b16 %v2724
    %v2878 = vunpack.c.h.b16 %v2724
    %v2879 = vunpack.c.l.b16 %v2725
    %v2880 = vunpack.c.h.b16 %v2725
    %v2881 = vunpack.c.l.b16 %v2726
    %v2882 = vunpack.c.h.b16 %v2726
    %v2883 = vunpack.c.l.b16 %v2727
    %v2884 = vunpack.c.h.b16 %v2727
    %v2885 = vunpack.c.l.b16 %v2728
    %v2886 = vunpack.c.h.b16 %v2728
    %v2887 = vunpack.c.l.b16 %v2729
    %v2888 = vunpack.c.h.b16 %v2729
    %v2889 = vunpack.c.l.b16 %v2730
    %v2890 = vunpack.c.h.b16 %v2730
    %v2891 = vunpack.c.l.b16 %v2731
    %v2892 = vunpack.c.h.b16 %v2731
    %v2893 = vunpack.c.l.b16 %v2732
    %v2894 = vunpack.c.h.b16 %v2732
    %v2895 = vunpack.c.l.b16 %v2733
    %v2896 = vunpack.c.h.b16 %v2733
    %v2897 = vunpack.c.l.b16 %v2734
    %v2898 = vunpack.c.h.b16 %v2734
    %v2899 = vunpack.c.l.b16 %v2735
    %v2900 = vunpack.c.h.b16 %v2735
    %v2901 = vunpack.c.l.b16 %v2736
    %v2902 = vunpack.c.h.b16 %v2736
    %v2903 = vunpack.c.l.b16 %v2737
    %v2904 = vunpack.c.h.b16 %v2737
    %v2905 = vunpack.c.l.b16 %v2738
    %v2906 = vunpack.c.h.b16 %v2738
    %v2907 = vunpack.c.l.b16 %v2739
    %v2908 = vunpack.c.h.b16 %v2739
    %v2909 = vunpack.c.l.b16 %v2740
    %v2910 = vunpack.c.h.b16 %v2740
    %v2911 = vunpack.c.l.b16 %v2741
    %v2912 = vunpack.c.h.b16 %v2741
    %v2913 = vunpack.c.l.b16 %v2742
    %v2914 = vunpack.c.h.b16 %v2742
    %v2915 = vunpack.c.l.b16 %v2743
    %v2916 = vunpack.c.h.b16 %v2743
    %v2917 = vunpack.c.l.b16 %v2744
    %v2918 = vunpack.c.h.b16 %v2744
    %v2919 = vunpack.c.l.b16 %v2745
    %v2920 = vunpack.c.h.b16 %v2745
    %v2921 = vunpack.c.l.b16 %v2746
    %v2922 = vunpack.c.h.b16 %v2746
    %v2923 = vunpack.c.l.b16 %v2747
    %v2924 = vunpack.c.h.b16 %v2747
    %v2925 = vunpack.c.l.b16 %v2748
    %v2926 = vunpack.c.h.b16 %v2748
    %v2927 = vunpack.c.l.b16 %v2749
    %v2928 = vunpack.c.h.b16 %v2749
    %v2929 = vunpack.c.l.b16 %v2750
    %v2930 = vunpack.c.h.b16 %v2750
    %v2931 = vunpack.c.l.b16 %v2751
    %v2932 = vunpack.c.h.b16 %v2751
    %v2933 = vunpack.c.l.b16 %v2752
    %v2934 = vunpack.c.h.b16 %v2752
    %v2935 = vunpack.c.l.b16 %v2753
    %v2936 = vunpack.c.h.b16 %v2753
    %v2937 = vunpack.c.l.b16 %v2754
    %v2938 = vunpack.c.h.b16 %v2754
    %v2939 = vunpack.c.l.b16 %v2755
    %v2940 = vunpack.c.h.b16 %v2755
    %v2941 = vunpack.c.l.b16 %v2756
    %v2942 = vunpack.c.h.b16 %v2756
    %v2943 = vunpack.c.l.b16 %v2757
    %v2944 = vunpack.c.h.b16 %v2757
    %v2945 = vunpack.c.l.b16 %v2758
    %v2946 = vunpack.c.h.b16 %v2758
    %v2947 = vunpack.c.l.b16 %v2759
    %v2948 = vunpack.c.h.b16 %v2759
    %v2949 = vunpack.c.l.b16 %v2760
    %v2950 = vunpack.c.h.b16 %v2760
    %v2951 = vunpack.c.l.b16 %v2761
    %v2952 = vunpack.c.h.b16 %v2761
    %v2953 = vunpack.c.l.b16 %v2762
    %v2954 = vunpack.c.h.b16 %v2762
    %v2955 = vunpack.c.l.b16 %v2763
    %v2956 = vunpack.c.h.b16 %v2763
    %v2957 = vunpack.c.l.b16 %v2764
    %v2958 = vunpack.c.h.b16 %v2764
    %v2959 = vunpack.c.l.b16 %v2765
    %v2960 = vunpack.c.h.b16 %v2765
    %v2961 = vunpack.c.l.b16 %v2766
    %v2962 = vunpack.c.h.b16 %v2766
    %v2963 = vunpack.c.l.b16 %v2767
    %v2964 = vunpack.c.h.b16 %v2767
    %v2965 = vunpack.c.l.b16 %v2768
    %v2966 = vunpack.c.h.b16 %v2768
    %v2967 = vunpack.c.l.b16 %v2769
    %v2968 = vunpack.c.h.b16 %v2769
    %v2969 = vunpack.c.l.b16 %v2770
    %v2970 = vunpack.c.h.b16 %v2770
    %v2971 = vpack.c.b16 %v2845, %v2843
    %v2972 = vpack.c.b16 %v2846, %v2844
    %v2973 = vpack.c.b16 %v2849, %v2847
    %v2974 = vpack.c.b16 %v2850, %v2848
    %v2975 = vpack.c.b16 %v2853, %v2851
    %v2976 = vpack.c.b16 %v2854, %v2852
    %v2977 = vpack.c.b16 %v2857, %v2855
    %v2978 = vpack.c.b16 %v2858, %v2856
    %v2979 = vpack.c.b16 %v2861, %v2859
    %v2980 = vpack.c.b16 %v2862, %v2860
    %v2981 = vpack.c.b16 %v2865, %v2863
    %v2982 = vpack.c.b16 %v2866, %v2864
    %v2983 = vpack.c.b16 %v2869, %v2867
    %v2984 = vpack.c.b16 %v2870, %v2868
    %v2985 = vpack.c.b16 %v2873, %v2871
    %v2986 = vpack.c.b16 %v2874, %v2872
    %v2987 = vpack.c.b16 %v2877, %v2875
    %v2988 = vpack.c.b16 %v2878, %v2876
    %v2989 = vpack.c.b16 %v2881, %v2879
    %v2990 = vpack.c.b16 %v2882, %v2880
    %v2991 = vpack.c.b16 %v2885, %v2883
    %v2992 = vpack.c.b16 %v2886, %v2884
    %v2993 = vpack.c.b16 %v2889, %v2887
    %v2994 = vpack.c.b16 %v2890, %v2888
    %v2995 = vpack.c.b16 %v2893, %v2891
    %v2996 = vpack.c.b16 %v2894, %v2892
    %v2997 = vpack.c.b16 %v2897, %v2895
    %v2998 = vpack.c.b16 %v2898, %v2896
    %v2999 = vpack.c.b16 %v2901, %v2899
    %v3000 = vpack.c.b16 %v2902, %v2900
    %v3001 = vpack.c.b16 %v2905, %v2903
    %v3002 = vpack.c.b16 %v2906, %v2904
    %v3003 = vpack.c.b16 %v2909, %v2907
    %v3004 = vpack.c.b16 %v2910, %v2908
    %v3005 = vpack.c.b16 %v2913, %v2911
    %v3006 = vpack.c.b16 %v2914, %v2912
    %v3007 = vpack.c.b16 %v2917, %v2915
    %v3008 = vpack.c.b16 %v2918, %v2916
    %v3009 = vpack.c.b16 %v2921, %v2919
    %v3010 = vpack.c.b16 %v2922, %v2920
    %v3011 = vpack.c.b16 %v2925, %v2923
    %v3012 = vpack.c.b16 %v2926, %v2924
    %v3013 = vpack.c.b16 %v2929, %v2927
    %v3014 = vpack.c.b16 %v2930, %v2928
    %v3015 = vpack.c.b16 %v2933, %v2931
    %v3016 = vpack.c.b16 %v2934, %v2932
    %v3017 = vpack.c.b16 %v2937, %v2935
    %v3018 = vpack.c.b16 %v2938, %v2936
    %v3019 = vpack.c.b16 %v2941, %v2939
    %v3020 = vpack.c.b16 %v2942, %v2940
    %v3021 = vpack.c.b16 %v2945, %v2943
    %v3022 = vpack.c.b16 %v2946, %v2944
    %v3023 = vpack.c.b16 %v2949, %v2947
    %v3024 = vpack.c.b16 %v2950, %v2948
    %v3025 = vpack.c.b16 %v2953, %v2951
    %v3026 = vpack.c.b16 %v2954, %v2952
    %v3027 = vpack.c.b16 %v2957, %v2955
    %v3028 = vpack.c.b16 %v2958, %v2956
    %v3029 = vpack.c.b16 %v2961, %v2959
    %v3030 = vpack.c.b16 %v2962, %v2960
    %v3031 = vpack.c.b16 %v2965, %v2963
    %v3032 = vpack.c.b16 %v2966, %v2964
    %v3033 = vpack.c.b16 %v2969, %v2967
    %v3034 = vpack.c.b16 %v2970, %v2968
    %3099 = vmatprep.subr.bf16.mxu0 %v2986
    %3100 = vmatpush1.bf16.msra.mxu0 %v2985
    %3101 = vmatprep.subr.bf16.mxu0 %v2984
    %3102 = vmatpush1.bf16.msra.mxu0 %v2983
    %3103 = vmatprep.subr.bf16.mxu0 %v2982
    %3104 = vmatpush1.bf16.msra.mxu0 %v2981
    %3105 = vmatprep.subr.bf16.mxu0 %v2980
    %3106 = vmatpush1.bf16.msra.mxu0 %v2979
    %3107 = vmatprep.subr.bf16.mxu0 %v2978
    %3108 = vmatpush1.bf16.msra.mxu0 %v2977
    %3109 = vmatprep.subr.bf16.mxu0 %v2976
    %3110 = vmatpush1.bf16.msra.mxu0 %v2975
    %3111 = vmatprep.subr.bf16.mxu0 %v2974
    %3112 = vmatpush1.bf16.msra.mxu0 %v2973
    %3113 = vmatprep.subr.bf16.mxu0 %v2972
    %3114 = vmatpush1.bf16.msra.mxu0 %v2971
    %3115 = vmatprep.subr.bf16.mxu0 %v3002
    %3116 = vmatpush2.bf16.msra.mxu0 %v3001
    %3117 = vmatprep.subr.bf16.mxu0 %v3000
    %3118 = vmatpush2.bf16.msra.mxu0 %v2999
    %3119 = vmatprep.subr.bf16.mxu0 %v2998
    %3120 = vmatpush2.bf16.msra.mxu0 %v2997
    %3121 = vmatprep.subr.bf16.mxu0 %v2996
    %3122 = vmatpush2.bf16.msra.mxu0 %v2995
    %3123 = vmatprep.subr.bf16.mxu0 %v2994
    %3124 = vmatpush2.bf16.msra.mxu0 %v2993
    %3125 = vmatprep.subr.bf16.mxu0 %v2992
    %3126 = vmatpush2.bf16.msra.mxu0 %v2991
    %3127 = vmatprep.subr.bf16.mxu0 %v2990
    %3128 = vmatpush2.bf16.msra.mxu0 %v2989
    %3129 = vmatprep.subr.bf16.mxu0 %v2988
    %3130 = vmatpush2.bf16.msra.mxu0 %v2987
    %3131 = vmatprep.mubr.bf16.mxu0 %v2772
    %3132 = vmatmul.mubr.bf16.gmra.mxu0 %v2771
    %v3133 = vpop.f32.mrf.mxu0
    %v3134 = vadd.f32 0.0, %v3133
    %v3135 = vpop.f32.mrf.mxu0
    %v3136 = vadd.f32 0.0, %v3135
    %v3137 = vpop.f32.mrf.mxu0
    %v3138 = vadd.f32 0.0, %v3137
    %v3139 = vpop.f32.mrf.mxu0
    %v3140 = vadd.f32 0.0, %v3139
    %3141 = vmatprep.mubr.bf16.mxu0 %v2776
    %3142 = vmatmul.mubr.bf16.gmra.mxu0 %v2775
    %v3143 = vpop.f32.mrf.mxu0
    %v3144 = vadd.f32 0.0, %v3143
    %v3145 = vpop.f32.mrf.mxu0
    %v3146 = vadd.f32 0.0, %v3145
    %v3147 = vpop.f32.mrf.mxu0
    %v3148 = vadd.f32 0.0, %v3147
    %v3149 = vpop.f32.mrf.mxu0
    %v3150 = vadd.f32 0.0, %v3149
    %3151 = vdwg.mxu0
    %3152 = vmatprep.subr.bf16.mxu0 %v3018
    %3153 = vmatpush1.bf16.msra.mxu0 %v3017
    %3154 = vmatprep.subr.bf16.mxu0 %v3016
    %3155 = vmatpush1.bf16.msra.mxu0 %v3015
    %3156 = vmatprep.subr.bf16.mxu0 %v3014
    %3157 = vmatpush1.bf16.msra.mxu0 %v3013
    %3158 = vmatprep.subr.bf16.mxu0 %v3012
    %3159 = vmatpush1.bf16.msra.mxu0 %v3011
    %3160 = vmatprep.subr.bf16.mxu0 %v3010
    %3161 = vmatpush1.bf16.msra.mxu0 %v3009
    %3162 = vmatprep.subr.bf16.mxu0 %v3008
    %3163 = vmatpush1.bf16.msra.mxu0 %v3007
    %3164 = vmatprep.subr.bf16.mxu0 %v3006
    %3165 = vmatpush1.bf16.msra.mxu0 %v3005
    %3166 = vmatprep.subr.bf16.mxu0 %v3004
    %3167 = vmatpush1.bf16.msra.mxu0 %v3003
    %3168 = vmatprep.subr.bf16.mxu0 %v3034
    %3169 = vmatpush2.bf16.msra.mxu0 %v3033
    %3170 = vmatprep.subr.bf16.mxu0 %v3032
    %3171 = vmatpush2.bf16.msra.mxu0 %v3031
    %3172 = vmatprep.subr.bf16.mxu0 %v3030
    %3173 = vmatpush2.bf16.msra.mxu0 %v3029
    %3174 = vmatprep.subr.bf16.mxu0 %v3028
    %3175 = vmatpush2.bf16.msra.mxu0 %v3027
    %3176 = vmatprep.subr.bf16.mxu0 %v3026
    %3177 = vmatpush2.bf16.msra.mxu0 %v3025
    %3178 = vmatprep.subr.bf16.mxu0 %v3024
    %3179 = vmatpush2.bf16.msra.mxu0 %v3023
    %3180 = vmatprep.subr.bf16.mxu0 %v3022
    %3181 = vmatpush2.bf16.msra.mxu0 %v3021
    %3182 = vmatprep.subr.bf16.mxu0 %v3020
    %3183 = vmatpush2.bf16.msra.mxu0 %v3019
    %3184 = vmatprep.mubr.bf16.mxu0 %v2774
    %3185 = vmatmul.mubr.bf16.gmra.mxu0 %v2773
    %v3186 = vpop.f32.mrf.mxu0
    %v3187 = vadd.f32 %v3134, %v3186
    %v3188 = vpop.f32.mrf.mxu0
    %v3189 = vadd.f32 %v3136, %v3188
    %v3190 = vpop.f32.mrf.mxu0
    %v3191 = vadd.f32 %v3138, %v3190
    %v3192 = vpop.f32.mrf.mxu0
    %v3193 = vadd.f32 %v3140, %v3192
    %3194 = vmatprep.mubr.bf16.mxu0 %v2778
    %3195 = vmatmul.mubr.bf16.gmra.mxu0 %v2777
    %v3196 = vpop.f32.mrf.mxu0
    %v3197 = vadd.f32 %v3144, %v3196
    %v3198 = vpop.f32.mrf.mxu0
    %v3199 = vadd.f32 %v3146, %v3198
    %v3200 = vpop.f32.mrf.mxu0
    %v3201 = vadd.f32 %v3148, %v3200
    %v3202 = vpop.f32.mrf.mxu0
    %v3203 = vadd.f32 %v3150, %v3202
    %3204 = vdwg.mxu0
    %v3205 = vadd.f32 %v1935, %v3187
    %v3206 = vadd.f32 %v1936, %v3189
    %v3207 = vadd.f32 %v1937, %v3191
    %v3208 = vadd.f32 %v1938, %v3193
    %v3209 = vadd.f32 %v1939, %v3197
    %v3210 = vadd.f32 %v1940, %v3199
    %v3211 = vadd.f32 %v1941, %v3201
    %v3212 = vadd.f32 %v1942, %v3203
    %v3213 = vld [vmem:[%s14] sm:$0x3]
    %v3215 = vlaneseq
    %v3216 = vshrl.u32 %v3215, 7
    %v3217 = vsub.s32 0, %v3216
    %v3218 = vrot.slane %v3213, %v3217
    %v3219 = vlaneseq
    %v3220 = vshrl.u32 %v3219, 7
    %v3221 = vsub.s32 1, %v3220
    %v3222 = vrot.slane %v3213, %v3221
    %v3225 = vadd.f32 %v3205, %v3218
    %v3226 = vadd.f32 %v3206, %v3222
    %v3227 = vadd.f32 %v3207, %v3218
    %v3228 = vadd.f32 %v3208, %v3222
    %v3229 = vadd.f32 %v3209, %v3218
    %v3230 = vadd.f32 %v3210, %v3222
    %v3231 = vadd.f32 %v3211, %v3218
    %v3232 = vadd.f32 %v3212, %v3222
    %s3233 = scalar_lea.vmem %s3, 2
    %v3234 = vld [vmem:[%s3233] sm:$0x3]
    %s3235 = scalar_lea.vmem %s4, 2
    %v3236 = vld [vmem:[%s3235] sm:$0x3]
    %v3237 = vadd.f32 %v3225, %v3226
    %3238 = vadd.xlane.f32.xlu0 %v3237
    %v3239 = vpop.xlane.xlu0 %3238
    %v3240 = vadd.f32 %v3227, %v3228
    %3241 = vadd.xlane.f32.xlu0 %v3240
    %v3242 = vpop.xlane.xlu0 %3241
    %v3243 = vadd.f32 %v3229, %v3230
    %3244 = vadd.xlane.f32.xlu0 %v3243
    %v3245 = vpop.xlane.xlu0 %3244
    %v3246 = vadd.f32 %v3231, %v3232
    %3247 = vadd.xlane.f32.xlu0 %v3246
    %v3248 = vpop.xlane.xlu0 %3247
    %v3249 = vmul.f32 %v3239, %v351
    %v3250 = vmul.f32 %v3242, %v351
    %v3251 = vmul.f32 %v3245, %v351
    %v3252 = vmul.f32 %v3248, %v351
    %v3253 = vsub.f32 %v3225, %v3249
    %v3254 = vsub.f32 %v3226, %v3249
    %v3255 = vsub.f32 %v3227, %v3250
    %v3256 = vsub.f32 %v3228, %v3250
    %v3257 = vsub.f32 %v3229, %v3251
    %v3258 = vsub.f32 %v3230, %v3251
    %v3259 = vsub.f32 %v3231, %v3252
    %v3260 = vsub.f32 %v3232, %v3252
    %v3261 = vmul.f32 %v3253, %v3253
    %v3262 = vmul.f32 %v3254, %v3254
    %v3263 = vmul.f32 %v3255, %v3255
    %v3264 = vmul.f32 %v3256, %v3256
    %v3265 = vmul.f32 %v3257, %v3257
    %v3266 = vmul.f32 %v3258, %v3258
    %v3267 = vmul.f32 %v3259, %v3259
    %v3268 = vmul.f32 %v3260, %v3260
    %v3269 = vadd.f32 %v3261, %v3262
    %3270 = vadd.xlane.f32.xlu0 %v3269
    %v3271 = vpop.xlane.xlu0 %3270
    %v3272 = vadd.f32 %v3263, %v3264
    %3273 = vadd.xlane.f32.xlu0 %v3272
    %v3274 = vpop.xlane.xlu0 %3273
    %v3275 = vadd.f32 %v3265, %v3266
    %3276 = vadd.xlane.f32.xlu0 %v3275
    %v3277 = vpop.xlane.xlu0 %3276
    %v3278 = vadd.f32 %v3267, %v3268
    %3279 = vadd.xlane.f32.xlu0 %v3278
    %v3280 = vpop.xlane.xlu0 %3279
    %v3281 = vmul.f32 %v3271, %v351
    %v3282 = vmul.f32 %v3274, %v351
    %v3283 = vmul.f32 %v3277, %v351
    %v3284 = vmul.f32 %v3280, %v351
    %v3285 = vadd.f32 %v3281, 1e-06
    %v3286 = vadd.f32 %v3282, 1e-06
    %v3287 = vadd.f32 %v3283, 1e-06
    %v3288 = vadd.f32 %v3284, 1e-06
    %v3289 = vrsqrt.pop %v3285
    %v3290 = vrsqrt.pop %v3286
    %v3291 = vrsqrt.pop %v3287
    %v3292 = vrsqrt.pop %v3288
    %v3293 = vmul.f32 %v3253, %v3289
    %v3294 = vmul.f32 %v3254, %v3289
    %v3295 = vmul.f32 %v3255, %v3290
    %v3296 = vmul.f32 %v3256, %v3290
    %v3297 = vmul.f32 %v3257, %v3291
    %v3298 = vmul.f32 %v3258, %v3291
    %v3299 = vmul.f32 %v3259, %v3292
    %v3300 = vmul.f32 %v3260, %v3292
    %v3302 = vlaneseq
    %v3303 = vshrl.u32 %v3302, 7
    %v3304 = vsub.s32 0, %v3303
    %v3305 = vrot.slane %v3234, %v3304
    %v3306 = vlaneseq
    %v3307 = vshrl.u32 %v3306, 7
    %v3308 = vsub.s32 1, %v3307
    %v3309 = vrot.slane %v3234, %v3308
    %v3312 = vmul.f32 %v3293, %v3305
    %v3313 = vmul.f32 %v3294, %v3309
    %v3314 = vmul.f32 %v3295, %v3305
    %v3315 = vmul.f32 %v3296, %v3309
    %v3316 = vmul.f32 %v3297, %v3305
    %v3317 = vmul.f32 %v3298, %v3309
    %v3318 = vmul.f32 %v3299, %v3305
    %v3319 = vmul.f32 %v3300, %v3309
    %v3321 = vlaneseq
    %v3322 = vshrl.u32 %v3321, 7
    %v3323 = vsub.s32 0, %v3322
    %v3324 = vrot.slane %v3236, %v3323
    %v3325 = vlaneseq
    %v3326 = vshrl.u32 %v3325, 7
    %v3327 = vsub.s32 1, %v3326
    %v3328 = vrot.slane %v3236, %v3327
    %v3331 = vadd.f32 %v3312, %v3324
    %v3332 = vadd.f32 %v3313, %v3328
    %v3333 = vadd.f32 %v3314, %v3324
    %v3334 = vadd.f32 %v3315, %v3328
    %v3335 = vadd.f32 %v3316, %v3324
    %v3336 = vadd.f32 %v3317, %v3328
    %v3337 = vadd.f32 %v3318, %v3324
    %v3338 = vadd.f32 %v3319, %v3328
    %s3339 = scalar_lea.vmem %s5, 768
    %v3340 = vld [vmem:[%s3339] sm:$0xff]
    %v3341 = vld [vmem:[%s3339 + $0x8] sm:$0xff]
    %v3342 = vld [vmem:[%s3339 + $0x10] sm:$0xff]
    %v3343 = vld [vmem:[%s3339 + $0x18] sm:$0xff]
    %v3344 = vld [vmem:[%s3339 + $0x20] sm:$0xff]
    %v3345 = vld [vmem:[%s3339 + $0x28] sm:$0xff]
    %v3346 = vld [vmem:[%s3339 + $0x30] sm:$0xff]
    %v3347 = vld [vmem:[%s3339 + $0x38] sm:$0xff]
    %v3348 = vld [vmem:[%s3339 + $0x40] sm:$0xff]
    %v3349 = vld [vmem:[%s3339 + $0x48] sm:$0xff]
    %v3350 = vld [vmem:[%s3339 + $0x50] sm:$0xff]
    %v3351 = vld [vmem:[%s3339 + $0x58] sm:$0xff]
    %v3352 = vld [vmem:[%s3339 + $0x60] sm:$0xff]
    %v3353 = vld [vmem:[%s3339 + $0x68] sm:$0xff]
    %v3354 = vld [vmem:[%s3339 + $0x70] sm:$0xff]
    %v3355 = vld [vmem:[%s3339 + $0x78] sm:$0xff]
    %v3356 = vld [vmem:[%s3339 + $0x80] sm:$0xff]
    %v3357 = vld [vmem:[%s3339 + $0x88] sm:$0xff]
    %v3358 = vld [vmem:[%s3339 + $0x90] sm:$0xff]
    %v3359 = vld [vmem:[%s3339 + $0x98] sm:$0xff]
    %v3360 = vld [vmem:[%s3339 + $0xa0] sm:$0xff]
    %v3361 = vld [vmem:[%s3339 + $0xa8] sm:$0xff]
    %v3362 = vld [vmem:[%s3339 + $0xb0] sm:$0xff]
    %v3363 = vld [vmem:[%s3339 + $0xb8] sm:$0xff]
    %v3364 = vld [vmem:[%s3339 + $0xc0] sm:$0xff]
    %v3365 = vld [vmem:[%s3339 + $0xc8] sm:$0xff]
    %v3366 = vld [vmem:[%s3339 + $0xd0] sm:$0xff]
    %v3367 = vld [vmem:[%s3339 + $0xd8] sm:$0xff]
    %v3368 = vld [vmem:[%s3339 + $0xe0] sm:$0xff]
    %v3369 = vld [vmem:[%s3339 + $0xe8] sm:$0xff]
    %v3370 = vld [vmem:[%s3339 + $0xf0] sm:$0xff]
    %v3371 = vld [vmem:[%s3339 + $0xf8] sm:$0xff]
    %v3372 = vld [vmem:[%s3339 + $0x100] sm:$0xff]
    %v3373 = vld [vmem:[%s3339 + $0x108] sm:$0xff]
    %v3374 = vld [vmem:[%s3339 + $0x110] sm:$0xff]
    %v3375 = vld [vmem:[%s3339 + $0x118] sm:$0xff]
    %v3376 = vld [vmem:[%s3339 + $0x120] sm:$0xff]
    %v3377 = vld [vmem:[%s3339 + $0x128] sm:$0xff]
    %v3378 = vld [vmem:[%s3339 + $0x130] sm:$0xff]
    %v3379 = vld [vmem:[%s3339 + $0x138] sm:$0xff]
    %v3380 = vld [vmem:[%s3339 + $0x140] sm:$0xff]
    %v3381 = vld [vmem:[%s3339 + $0x148] sm:$0xff]
    %v3382 = vld [vmem:[%s3339 + $0x150] sm:$0xff]
    %v3383 = vld [vmem:[%s3339 + $0x158] sm:$0xff]
    %v3384 = vld [vmem:[%s3339 + $0x160] sm:$0xff]
    %v3385 = vld [vmem:[%s3339 + $0x168] sm:$0xff]
    %v3386 = vld [vmem:[%s3339 + $0x170] sm:$0xff]
    %v3387 = vld [vmem:[%s3339 + $0x178] sm:$0xff]
    %v3388 = vld [vmem:[%s3339 + $0x180] sm:$0xff]
    %v3389 = vld [vmem:[%s3339 + $0x188] sm:$0xff]
    %v3390 = vld [vmem:[%s3339 + $0x190] sm:$0xff]
    %v3391 = vld [vmem:[%s3339 + $0x198] sm:$0xff]
    %v3392 = vld [vmem:[%s3339 + $0x1a0] sm:$0xff]
    %v3393 = vld [vmem:[%s3339 + $0x1a8] sm:$0xff]
    %v3394 = vld [vmem:[%s3339 + $0x1b0] sm:$0xff]
    %v3395 = vld [vmem:[%s3339 + $0x1b8] sm:$0xff]
    %v3396 = vld [vmem:[%s3339 + $0x1c0] sm:$0xff]
    %v3397 = vld [vmem:[%s3339 + $0x1c8] sm:$0xff]
    %v3398 = vld [vmem:[%s3339 + $0x1d0] sm:$0xff]
    %v3399 = vld [vmem:[%s3339 + $0x1d8] sm:$0xff]
    %v3400 = vld [vmem:[%s3339 + $0x1e0] sm:$0xff]
    %v3401 = vld [vmem:[%s3339 + $0x1e8] sm:$0xff]
    %v3402 = vld [vmem:[%s3339 + $0x1f0] sm:$0xff]
    %v3403 = vld [vmem:[%s3339 + $0x1f8] sm:$0xff]
    %v3404 = vld [vmem:[%s3339 + $0x200] sm:$0xff]
    %v3405 = vld [vmem:[%s3339 + $0x208] sm:$0xff]
    %v3406 = vld [vmem:[%s3339 + $0x210] sm:$0xff]
    %v3407 = vld [vmem:[%s3339 + $0x218] sm:$0xff]
    %v3408 = vld [vmem:[%s3339 + $0x220] sm:$0xff]
    %v3409 = vld [vmem:[%s3339 + $0x228] sm:$0xff]
    %v3410 = vld [vmem:[%s3339 + $0x230] sm:$0xff]
    %v3411 = vld [vmem:[%s3339 + $0x238] sm:$0xff]
    %v3412 = vld [vmem:[%s3339 + $0x240] sm:$0xff]
    %v3413 = vld [vmem:[%s3339 + $0x248] sm:$0xff]
    %v3414 = vld [vmem:[%s3339 + $0x250] sm:$0xff]
    %v3415 = vld [vmem:[%s3339 + $0x258] sm:$0xff]
    %v3416 = vld [vmem:[%s3339 + $0x260] sm:$0xff]
    %v3417 = vld [vmem:[%s3339 + $0x268] sm:$0xff]
    %v3418 = vld [vmem:[%s3339 + $0x270] sm:$0xff]
    %v3419 = vld [vmem:[%s3339 + $0x278] sm:$0xff]
    %v3420 = vld [vmem:[%s3339 + $0x280] sm:$0xff]
    %v3421 = vld [vmem:[%s3339 + $0x288] sm:$0xff]
    %v3422 = vld [vmem:[%s3339 + $0x290] sm:$0xff]
    %v3423 = vld [vmem:[%s3339 + $0x298] sm:$0xff]
    %v3424 = vld [vmem:[%s3339 + $0x2a0] sm:$0xff]
    %v3425 = vld [vmem:[%s3339 + $0x2a8] sm:$0xff]
    %v3426 = vld [vmem:[%s3339 + $0x2b0] sm:$0xff]
    %v3427 = vld [vmem:[%s3339 + $0x2b8] sm:$0xff]
    %v3428 = vld [vmem:[%s3339 + $0x2c0] sm:$0xff]
    %v3429 = vld [vmem:[%s3339 + $0x2c8] sm:$0xff]
    %v3430 = vld [vmem:[%s3339 + $0x2d0] sm:$0xff]
    %v3431 = vld [vmem:[%s3339 + $0x2d8] sm:$0xff]
    %v3432 = vld [vmem:[%s3339 + $0x2e0] sm:$0xff]
    %v3433 = vld [vmem:[%s3339 + $0x2e8] sm:$0xff]
    %v3434 = vld [vmem:[%s3339 + $0x2f0] sm:$0xff]
    %v3435 = vld [vmem:[%s3339 + $0x2f8] sm:$0xff]
    %v3436 = vpack.c.bf16 %v3333, %v3331
    %v3437 = vpack.c.bf16 %v3334, %v3332
    %v3438 = vpack.c.bf16 %v3337, %v3335
    %v3439 = vpack.c.bf16 %v3338, %v3336
    %s3440 = scalar_lea.vmem %s6, 6
    %v3441 = vld [vmem:[%s3440] sm:$0x3f]
    %v3443 = vlaneseq
    %v3444 = vshrl.u32 %v3443, 7
    %v3445 = vsub.s32 0, %v3444
    %v3446 = vrot.slane %v3441, %v3445
    %v3447 = vlaneseq
    %v3448 = vshrl.u32 %v3447, 7
    %v3449 = vsub.s32 1, %v3448
    %v3450 = vrot.slane %v3441, %v3449
    %v3451 = vlaneseq
    %v3452 = vshrl.u32 %v3451, 7
    %v3453 = vsub.s32 2, %v3452
    %v3454 = vrot.slane %v3441, %v3453
    %v3455 = vlaneseq
    %v3456 = vshrl.u32 %v3455, 7
    %v3457 = vsub.s32 3, %v3456
    %v3458 = vrot.slane %v3441, %v3457
    %v3459 = vlaneseq
    %v3460 = vshrl.u32 %v3459, 7
    %v3461 = vsub.s32 4, %v3460
    %v3462 = vrot.slane %v3441, %v3461
    %v3463 = vlaneseq
    %v3464 = vshrl.u32 %v3463, 7
    %v3465 = vsub.s32 5, %v3464
    %v3466 = vrot.slane %v3441, %v3465
    %v3569 = vunpack.c.l.b16 %v3340
    %v3570 = vunpack.c.h.b16 %v3340
    %v3571 = vunpack.c.l.b16 %v3341
    %v3572 = vunpack.c.h.b16 %v3341
    %v3573 = vunpack.c.l.b16 %v3342
    %v3574 = vunpack.c.h.b16 %v3342
    %v3575 = vunpack.c.l.b16 %v3343
    %v3576 = vunpack.c.h.b16 %v3343
    %v3577 = vunpack.c.l.b16 %v3344
    %v3578 = vunpack.c.h.b16 %v3344
    %v3579 = vunpack.c.l.b16 %v3345
    %v3580 = vunpack.c.h.b16 %v3345
    %v3581 = vunpack.c.l.b16 %v3346
    %v3582 = vunpack.c.h.b16 %v3346
    %v3583 = vunpack.c.l.b16 %v3347
    %v3584 = vunpack.c.h.b16 %v3347
    %v3585 = vunpack.c.l.b16 %v3348
    %v3586 = vunpack.c.h.b16 %v3348
    %v3587 = vunpack.c.l.b16 %v3349
    %v3588 = vunpack.c.h.b16 %v3349
    %v3589 = vunpack.c.l.b16 %v3350
    %v3590 = vunpack.c.h.b16 %v3350
    %v3591 = vunpack.c.l.b16 %v3351
    %v3592 = vunpack.c.h.b16 %v3351
    %v3593 = vunpack.c.l.b16 %v3352
    %v3594 = vunpack.c.h.b16 %v3352
    %v3595 = vunpack.c.l.b16 %v3353
    %v3596 = vunpack.c.h.b16 %v3353
    %v3597 = vunpack.c.l.b16 %v3354
    %v3598 = vunpack.c.h.b16 %v3354
    %v3599 = vunpack.c.l.b16 %v3355
    %v3600 = vunpack.c.h.b16 %v3355
    %v3601 = vunpack.c.l.b16 %v3356
    %v3602 = vunpack.c.h.b16 %v3356
    %v3603 = vunpack.c.l.b16 %v3357
    %v3604 = vunpack.c.h.b16 %v3357
    %v3605 = vunpack.c.l.b16 %v3358
    %v3606 = vunpack.c.h.b16 %v3358
    %v3607 = vunpack.c.l.b16 %v3359
    %v3608 = vunpack.c.h.b16 %v3359
    %v3609 = vunpack.c.l.b16 %v3360
    %v3610 = vunpack.c.h.b16 %v3360
    %v3611 = vunpack.c.l.b16 %v3361
    %v3612 = vunpack.c.h.b16 %v3361
    %v3613 = vunpack.c.l.b16 %v3362
    %v3614 = vunpack.c.h.b16 %v3362
    %v3615 = vunpack.c.l.b16 %v3363
    %v3616 = vunpack.c.h.b16 %v3363
    %v3617 = vunpack.c.l.b16 %v3364
    %v3618 = vunpack.c.h.b16 %v3364
    %v3619 = vunpack.c.l.b16 %v3365
    %v3620 = vunpack.c.h.b16 %v3365
    %v3621 = vunpack.c.l.b16 %v3366
    %v3622 = vunpack.c.h.b16 %v3366
    %v3623 = vunpack.c.l.b16 %v3367
    %v3624 = vunpack.c.h.b16 %v3367
    %v3625 = vunpack.c.l.b16 %v3368
    %v3626 = vunpack.c.h.b16 %v3368
    %v3627 = vunpack.c.l.b16 %v3369
    %v3628 = vunpack.c.h.b16 %v3369
    %v3629 = vunpack.c.l.b16 %v3370
    %v3630 = vunpack.c.h.b16 %v3370
    %v3631 = vunpack.c.l.b16 %v3371
    %v3632 = vunpack.c.h.b16 %v3371
    %v3633 = vunpack.c.l.b16 %v3372
    %v3634 = vunpack.c.h.b16 %v3372
    %v3635 = vunpack.c.l.b16 %v3373
    %v3636 = vunpack.c.h.b16 %v3373
    %v3637 = vunpack.c.l.b16 %v3374
    %v3638 = vunpack.c.h.b16 %v3374
    %v3639 = vunpack.c.l.b16 %v3375
    %v3640 = vunpack.c.h.b16 %v3375
    %v3641 = vunpack.c.l.b16 %v3376
    %v3642 = vunpack.c.h.b16 %v3376
    %v3643 = vunpack.c.l.b16 %v3377
    %v3644 = vunpack.c.h.b16 %v3377
    %v3645 = vunpack.c.l.b16 %v3378
    %v3646 = vunpack.c.h.b16 %v3378
    %v3647 = vunpack.c.l.b16 %v3379
    %v3648 = vunpack.c.h.b16 %v3379
    %v3649 = vunpack.c.l.b16 %v3380
    %v3650 = vunpack.c.h.b16 %v3380
    %v3651 = vunpack.c.l.b16 %v3381
    %v3652 = vunpack.c.h.b16 %v3381
    %v3653 = vunpack.c.l.b16 %v3382
    %v3654 = vunpack.c.h.b16 %v3382
    %v3655 = vunpack.c.l.b16 %v3383
    %v3656 = vunpack.c.h.b16 %v3383
    %v3657 = vunpack.c.l.b16 %v3384
    %v3658 = vunpack.c.h.b16 %v3384
    %v3659 = vunpack.c.l.b16 %v3385
    %v3660 = vunpack.c.h.b16 %v3385
    %v3661 = vunpack.c.l.b16 %v3386
    %v3662 = vunpack.c.h.b16 %v3386
    %v3663 = vunpack.c.l.b16 %v3387
    %v3664 = vunpack.c.h.b16 %v3387
    %v3665 = vunpack.c.l.b16 %v3388
    %v3666 = vunpack.c.h.b16 %v3388
    %v3667 = vunpack.c.l.b16 %v3389
    %v3668 = vunpack.c.h.b16 %v3389
    %v3669 = vunpack.c.l.b16 %v3390
    %v3670 = vunpack.c.h.b16 %v3390
    %v3671 = vunpack.c.l.b16 %v3391
    %v3672 = vunpack.c.h.b16 %v3391
    %v3673 = vunpack.c.l.b16 %v3392
    %v3674 = vunpack.c.h.b16 %v3392
    %v3675 = vunpack.c.l.b16 %v3393
    %v3676 = vunpack.c.h.b16 %v3393
    %v3677 = vunpack.c.l.b16 %v3394
    %v3678 = vunpack.c.h.b16 %v3394
    %v3679 = vunpack.c.l.b16 %v3395
    %v3680 = vunpack.c.h.b16 %v3395
    %v3681 = vunpack.c.l.b16 %v3396
    %v3682 = vunpack.c.h.b16 %v3396
    %v3683 = vunpack.c.l.b16 %v3397
    %v3684 = vunpack.c.h.b16 %v3397
    %v3685 = vunpack.c.l.b16 %v3398
    %v3686 = vunpack.c.h.b16 %v3398
    %v3687 = vunpack.c.l.b16 %v3399
    %v3688 = vunpack.c.h.b16 %v3399
    %v3689 = vunpack.c.l.b16 %v3400
    %v3690 = vunpack.c.h.b16 %v3400
    %v3691 = vunpack.c.l.b16 %v3401
    %v3692 = vunpack.c.h.b16 %v3401
    %v3693 = vunpack.c.l.b16 %v3402
    %v3694 = vunpack.c.h.b16 %v3402
    %v3695 = vunpack.c.l.b16 %v3403
    %v3696 = vunpack.c.h.b16 %v3403
    %v3697 = vunpack.c.l.b16 %v3404
    %v3698 = vunpack.c.h.b16 %v3404
    %v3699 = vunpack.c.l.b16 %v3405
    %v3700 = vunpack.c.h.b16 %v3405
    %v3701 = vunpack.c.l.b16 %v3406
    %v3702 = vunpack.c.h.b16 %v3406
    %v3703 = vunpack.c.l.b16 %v3407
    %v3704 = vunpack.c.h.b16 %v3407
    %v3705 = vunpack.c.l.b16 %v3408
    %v3706 = vunpack.c.h.b16 %v3408
    %v3707 = vunpack.c.l.b16 %v3409
    %v3708 = vunpack.c.h.b16 %v3409
    %v3709 = vunpack.c.l.b16 %v3410
    %v3710 = vunpack.c.h.b16 %v3410
    %v3711 = vunpack.c.l.b16 %v3411
    %v3712 = vunpack.c.h.b16 %v3411
    %v3713 = vunpack.c.l.b16 %v3412
    %v3714 = vunpack.c.h.b16 %v3412
    %v3715 = vunpack.c.l.b16 %v3413
    %v3716 = vunpack.c.h.b16 %v3413
    %v3717 = vunpack.c.l.b16 %v3414
    %v3718 = vunpack.c.h.b16 %v3414
    %v3719 = vunpack.c.l.b16 %v3415
    %v3720 = vunpack.c.h.b16 %v3415
    %v3721 = vunpack.c.l.b16 %v3416
    %v3722 = vunpack.c.h.b16 %v3416
    %v3723 = vunpack.c.l.b16 %v3417
    %v3724 = vunpack.c.h.b16 %v3417
    %v3725 = vunpack.c.l.b16 %v3418
    %v3726 = vunpack.c.h.b16 %v3418
    %v3727 = vunpack.c.l.b16 %v3419
    %v3728 = vunpack.c.h.b16 %v3419
    %v3729 = vunpack.c.l.b16 %v3420
    %v3730 = vunpack.c.h.b16 %v3420
    %v3731 = vunpack.c.l.b16 %v3421
    %v3732 = vunpack.c.h.b16 %v3421
    %v3733 = vunpack.c.l.b16 %v3422
    %v3734 = vunpack.c.h.b16 %v3422
    %v3735 = vunpack.c.l.b16 %v3423
    %v3736 = vunpack.c.h.b16 %v3423
    %v3737 = vunpack.c.l.b16 %v3424
    %v3738 = vunpack.c.h.b16 %v3424
    %v3739 = vunpack.c.l.b16 %v3425
    %v3740 = vunpack.c.h.b16 %v3425
    %v3741 = vunpack.c.l.b16 %v3426
    %v3742 = vunpack.c.h.b16 %v3426
    %v3743 = vunpack.c.l.b16 %v3427
    %v3744 = vunpack.c.h.b16 %v3427
    %v3745 = vunpack.c.l.b16 %v3428
    %v3746 = vunpack.c.h.b16 %v3428
    %v3747 = vunpack.c.l.b16 %v3429
    %v3748 = vunpack.c.h.b16 %v3429
    %v3749 = vunpack.c.l.b16 %v3430
    %v3750 = vunpack.c.h.b16 %v3430
    %v3751 = vunpack.c.l.b16 %v3431
    %v3752 = vunpack.c.h.b16 %v3431
    %v3753 = vunpack.c.l.b16 %v3432
    %v3754 = vunpack.c.h.b16 %v3432
    %v3755 = vunpack.c.l.b16 %v3433
    %v3756 = vunpack.c.h.b16 %v3433
    %v3757 = vunpack.c.l.b16 %v3434
    %v3758 = vunpack.c.h.b16 %v3434
    %v3759 = vunpack.c.l.b16 %v3435
    %v3760 = vunpack.c.h.b16 %v3435
    %v3761 = vpack.c.b16 %v3575, %v3569
    %v3762 = vpack.c.b16 %v3576, %v3570
    %v3763 = vpack.c.b16 %v3577, %v3571
    %v3764 = vpack.c.b16 %v3578, %v3572
    %v3765 = vpack.c.b16 %v3579, %v3573
    %v3766 = vpack.c.b16 %v3580, %v3574
    %v3767 = vpack.c.b16 %v3587, %v3581
    %v3768 = vpack.c.b16 %v3588, %v3582
    %v3769 = vpack.c.b16 %v3589, %v3583
    %v3770 = vpack.c.b16 %v3590, %v3584
    %v3771 = vpack.c.b16 %v3591, %v3585
    %v3772 = vpack.c.b16 %v3592, %v3586
    %v3773 = vpack.c.b16 %v3599, %v3593
    %v3774 = vpack.c.b16 %v3600, %v3594
    %v3775 = vpack.c.b16 %v3601, %v3595
    %v3776 = vpack.c.b16 %v3602, %v3596
    %v3777 = vpack.c.b16 %v3603, %v3597
    %v3778 = vpack.c.b16 %v3604, %v3598
    %v3779 = vpack.c.b16 %v3611, %v3605
    %v3780 = vpack.c.b16 %v3612, %v3606
    %v3781 = vpack.c.b16 %v3613, %v3607
    %v3782 = vpack.c.b16 %v3614, %v3608
    %v3783 = vpack.c.b16 %v3615, %v3609
    %v3784 = vpack.c.b16 %v3616, %v3610
    %v3785 = vpack.c.b16 %v3623, %v3617
    %v3786 = vpack.c.b16 %v3624, %v3618
    %v3787 = vpack.c.b16 %v3625, %v3619
    %v3788 = vpack.c.b16 %v3626, %v3620
    %v3789 = vpack.c.b16 %v3627, %v3621
    %v3790 = vpack.c.b16 %v3628, %v3622
    %v3791 = vpack.c.b16 %v3635, %v3629
    %v3792 = vpack.c.b16 %v3636, %v3630
    %v3793 = vpack.c.b16 %v3637, %v3631
    %v3794 = vpack.c.b16 %v3638, %v3632
    %v3795 = vpack.c.b16 %v3639, %v3633
    %v3796 = vpack.c.b16 %v3640, %v3634
    %v3797 = vpack.c.b16 %v3647, %v3641
    %v3798 = vpack.c.b16 %v3648, %v3642
    %v3799 = vpack.c.b16 %v3649, %v3643
    %v3800 = vpack.c.b16 %v3650, %v3644
    %v3801 = vpack.c.b16 %v3651, %v3645
    %v3802 = vpack.c.b16 %v3652, %v3646
    %v3803 = vpack.c.b16 %v3659, %v3653
    %v3804 = vpack.c.b16 %v3660, %v3654
    %v3805 = vpack.c.b16 %v3661, %v3655
    %v3806 = vpack.c.b16 %v3662, %v3656
    %v3807 = vpack.c.b16 %v3663, %v3657
    %v3808 = vpack.c.b16 %v3664, %v3658
    %v3809 = vpack.c.b16 %v3671, %v3665
    %v3810 = vpack.c.b16 %v3672, %v3666
    %v3811 = vpack.c.b16 %v3673, %v3667
    %v3812 = vpack.c.b16 %v3674, %v3668
    %v3813 = vpack.c.b16 %v3675, %v3669
    %v3814 = vpack.c.b16 %v3676, %v3670
    %v3815 = vpack.c.b16 %v3683, %v3677
    %v3816 = vpack.c.b16 %v3684, %v3678
    %v3817 = vpack.c.b16 %v3685, %v3679
    %v3818 = vpack.c.b16 %v3686, %v3680
    %v3819 = vpack.c.b16 %v3687, %v3681
    %v3820 = vpack.c.b16 %v3688, %v3682
    %v3821 = vpack.c.b16 %v3695, %v3689
    %v3822 = vpack.c.b16 %v3696, %v3690
    %v3823 = vpack.c.b16 %v3697, %v3691
    %v3824 = vpack.c.b16 %v3698, %v3692
    %v3825 = vpack.c.b16 %v3699, %v3693
    %v3826 = vpack.c.b16 %v3700, %v3694
    %v3827 = vpack.c.b16 %v3707, %v3701
    %v3828 = vpack.c.b16 %v3708, %v3702
    %v3829 = vpack.c.b16 %v3709, %v3703
    %v3830 = vpack.c.b16 %v3710, %v3704
    %v3831 = vpack.c.b16 %v3711, %v3705
    %v3832 = vpack.c.b16 %v3712, %v3706
    %v3833 = vpack.c.b16 %v3719, %v3713
    %v3834 = vpack.c.b16 %v3720, %v3714
    %v3835 = vpack.c.b16 %v3721, %v3715
    %v3836 = vpack.c.b16 %v3722, %v3716
    %v3837 = vpack.c.b16 %v3723, %v3717
    %v3838 = vpack.c.b16 %v3724, %v3718
    %v3839 = vpack.c.b16 %v3731, %v3725
    %v3840 = vpack.c.b16 %v3732, %v3726
    %v3841 = vpack.c.b16 %v3733, %v3727
    %v3842 = vpack.c.b16 %v3734, %v3728
    %v3843 = vpack.c.b16 %v3735, %v3729
    %v3844 = vpack.c.b16 %v3736, %v3730
    %v3845 = vpack.c.b16 %v3743, %v3737
    %v3846 = vpack.c.b16 %v3744, %v3738
    %v3847 = vpack.c.b16 %v3745, %v3739
    %v3848 = vpack.c.b16 %v3746, %v3740
    %v3849 = vpack.c.b16 %v3747, %v3741
    %v3850 = vpack.c.b16 %v3748, %v3742
    %v3851 = vpack.c.b16 %v3755, %v3749
    %v3852 = vpack.c.b16 %v3756, %v3750
    %v3853 = vpack.c.b16 %v3757, %v3751
    %v3854 = vpack.c.b16 %v3758, %v3752
    %v3855 = vpack.c.b16 %v3759, %v3753
    %v3856 = vpack.c.b16 %v3760, %v3754
    %3953 = vmatprep.subr.bf16.mxu0 %v3804
    %3954 = vmatpush1.bf16.msra.mxu0 %v3803
    %3955 = vmatprep.subr.bf16.mxu0 %v3798
    %3956 = vmatpush1.bf16.msra.mxu0 %v3797
    %3957 = vmatprep.subr.bf16.mxu0 %v3792
    %3958 = vmatpush1.bf16.msra.mxu0 %v3791
    %3959 = vmatprep.subr.bf16.mxu0 %v3786
    %3960 = vmatpush1.bf16.msra.mxu0 %v3785
    %3961 = vmatprep.subr.bf16.mxu0 %v3780
    %3962 = vmatpush1.bf16.msra.mxu0 %v3779
    %3963 = vmatprep.subr.bf16.mxu0 %v3774
    %3964 = vmatpush1.bf16.msra.mxu0 %v3773
    %3965 = vmatprep.subr.bf16.mxu0 %v3768
    %3966 = vmatpush1.bf16.msra.mxu0 %v3767
    %3967 = vmatprep.subr.bf16.mxu0 %v3762
    %3968 = vmatpush1.bf16.msra.mxu0 %v3761
    %3969 = vmatprep.subr.bf16.mxu0 %v3852
    %3970 = vmatpush2.bf16.msra.mxu0 %v3851
    %3971 = vmatprep.subr.bf16.mxu0 %v3846
    %3972 = vmatpush2.bf16.msra.mxu0 %v3845
    %3973 = vmatprep.subr.bf16.mxu0 %v3840
    %3974 = vmatpush2.bf16.msra.mxu0 %v3839
    %3975 = vmatprep.subr.bf16.mxu0 %v3834
    %3976 = vmatpush2.bf16.msra.mxu0 %v3833
    %3977 = vmatprep.subr.bf16.mxu0 %v3828
    %3978 = vmatpush2.bf16.msra.mxu0 %v3827
    %3979 = vmatprep.subr.bf16.mxu0 %v3822
    %3980 = vmatpush2.bf16.msra.mxu0 %v3821
    %3981 = vmatprep.subr.bf16.mxu0 %v3816
    %3982 = vmatpush2.bf16.msra.mxu0 %v3815
    %3983 = vmatprep.subr.bf16.mxu0 %v3810
    %3984 = vmatpush2.bf16.msra.mxu0 %v3809
    %3985 = vmatprep.mubr.bf16.mxu0 %v3437
    %3986 = vmatmul.mubr.bf16.gmra.mxu0 %v3436
    %v3987 = vpop.f32.mrf.mxu0
    %v3988 = vadd.f32 %v3446, %v3987
    %v3989 = vpop.f32.mrf.mxu0
    %v3990 = vadd.f32 %v3450, %v3989
    %v3991 = vpop.f32.mrf.mxu0
    %v3992 = vadd.f32 %v3446, %v3991
    %v3993 = vpop.f32.mrf.mxu0
    %v3994 = vadd.f32 %v3450, %v3993
    %3995 = vmatprep.mubr.bf16.mxu0 %v3439
    %3996 = vmatmul.mubr.bf16.gmra.mxu0 %v3438
    %v3997 = vpop.f32.mrf.mxu0
    %v3998 = vadd.f32 %v3446, %v3997
    %v3999 = vpop.f32.mrf.mxu0
    %v4000 = vadd.f32 %v3450, %v3999
    %v4001 = vpop.f32.mrf.mxu0
    %v4002 = vadd.f32 %v3446, %v4001
    %v4003 = vpop.f32.mrf.mxu0
    %v4004 = vadd.f32 %v3450, %v4003
    %4005 = vdwg.mxu0
    %4006 = vmatprep.subr.bf16.mxu0 %v3806
    %4007 = vmatpush1.bf16.msra.mxu0 %v3805
    %4008 = vmatprep.subr.bf16.mxu0 %v3800
    %4009 = vmatpush1.bf16.msra.mxu0 %v3799
    %4010 = vmatprep.subr.bf16.mxu0 %v3794
    %4011 = vmatpush1.bf16.msra.mxu0 %v3793
    %4012 = vmatprep.subr.bf16.mxu0 %v3788
    %4013 = vmatpush1.bf16.msra.mxu0 %v3787
    %4014 = vmatprep.subr.bf16.mxu0 %v3782
    %4015 = vmatpush1.bf16.msra.mxu0 %v3781
    %4016 = vmatprep.subr.bf16.mxu0 %v3776
    %4017 = vmatpush1.bf16.msra.mxu0 %v3775
    %4018 = vmatprep.subr.bf16.mxu0 %v3770
    %4019 = vmatpush1.bf16.msra.mxu0 %v3769
    %4020 = vmatprep.subr.bf16.mxu0 %v3764
    %4021 = vmatpush1.bf16.msra.mxu0 %v3763
    %4022 = vmatprep.subr.bf16.mxu0 %v3854
    %4023 = vmatpush2.bf16.msra.mxu0 %v3853
    %4024 = vmatprep.subr.bf16.mxu0 %v3848
    %4025 = vmatpush2.bf16.msra.mxu0 %v3847
    %4026 = vmatprep.subr.bf16.mxu0 %v3842
    %4027 = vmatpush2.bf16.msra.mxu0 %v3841
    %4028 = vmatprep.subr.bf16.mxu0 %v3836
    %4029 = vmatpush2.bf16.msra.mxu0 %v3835
    %4030 = vmatprep.subr.bf16.mxu0 %v3830
    %4031 = vmatpush2.bf16.msra.mxu0 %v3829
    %4032 = vmatprep.subr.bf16.mxu0 %v3824
    %4033 = vmatpush2.bf16.msra.mxu0 %v3823
    %4034 = vmatprep.subr.bf16.mxu0 %v3818
    %4035 = vmatpush2.bf16.msra.mxu0 %v3817
    %4036 = vmatprep.subr.bf16.mxu0 %v3812
    %4037 = vmatpush2.bf16.msra.mxu0 %v3811
    %4038 = vmatprep.mubr.bf16.mxu0 %v3437
    %4039 = vmatmul.mubr.bf16.gmra.mxu0 %v3436
    %v4040 = vpop.f32.mrf.mxu0
    %v4041 = vadd.f32 %v3454, %v4040
    %v4042 = vpop.f32.mrf.mxu0
    %v4043 = vadd.f32 %v3458, %v4042
    %v4044 = vpop.f32.mrf.mxu0
    %v4045 = vadd.f32 %v3454, %v4044
    %v4046 = vpop.f32.mrf.mxu0
    %v4047 = vadd.f32 %v3458, %v4046
    %4048 = vmatprep.mubr.bf16.mxu0 %v3439
    %4049 = vmatmul.mubr.bf16.gmra.mxu0 %v3438
    %v4050 = vpop.f32.mrf.mxu0
    %v4051 = vadd.f32 %v3454, %v4050
    %v4052 = vpop.f32.mrf.mxu0
    %v4053 = vadd.f32 %v3458, %v4052
    %v4054 = vpop.f32.mrf.mxu0
    %v4055 = vadd.f32 %v3454, %v4054
    %v4056 = vpop.f32.mrf.mxu0
    %v4057 = vadd.f32 %v3458, %v4056
    %4058 = vdwg.mxu0
    %4059 = vmatprep.subr.bf16.mxu0 %v3808
    %4060 = vmatpush1.bf16.msra.mxu0 %v3807
    %4061 = vmatprep.subr.bf16.mxu0 %v3802
    %4062 = vmatpush1.bf16.msra.mxu0 %v3801
    %4063 = vmatprep.subr.bf16.mxu0 %v3796
    %4064 = vmatpush1.bf16.msra.mxu0 %v3795
    %4065 = vmatprep.subr.bf16.mxu0 %v3790
    %4066 = vmatpush1.bf16.msra.mxu0 %v3789
    %4067 = vmatprep.subr.bf16.mxu0 %v3784
    %4068 = vmatpush1.bf16.msra.mxu0 %v3783
    %4069 = vmatprep.subr.bf16.mxu0 %v3778
    %4070 = vmatpush1.bf16.msra.mxu0 %v3777
    %4071 = vmatprep.subr.bf16.mxu0 %v3772
    %4072 = vmatpush1.bf16.msra.mxu0 %v3771
    %4073 = vmatprep.subr.bf16.mxu0 %v3766
    %4074 = vmatpush1.bf16.msra.mxu0 %v3765
    %4075 = vmatprep.subr.bf16.mxu0 %v3856
    %4076 = vmatpush2.bf16.msra.mxu0 %v3855
    %4077 = vmatprep.subr.bf16.mxu0 %v3850
    %4078 = vmatpush2.bf16.msra.mxu0 %v3849
    %4079 = vmatprep.subr.bf16.mxu0 %v3844
    %4080 = vmatpush2.bf16.msra.mxu0 %v3843
    %4081 = vmatprep.subr.bf16.mxu0 %v3838
    %4082 = vmatpush2.bf16.msra.mxu0 %v3837
    %4083 = vmatprep.subr.bf16.mxu0 %v3832
    %4084 = vmatpush2.bf16.msra.mxu0 %v3831
    %4085 = vmatprep.subr.bf16.mxu0 %v3826
    %4086 = vmatpush2.bf16.msra.mxu0 %v3825
    %4087 = vmatprep.subr.bf16.mxu0 %v3820
    %4088 = vmatpush2.bf16.msra.mxu0 %v3819
    %4089 = vmatprep.subr.bf16.mxu0 %v3814
    %4090 = vmatpush2.bf16.msra.mxu0 %v3813
    %4091 = vmatprep.mubr.bf16.mxu0 %v3437
    %4092 = vmatmul.mubr.bf16.gmra.mxu0 %v3436
    %v4093 = vpop.f32.mrf.mxu0
    %v4094 = vadd.f32 %v3462, %v4093
    %v4095 = vpop.f32.mrf.mxu0
    %v4096 = vadd.f32 %v3466, %v4095
    %v4097 = vpop.f32.mrf.mxu0
    %v4098 = vadd.f32 %v3462, %v4097
    %v4099 = vpop.f32.mrf.mxu0
    %v4100 = vadd.f32 %v3466, %v4099
    %4101 = vmatprep.mubr.bf16.mxu0 %v3439
    %4102 = vmatmul.mubr.bf16.gmra.mxu0 %v3438
    %v4103 = vpop.f32.mrf.mxu0
    %v4104 = vadd.f32 %v3462, %v4103
    %v4105 = vpop.f32.mrf.mxu0
    %v4106 = vadd.f32 %v3466, %v4105
    %v4107 = vpop.f32.mrf.mxu0
    %v4108 = vadd.f32 %v3462, %v4107
    %v4109 = vpop.f32.mrf.mxu0
    %v4110 = vadd.f32 %v3466, %v4109
    %4111 = vdwg.mxu0
    %v4112 = vpack.c.bf16 %v3992, %v3988
    %v4113 = vpack.c.bf16 %v3994, %v3990
    %v4114 = vpack.c.bf16 %v4045, %v4041
    %v4115 = vpack.c.bf16 %v4047, %v4043
    %v4116 = vpack.c.bf16 %v4098, %v4094
    %v4117 = vpack.c.bf16 %v4100, %v4096
    %v4118 = vpack.c.bf16 %v4002, %v3998
    %v4119 = vpack.c.bf16 %v4004, %v4000
    %v4120 = vpack.c.bf16 %v4055, %v4051
    %v4121 = vpack.c.bf16 %v4057, %v4053
    %v4122 = vpack.c.bf16 %v4108, %v4104
    %v4123 = vpack.c.bf16 %v4110, %v4106
    %4124 = vmatprep.subr.bf16.mxu0 0
    %4125 = vmatpush1.bf16.xpose.msra.mxu0 0
    %4126 = vmatprep.subr.bf16.mxu0 0
    %4127 = vmatpush1.bf16.xpose.msra.mxu0 0
    %4128 = vmatprep.subr.bf16.mxu0 0
    %4129 = vmatpush1.bf16.xpose.msra.mxu0 0
    %4130 = vmatprep.subr.bf16.mxu0 0
    %4131 = vmatpush1.bf16.xpose.msra.mxu0 0
    %4132 = vmatprep.subr.bf16.mxu0 0
    %4133 = vmatpush1.bf16.xpose.msra.mxu0 0
    %4134 = vmatprep.subr.bf16.mxu0 0
    %4135 = vmatpush1.bf16.xpose.msra.mxu0 0
    %4136 = vmatprep.subr.bf16.mxu0 0
    %4137 = vmatpush1.bf16.xpose.msra.mxu0 0
    %4138 = vmatprep.subr.bf16.mxu0 0
    %4139 = vmatpush1.bf16.xpose.msra.mxu0 %v4114
    %4140 = vmatprep.subr.bf16.mxu0 0
    %4141 = vmatpush2.bf16.xpose.msra.mxu0 0
    %4142 = vmatprep.subr.bf16.mxu0 0
    %4143 = vmatpush2.bf16.xpose.msra.mxu0 0
    %4144 = vmatprep.subr.bf16.mxu0 0
    %4145 = vmatpush2.bf16.xpose.msra.mxu0 0
    %4146 = vmatprep.subr.bf16.mxu0 0
    %4147 = vmatpush2.bf16.xpose.msra.mxu0 0
    %4148 = vmatprep.subr.bf16.mxu0 0
    %4149 = vmatpush2.bf16.xpose.msra.mxu0 0
    %4150 = vmatprep.subr.bf16.mxu0 0
    %4151 = vmatpush2.bf16.xpose.msra.mxu0 0
    %4152 = vmatprep.subr.bf16.mxu0 0
    %4153 = vmatpush2.bf16.xpose.msra.mxu0 0
    %4154 = vmatprep.subr.bf16.mxu0 0
    %4155 = vmatpush2.bf16.xpose.msra.mxu0 0
    %4156 = vmatprep.mubr.bf16.mxu0 0
    %4157 = vmatmul.mubr.bf16.gmra.mxu0 %v4112
    %v4158 = vpop.f32.mrf.mxu0
    %v4159 = vadd.f32 0.0, %v4158
    %v4160 = vpop.f32.mrf.mxu0
    %v4161 = vpop.f32.mrf.mxu0
    %v4162 = vadd.f32 0.0, %v4161
    %v4163 = vpop.f32.mrf.mxu0
    %4164 = vdwg.mxu0
    %v4165 = vmul.f32 %v4159, 0.088388346
    %v4166 = vmul.f32 %v4162, 0.088388346
    %v4167 = vsel %vm1268, %v4165, -inf
    %4168 = vmax.xlane.f32.xlu0 %v4167
    %v4169 = vpop.xlane.xlu0 %4168
    %v4170 = vsel %vm1268, %v4166, -inf
    %4171 = vmax.xlane.f32.xlu0 %v4170
    %v4172 = vpop.xlane.xlu0 %4171
    %v4173 = vsub.f32 %v4165, %v4169
    %v4174 = vsub.f32 %v4166, %v4172
    %v4175 = vmul.f32 %v4173, 1.442695
    %v4176 = vpow.pop %v4175
    %v4177 = vmul.f32 %v4174, 1.442695
    %v4178 = vpow.pop %v4177
    %v4179 = vsel %vm1268, %v4176, 0.0
    %4180 = vadd.xlane.f32.xlu0 %v4179
    %v4181 = vpop.xlane.xlu0 %4180
    %v4182 = vsel %vm1268, %v4178, 0.0
    %4183 = vadd.xlane.f32.xlu0 %v4182
    %v4184 = vpop.xlane.xlu0 %4183
    %v4185 = vrcp.pop %v4181
    %v4186 = vmul.f32 %v4176, %v4185
    %v4187 = vrcp.pop %v4184
    %v4188 = vmul.f32 %v4178, %v4187
    %v4189 = vpack.c.bf16 %v4188, %v4186
    %v4191 = vsel %vm1268, %v4189, 0
    %4193 = vmatprep.subr.bf16.mxu0 0
    %4194 = vmatpush1.bf16.msra.mxu0 0
    %4195 = vmatprep.subr.bf16.mxu0 0
    %4196 = vmatpush1.bf16.msra.mxu0 0
    %4197 = vmatprep.subr.bf16.mxu0 0
    %4198 = vmatpush1.bf16.msra.mxu0 0
    %4199 = vmatprep.subr.bf16.mxu0 0
    %4200 = vmatpush1.bf16.msra.mxu0 0
    %4201 = vmatprep.subr.bf16.mxu0 0
    %4202 = vmatpush1.bf16.msra.mxu0 0
    %4203 = vmatprep.subr.bf16.mxu0 0
    %4204 = vmatpush1.bf16.msra.mxu0 0
    %4205 = vmatprep.subr.bf16.mxu0 0
    %4206 = vmatpush1.bf16.msra.mxu0 0
    %4207 = vmatprep.subr.bf16.mxu0 0
    %4208 = vmatpush1.bf16.msra.mxu0 %v4116
    %4209 = vmatprep.subr.bf16.mxu0 0
    %4210 = vmatpush2.bf16.msra.mxu0 0
    %4211 = vmatprep.subr.bf16.mxu0 0
    %4212 = vmatpush2.bf16.msra.mxu0 0
    %4213 = vmatprep.subr.bf16.mxu0 0
    %4214 = vmatpush2.bf16.msra.mxu0 0
    %4215 = vmatprep.subr.bf16.mxu0 0
    %4216 = vmatpush2.bf16.msra.mxu0 0
    %4217 = vmatprep.subr.bf16.mxu0 0
    %4218 = vmatpush2.bf16.msra.mxu0 0
    %4219 = vmatprep.subr.bf16.mxu0 0
    %4220 = vmatpush2.bf16.msra.mxu0 0
    %4221 = vmatprep.subr.bf16.mxu0 0
    %4222 = vmatpush2.bf16.msra.mxu0 0
    %4223 = vmatprep.subr.bf16.mxu0 0
    %4224 = vmatpush2.bf16.msra.mxu0 0
    %4225 = vmatprep.mubr.bf16.mxu0 0
    %4226 = vmatmul.mubr.bf16.gmra.mxu0 %v4191
    %v4227 = vpop.f32.mrf.mxu0
    %v4228 = vadd.f32 0.0, %v4227
    %v4229 = vpop.f32.mrf.mxu0
    %v4230 = vpop.f32.mrf.mxu0
    %v4231 = vadd.f32 0.0, %v4230
    %v4232 = vpop.f32.mrf.mxu0
    %4233 = vdwg.mxu0
    %v4234 = vpack.c.bf16 %v4231, %v4228
    %4235 = vmatprep.subr.bf16.mxu0 0
    %4236 = vmatpush1.bf16.xpose.msra.mxu0 0
    %4237 = vmatprep.subr.bf16.mxu0 0
    %4238 = vmatpush1.bf16.xpose.msra.mxu0 0
    %4239 = vmatprep.subr.bf16.mxu0 0
    %4240 = vmatpush1.bf16.xpose.msra.mxu0 0
    %4241 = vmatprep.subr.bf16.mxu0 0
    %4242 = vmatpush1.bf16.xpose.msra.mxu0 0
    %4243 = vmatprep.subr.bf16.mxu0 0
    %4244 = vmatpush1.bf16.xpose.msra.mxu0 0
    %4245 = vmatprep.subr.bf16.mxu0 0
    %4246 = vmatpush1.bf16.xpose.msra.mxu0 0
    %4247 = vmatprep.subr.bf16.mxu0 0
    %4248 = vmatpush1.bf16.xpose.msra.mxu0 0
    %4249 = vmatprep.subr.bf16.mxu0 0
    %4250 = vmatpush1.bf16.xpose.msra.mxu0 %v4115
    %4251 = vmatprep.subr.bf16.mxu0 0
    %4252 = vmatpush2.bf16.xpose.msra.mxu0 0
    %4253 = vmatprep.subr.bf16.mxu0 0
    %4254 = vmatpush2.bf16.xpose.msra.mxu0 0
    %4255 = vmatprep.subr.bf16.mxu0 0
    %4256 = vmatpush2.bf16.xpose.msra.mxu0 0
    %4257 = vmatprep.subr.bf16.mxu0 0
    %4258 = vmatpush2.bf16.xpose.msra.mxu0 0
    %4259 = vmatprep.subr.bf16.mxu0 0
    %4260 = vmatpush2.bf16.xpose.msra.mxu0 0
    %4261 = vmatprep.subr.bf16.mxu0 0
    %4262 = vmatpush2.bf16.xpose.msra.mxu0 0
    %4263 = vmatprep.subr.bf16.mxu0 0
    %4264 = vmatpush2.bf16.xpose.msra.mxu0 0
    %4265 = vmatprep.subr.bf16.mxu0 0
    %4266 = vmatpush2.bf16.xpose.msra.mxu0 0
    %4267 = vmatprep.mubr.bf16.mxu0 0
    %4268 = vmatmul.mubr.bf16.gmra.mxu0 %v4113
    %v4269 = vpop.f32.mrf.mxu0
    %v4270 = vadd.f32 0.0, %v4269
    %v4271 = vpop.f32.mrf.mxu0
    %v4272 = vpop.f32.mrf.mxu0
    %v4273 = vadd.f32 0.0, %v4272
    %v4274 = vpop.f32.mrf.mxu0
    %4275 = vdwg.mxu0
    %v4276 = vmul.f32 %v4270, 0.088388346
    %v4277 = vmul.f32 %v4273, 0.088388346
    %v4278 = vsel %vm1268, %v4276, -inf
    %4279 = vmax.xlane.f32.xlu0 %v4278
    %v4280 = vpop.xlane.xlu0 %4279
    %v4281 = vsel %vm1268, %v4277, -inf
    %4282 = vmax.xlane.f32.xlu0 %v4281
    %v4283 = vpop.xlane.xlu0 %4282
    %v4284 = vsub.f32 %v4276, %v4280
    %v4285 = vsub.f32 %v4277, %v4283
    %v4286 = vmul.f32 %v4284, 1.442695
    %v4287 = vpow.pop %v4286
    %v4288 = vmul.f32 %v4285, 1.442695
    %v4289 = vpow.pop %v4288
    %v4290 = vsel %vm1268, %v4287, 0.0
    %4291 = vadd.xlane.f32.xlu0 %v4290
    %v4292 = vpop.xlane.xlu0 %4291
    %v4293 = vsel %vm1268, %v4289, 0.0
    %4294 = vadd.xlane.f32.xlu0 %v4293
    %v4295 = vpop.xlane.xlu0 %4294
    %v4296 = vrcp.pop %v4292
    %v4297 = vmul.f32 %v4287, %v4296
    %v4298 = vrcp.pop %v4295
    %v4299 = vmul.f32 %v4289, %v4298
    %v4300 = vpack.c.bf16 %v4299, %v4297
    %v4302 = vsel %vm1268, %v4300, 0
    %4304 = vmatprep.subr.bf16.mxu0 0
    %4305 = vmatpush1.bf16.msra.mxu0 0
    %4306 = vmatprep.subr.bf16.mxu0 0
    %4307 = vmatpush1.bf16.msra.mxu0 0
    %4308 = vmatprep.subr.bf16.mxu0 0
    %4309 = vmatpush1.bf16.msra.mxu0 0
    %4310 = vmatprep.subr.bf16.mxu0 0
    %4311 = vmatpush1.bf16.msra.mxu0 0
    %4312 = vmatprep.subr.bf16.mxu0 0
    %4313 = vmatpush1.bf16.msra.mxu0 0
    %4314 = vmatprep.subr.bf16.mxu0 0
    %4315 = vmatpush1.bf16.msra.mxu0 0
    %4316 = vmatprep.subr.bf16.mxu0 0
    %4317 = vmatpush1.bf16.msra.mxu0 0
    %4318 = vmatprep.subr.bf16.mxu0 0
    %4319 = vmatpush1.bf16.msra.mxu0 %v4117
    %4320 = vmatprep.subr.bf16.mxu0 0
    %4321 = vmatpush2.bf16.msra.mxu0 0
    %4322 = vmatprep.subr.bf16.mxu0 0
    %4323 = vmatpush2.bf16.msra.mxu0 0
    %4324 = vmatprep.subr.bf16.mxu0 0
    %4325 = vmatpush2.bf16.msra.mxu0 0
    %4326 = vmatprep.subr.bf16.mxu0 0
    %4327 = vmatpush2.bf16.msra.mxu0 0
    %4328 = vmatprep.subr.bf16.mxu0 0
    %4329 = vmatpush2.bf16.msra.mxu0 0
    %4330 = vmatprep.subr.bf16.mxu0 0
    %4331 = vmatpush2.bf16.msra.mxu0 0
    %4332 = vmatprep.subr.bf16.mxu0 0
    %4333 = vmatpush2.bf16.msra.mxu0 0
    %4334 = vmatprep.subr.bf16.mxu0 0
    %4335 = vmatpush2.bf16.msra.mxu0 0
    %4336 = vmatprep.mubr.bf16.mxu0 0
    %4337 = vmatmul.mubr.bf16.gmra.mxu0 %v4302
    %v4338 = vpop.f32.mrf.mxu0
    %v4339 = vadd.f32 0.0, %v4338
    %v4340 = vpop.f32.mrf.mxu0
    %v4341 = vpop.f32.mrf.mxu0
    %v4342 = vadd.f32 0.0, %v4341
    %v4343 = vpop.f32.mrf.mxu0
    %4344 = vdwg.mxu0
    %v4345 = vpack.c.bf16 %v4342, %v4339
    %4346 = vmatprep.subr.bf16.mxu0 0
    %4347 = vmatpush1.bf16.xpose.msra.mxu0 0
    %4348 = vmatprep.subr.bf16.mxu0 0
    %4349 = vmatpush1.bf16.xpose.msra.mxu0 0
    %4350 = vmatprep.subr.bf16.mxu0 0
    %4351 = vmatpush1.bf16.xpose.msra.mxu0 0
    %4352 = vmatprep.subr.bf16.mxu0 0
    %4353 = vmatpush1.bf16.xpose.msra.mxu0 0
    %4354 = vmatprep.subr.bf16.mxu0 0
    %4355 = vmatpush1.bf16.xpose.msra.mxu0 0
    %4356 = vmatprep.subr.bf16.mxu0 0
    %4357 = vmatpush1.bf16.xpose.msra.mxu0 0
    %4358 = vmatprep.subr.bf16.mxu0 0
    %4359 = vmatpush1.bf16.xpose.msra.mxu0 0
    %4360 = vmatprep.subr.bf16.mxu0 0
    %4361 = vmatpush1.bf16.xpose.msra.mxu0 %v4120
    %4362 = vmatprep.subr.bf16.mxu0 0
    %4363 = vmatpush2.bf16.xpose.msra.mxu0 0
    %4364 = vmatprep.subr.bf16.mxu0 0
    %4365 = vmatpush2.bf16.xpose.msra.mxu0 0
    %4366 = vmatprep.subr.bf16.mxu0 0
    %4367 = vmatpush2.bf16.xpose.msra.mxu0 0
    %4368 = vmatprep.subr.bf16.mxu0 0
    %4369 = vmatpush2.bf16.xpose.msra.mxu0 0
    %4370 = vmatprep.subr.bf16.mxu0 0
    %4371 = vmatpush2.bf16.xpose.msra.mxu0 0
    %4372 = vmatprep.subr.bf16.mxu0 0
    %4373 = vmatpush2.bf16.xpose.msra.mxu0 0
    %4374 = vmatprep.subr.bf16.mxu0 0
    %4375 = vmatpush2.bf16.xpose.msra.mxu0 0
    %4376 = vmatprep.subr.bf16.mxu0 0
    %4377 = vmatpush2.bf16.xpose.msra.mxu0 0
    %4378 = vmatprep.mubr.bf16.mxu0 0
    %4379 = vmatmul.mubr.bf16.gmra.mxu0 %v4118
    %v4380 = vpop.f32.mrf.mxu0
    %v4381 = vadd.f32 0.0, %v4380
    %v4382 = vpop.f32.mrf.mxu0
    %v4383 = vpop.f32.mrf.mxu0
    %v4384 = vadd.f32 0.0, %v4383
    %v4385 = vpop.f32.mrf.mxu0
    %4386 = vdwg.mxu0
    %v4387 = vmul.f32 %v4381, 0.088388346
    %v4388 = vmul.f32 %v4384, 0.088388346
    %v4389 = vsel %vm1268, %v4387, -inf
    %4390 = vmax.xlane.f32.xlu0 %v4389
    %v4391 = vpop.xlane.xlu0 %4390
    %v4392 = vsel %vm1268, %v4388, -inf
    %4393 = vmax.xlane.f32.xlu0 %v4392
    %v4394 = vpop.xlane.xlu0 %4393
    %v4395 = vsub.f32 %v4387, %v4391
    %v4396 = vsub.f32 %v4388, %v4394
    %v4397 = vmul.f32 %v4395, 1.442695
    %v4398 = vpow.pop %v4397
    %v4399 = vmul.f32 %v4396, 1.442695
    %v4400 = vpow.pop %v4399
    %v4401 = vsel %vm1268, %v4398, 0.0
    %4402 = vadd.xlane.f32.xlu0 %v4401
    %v4403 = vpop.xlane.xlu0 %4402
    %v4404 = vsel %vm1268, %v4400, 0.0
    %4405 = vadd.xlane.f32.xlu0 %v4404
    %v4406 = vpop.xlane.xlu0 %4405
    %v4407 = vrcp.pop %v4403
    %v4408 = vmul.f32 %v4398, %v4407
    %v4409 = vrcp.pop %v4406
    %v4410 = vmul.f32 %v4400, %v4409
    %v4411 = vpack.c.bf16 %v4410, %v4408
    %v4413 = vsel %vm1268, %v4411, 0
    %4415 = vmatprep.subr.bf16.mxu0 0
    %4416 = vmatpush1.bf16.msra.mxu0 0
    %4417 = vmatprep.subr.bf16.mxu0 0
    %4418 = vmatpush1.bf16.msra.mxu0 0
    %4419 = vmatprep.subr.bf16.mxu0 0
    %4420 = vmatpush1.bf16.msra.mxu0 0
    %4421 = vmatprep.subr.bf16.mxu0 0
    %4422 = vmatpush1.bf16.msra.mxu0 0
    %4423 = vmatprep.subr.bf16.mxu0 0
    %4424 = vmatpush1.bf16.msra.mxu0 0
    %4425 = vmatprep.subr.bf16.mxu0 0
    %4426 = vmatpush1.bf16.msra.mxu0 0
    %4427 = vmatprep.subr.bf16.mxu0 0
    %4428 = vmatpush1.bf16.msra.mxu0 0
    %4429 = vmatprep.subr.bf16.mxu0 0
    %4430 = vmatpush1.bf16.msra.mxu0 %v4122
    %4431 = vmatprep.subr.bf16.mxu0 0
    %4432 = vmatpush2.bf16.msra.mxu0 0
    %4433 = vmatprep.subr.bf16.mxu0 0
    %4434 = vmatpush2.bf16.msra.mxu0 0
    %4435 = vmatprep.subr.bf16.mxu0 0
    %4436 = vmatpush2.bf16.msra.mxu0 0
    %4437 = vmatprep.subr.bf16.mxu0 0
    %4438 = vmatpush2.bf16.msra.mxu0 0
    %4439 = vmatprep.subr.bf16.mxu0 0
    %4440 = vmatpush2.bf16.msra.mxu0 0
    %4441 = vmatprep.subr.bf16.mxu0 0
    %4442 = vmatpush2.bf16.msra.mxu0 0
    %4443 = vmatprep.subr.bf16.mxu0 0
    %4444 = vmatpush2.bf16.msra.mxu0 0
    %4445 = vmatprep.subr.bf16.mxu0 0
    %4446 = vmatpush2.bf16.msra.mxu0 0
    %4447 = vmatprep.mubr.bf16.mxu0 0
    %4448 = vmatmul.mubr.bf16.gmra.mxu0 %v4413
    %v4449 = vpop.f32.mrf.mxu0
    %v4450 = vadd.f32 0.0, %v4449
    %v4451 = vpop.f32.mrf.mxu0
    %v4452 = vpop.f32.mrf.mxu0
    %v4453 = vadd.f32 0.0, %v4452
    %v4454 = vpop.f32.mrf.mxu0
    %4455 = vdwg.mxu0
    %v4456 = vpack.c.bf16 %v4453, %v4450
    %4457 = vmatprep.subr.bf16.mxu0 0
    %4458 = vmatpush1.bf16.xpose.msra.mxu0 0
    %4459 = vmatprep.subr.bf16.mxu0 0
    %4460 = vmatpush1.bf16.xpose.msra.mxu0 0
    %4461 = vmatprep.subr.bf16.mxu0 0
    %4462 = vmatpush1.bf16.xpose.msra.mxu0 0
    %4463 = vmatprep.subr.bf16.mxu0 0
    %4464 = vmatpush1.bf16.xpose.msra.mxu0 0
    %4465 = vmatprep.subr.bf16.mxu0 0
    %4466 = vmatpush1.bf16.xpose.msra.mxu0 0
    %4467 = vmatprep.subr.bf16.mxu0 0
    %4468 = vmatpush1.bf16.xpose.msra.mxu0 0
    %4469 = vmatprep.subr.bf16.mxu0 0
    %4470 = vmatpush1.bf16.xpose.msra.mxu0 0
    %4471 = vmatprep.subr.bf16.mxu0 0
    %4472 = vmatpush1.bf16.xpose.msra.mxu0 %v4121
    %4473 = vmatprep.subr.bf16.mxu0 0
    %4474 = vmatpush2.bf16.xpose.msra.mxu0 0
    %4475 = vmatprep.subr.bf16.mxu0 0
    %4476 = vmatpush2.bf16.xpose.msra.mxu0 0
    %4477 = vmatprep.subr.bf16.mxu0 0
    %4478 = vmatpush2.bf16.xpose.msra.mxu0 0
    %4479 = vmatprep.subr.bf16.mxu0 0
    %4480 = vmatpush2.bf16.xpose.msra.mxu0 0
    %4481 = vmatprep.subr.bf16.mxu0 0
    %4482 = vmatpush2.bf16.xpose.msra.mxu0 0
    %4483 = vmatprep.subr.bf16.mxu0 0
    %4484 = vmatpush2.bf16.xpose.msra.mxu0 0
    %4485 = vmatprep.subr.bf16.mxu0 0
    %4486 = vmatpush2.bf16.xpose.msra.mxu0 0
    %4487 = vmatprep.subr.bf16.mxu0 0
    %4488 = vmatpush2.bf16.xpose.msra.mxu0 0
    %4489 = vmatprep.mubr.bf16.mxu0 0
    %4490 = vmatmul.mubr.bf16.gmra.mxu0 %v4119
    %v4491 = vpop.f32.mrf.mxu0
    %v4492 = vadd.f32 0.0, %v4491
    %v4493 = vpop.f32.mrf.mxu0
    %v4494 = vpop.f32.mrf.mxu0
    %v4495 = vadd.f32 0.0, %v4494
    %v4496 = vpop.f32.mrf.mxu0
    %4497 = vdwg.mxu0
    %v4498 = vmul.f32 %v4492, 0.088388346
    %v4499 = vmul.f32 %v4495, 0.088388346
    %v4500 = vsel %vm1268, %v4498, -inf
    %4501 = vmax.xlane.f32.xlu0 %v4500
    %v4502 = vpop.xlane.xlu0 %4501
    %v4503 = vsel %vm1268, %v4499, -inf
    %4504 = vmax.xlane.f32.xlu0 %v4503
    %v4505 = vpop.xlane.xlu0 %4504
    %v4506 = vsub.f32 %v4498, %v4502
    %v4507 = vsub.f32 %v4499, %v4505
    %v4508 = vmul.f32 %v4506, 1.442695
    %v4509 = vpow.pop %v4508
    %v4510 = vmul.f32 %v4507, 1.442695
    %v4511 = vpow.pop %v4510
    %v4512 = vsel %vm1268, %v4509, 0.0
    %4513 = vadd.xlane.f32.xlu0 %v4512
    %v4514 = vpop.xlane.xlu0 %4513
    %v4515 = vsel %vm1268, %v4511, 0.0
    %4516 = vadd.xlane.f32.xlu0 %v4515
    %v4517 = vpop.xlane.xlu0 %4516
    %v4518 = vrcp.pop %v4514
    %v4519 = vmul.f32 %v4509, %v4518
    %v4520 = vrcp.pop %v4517
    %v4521 = vmul.f32 %v4511, %v4520
    %v4522 = vpack.c.bf16 %v4521, %v4519
    %v4524 = vsel %vm1268, %v4522, 0
    %4526 = vmatprep.subr.bf16.mxu0 0
    %4527 = vmatpush1.bf16.msra.mxu0 0
    %4528 = vmatprep.subr.bf16.mxu0 0
    %4529 = vmatpush1.bf16.msra.mxu0 0
    %4530 = vmatprep.subr.bf16.mxu0 0
    %4531 = vmatpush1.bf16.msra.mxu0 0
    %4532 = vmatprep.subr.bf16.mxu0 0
    %4533 = vmatpush1.bf16.msra.mxu0 0
    %4534 = vmatprep.subr.bf16.mxu0 0
    %4535 = vmatpush1.bf16.msra.mxu0 0
    %4536 = vmatprep.subr.bf16.mxu0 0
    %4537 = vmatpush1.bf16.msra.mxu0 0
    %4538 = vmatprep.subr.bf16.mxu0 0
    %4539 = vmatpush1.bf16.msra.mxu0 0
    %4540 = vmatprep.subr.bf16.mxu0 0
    %4541 = vmatpush1.bf16.msra.mxu0 %v4123
    %4542 = vmatprep.subr.bf16.mxu0 0
    %4543 = vmatpush2.bf16.msra.mxu0 0
    %4544 = vmatprep.subr.bf16.mxu0 0
    %4545 = vmatpush2.bf16.msra.mxu0 0
    %4546 = vmatprep.subr.bf16.mxu0 0
    %4547 = vmatpush2.bf16.msra.mxu0 0
    %4548 = vmatprep.subr.bf16.mxu0 0
    %4549 = vmatpush2.bf16.msra.mxu0 0
    %4550 = vmatprep.subr.bf16.mxu0 0
    %4551 = vmatpush2.bf16.msra.mxu0 0
    %4552 = vmatprep.subr.bf16.mxu0 0
    %4553 = vmatpush2.bf16.msra.mxu0 0
    %4554 = vmatprep.subr.bf16.mxu0 0
    %4555 = vmatpush2.bf16.msra.mxu0 0
    %4556 = vmatprep.subr.bf16.mxu0 0
    %4557 = vmatpush2.bf16.msra.mxu0 0
    %4558 = vmatprep.mubr.bf16.mxu0 0
    %4559 = vmatmul.mubr.bf16.gmra.mxu0 %v4524
    %v4560 = vpop.f32.mrf.mxu0
    %v4561 = vadd.f32 0.0, %v4560
    %v4562 = vpop.f32.mrf.mxu0
    %v4563 = vpop.f32.mrf.mxu0
    %v4564 = vadd.f32 0.0, %v4563
    %v4565 = vpop.f32.mrf.mxu0
    %4566 = vdwg.mxu0
    %v4567 = vpack.c.bf16 %v4564, %v4561
    %s4568 = scalar_lea.vmem [#allocation2], 256
    %v4569 = vld [vmem:[%s4568] sm:$0xff]
    %v4570 = vld [vmem:[%s4568 + $0x8] sm:$0xff]
    %v4571 = vld [vmem:[%s4568 + $0x10] sm:$0xff]
    %v4572 = vld [vmem:[%s4568 + $0x18] sm:$0xff]
    %v4573 = vld [vmem:[%s4568 + $0x20] sm:$0xff]
    %v4574 = vld [vmem:[%s4568 + $0x28] sm:$0xff]
    %v4575 = vld [vmem:[%s4568 + $0x30] sm:$0xff]
    %v4576 = vld [vmem:[%s4568 + $0x38] sm:$0xff]
    %v4577 = vld [vmem:[%s4568 + $0x40] sm:$0xff]
    %v4578 = vld [vmem:[%s4568 + $0x48] sm:$0xff]
    %v4579 = vld [vmem:[%s4568 + $0x50] sm:$0xff]
    %v4580 = vld [vmem:[%s4568 + $0x58] sm:$0xff]
    %v4581 = vld [vmem:[%s4568 + $0x60] sm:$0xff]
    %v4582 = vld [vmem:[%s4568 + $0x68] sm:$0xff]
    %v4583 = vld [vmem:[%s4568 + $0x70] sm:$0xff]
    %v4584 = vld [vmem:[%s4568 + $0x78] sm:$0xff]
    %v4585 = vld [vmem:[%s4568 + $0x80] sm:$0xff]
    %v4586 = vld [vmem:[%s4568 + $0x88] sm:$0xff]
    %v4587 = vld [vmem:[%s4568 + $0x90] sm:$0xff]
    %v4588 = vld [vmem:[%s4568 + $0x98] sm:$0xff]
    %v4589 = vld [vmem:[%s4568 + $0xa0] sm:$0xff]
    %v4590 = vld [vmem:[%s4568 + $0xa8] sm:$0xff]
    %v4591 = vld [vmem:[%s4568 + $0xb0] sm:$0xff]
    %v4592 = vld [vmem:[%s4568 + $0xb8] sm:$0xff]
    %v4593 = vld [vmem:[%s4568 + $0xc0] sm:$0xff]
    %v4594 = vld [vmem:[%s4568 + $0xc8] sm:$0xff]
    %v4595 = vld [vmem:[%s4568 + $0xd0] sm:$0xff]
    %v4596 = vld [vmem:[%s4568 + $0xd8] sm:$0xff]
    %v4597 = vld [vmem:[%s4568 + $0xe0] sm:$0xff]
    %v4598 = vld [vmem:[%s4568 + $0xe8] sm:$0xff]
    %v4599 = vld [vmem:[%s4568 + $0xf0] sm:$0xff]
    %v4600 = vld [vmem:[%s4568 + $0xf8] sm:$0xff]
    %v4633 = vunpack.c.l.b16 %v4569
    %v4634 = vunpack.c.h.b16 %v4569
    %v4635 = vunpack.c.l.b16 %v4570
    %v4636 = vunpack.c.h.b16 %v4570
    %v4637 = vunpack.c.l.b16 %v4571
    %v4638 = vunpack.c.h.b16 %v4571
    %v4639 = vunpack.c.l.b16 %v4572
    %v4640 = vunpack.c.h.b16 %v4572
    %v4641 = vunpack.c.l.b16 %v4573
    %v4642 = vunpack.c.h.b16 %v4573
    %v4643 = vunpack.c.l.b16 %v4574
    %v4644 = vunpack.c.h.b16 %v4574
    %v4645 = vunpack.c.l.b16 %v4575
    %v4646 = vunpack.c.h.b16 %v4575
    %v4647 = vunpack.c.l.b16 %v4576
    %v4648 = vunpack.c.h.b16 %v4576
    %v4649 = vunpack.c.l.b16 %v4577
    %v4650 = vunpack.c.h.b16 %v4577
    %v4651 = vunpack.c.l.b16 %v4578
    %v4652 = vunpack.c.h.b16 %v4578
    %v4653 = vunpack.c.l.b16 %v4579
    %v4654 = vunpack.c.h.b16 %v4579
    %v4655 = vunpack.c.l.b16 %v4580
    %v4656 = vunpack.c.h.b16 %v4580
    %v4657 = vunpack.c.l.b16 %v4581
    %v4658 = vunpack.c.h.b16 %v4581
    %v4659 = vunpack.c.l.b16 %v4582
    %v4660 = vunpack.c.h.b16 %v4582
    %v4661 = vunpack.c.l.b16 %v4583
    %v4662 = vunpack.c.h.b16 %v4583
    %v4663 = vunpack.c.l.b16 %v4584
    %v4664 = vunpack.c.h.b16 %v4584
    %v4665 = vunpack.c.l.b16 %v4585
    %v4666 = vunpack.c.h.b16 %v4585
    %v4667 = vunpack.c.l.b16 %v4586
    %v4668 = vunpack.c.h.b16 %v4586
    %v4669 = vunpack.c.l.b16 %v4587
    %v4670 = vunpack.c.h.b16 %v4587
    %v4671 = vunpack.c.l.b16 %v4588
    %v4672 = vunpack.c.h.b16 %v4588
    %v4673 = vunpack.c.l.b16 %v4589
    %v4674 = vunpack.c.h.b16 %v4589
    %v4675 = vunpack.c.l.b16 %v4590
    %v4676 = vunpack.c.h.b16 %v4590
    %v4677 = vunpack.c.l.b16 %v4591
    %v4678 = vunpack.c.h.b16 %v4591
    %v4679 = vunpack.c.l.b16 %v4592
    %v4680 = vunpack.c.h.b16 %v4592
    %v4681 = vunpack.c.l.b16 %v4593
    %v4682 = vunpack.c.h.b16 %v4593
    %v4683 = vunpack.c.l.b16 %v4594
    %v4684 = vunpack.c.h.b16 %v4594
    %v4685 = vunpack.c.l.b16 %v4595
    %v4686 = vunpack.c.h.b16 %v4595
    %v4687 = vunpack.c.l.b16 %v4596
    %v4688 = vunpack.c.h.b16 %v4596
    %v4689 = vunpack.c.l.b16 %v4597
    %v4690 = vunpack.c.h.b16 %v4597
    %v4691 = vunpack.c.l.b16 %v4598
    %v4692 = vunpack.c.h.b16 %v4598
    %v4693 = vunpack.c.l.b16 %v4599
    %v4694 = vunpack.c.h.b16 %v4599
    %v4695 = vunpack.c.l.b16 %v4600
    %v4696 = vunpack.c.h.b16 %v4600
    %v4697 = vpack.c.b16 %v4635, %v4633
    %v4698 = vpack.c.b16 %v4636, %v4634
    %v4699 = vpack.c.b16 %v4639, %v4637
    %v4700 = vpack.c.b16 %v4640, %v4638
    %v4701 = vpack.c.b16 %v4643, %v4641
    %v4702 = vpack.c.b16 %v4644, %v4642
    %v4703 = vpack.c.b16 %v4647, %v4645
    %v4704 = vpack.c.b16 %v4648, %v4646
    %v4705 = vpack.c.b16 %v4651, %v4649
    %v4706 = vpack.c.b16 %v4652, %v4650
    %v4707 = vpack.c.b16 %v4655, %v4653
    %v4708 = vpack.c.b16 %v4656, %v4654
    %v4709 = vpack.c.b16 %v4659, %v4657
    %v4710 = vpack.c.b16 %v4660, %v4658
    %v4711 = vpack.c.b16 %v4663, %v4661
    %v4712 = vpack.c.b16 %v4664, %v4662
    %v4713 = vpack.c.b16 %v4667, %v4665
    %v4714 = vpack.c.b16 %v4668, %v4666
    %v4715 = vpack.c.b16 %v4671, %v4669
    %v4716 = vpack.c.b16 %v4672, %v4670
    %v4717 = vpack.c.b16 %v4675, %v4673
    %v4718 = vpack.c.b16 %v4676, %v4674
    %v4719 = vpack.c.b16 %v4679, %v4677
    %v4720 = vpack.c.b16 %v4680, %v4678
    %v4721 = vpack.c.b16 %v4683, %v4681
    %v4722 = vpack.c.b16 %v4684, %v4682
    %v4723 = vpack.c.b16 %v4687, %v4685
    %v4724 = vpack.c.b16 %v4688, %v4686
    %v4725 = vpack.c.b16 %v4691, %v4689
    %v4726 = vpack.c.b16 %v4692, %v4690
    %v4727 = vpack.c.b16 %v4695, %v4693
    %v4728 = vpack.c.b16 %v4696, %v4694
    %4761 = vmatprep.subr.bf16.mxu0 %v4712
    %4762 = vmatpush1.bf16.msra.mxu0 %v4711
    %4763 = vmatprep.subr.bf16.mxu0 %v4710
    %4764 = vmatpush1.bf16.msra.mxu0 %v4709
    %4765 = vmatprep.subr.bf16.mxu0 %v4708
    %4766 = vmatpush1.bf16.msra.mxu0 %v4707
    %4767 = vmatprep.subr.bf16.mxu0 %v4706
    %4768 = vmatpush1.bf16.msra.mxu0 %v4705
    %4769 = vmatprep.subr.bf16.mxu0 %v4704
    %4770 = vmatpush1.bf16.msra.mxu0 %v4703
    %4771 = vmatprep.subr.bf16.mxu0 %v4702
    %4772 = vmatpush1.bf16.msra.mxu0 %v4701
    %4773 = vmatprep.subr.bf16.mxu0 %v4700
    %4774 = vmatpush1.bf16.msra.mxu0 %v4699
    %4775 = vmatprep.subr.bf16.mxu0 %v4698
    %4776 = vmatpush1.bf16.msra.mxu0 %v4697
    %4777 = vmatprep.subr.bf16.mxu0 %v4728
    %4778 = vmatpush2.bf16.msra.mxu0 %v4727
    %4779 = vmatprep.subr.bf16.mxu0 %v4726
    %4780 = vmatpush2.bf16.msra.mxu0 %v4725
    %4781 = vmatprep.subr.bf16.mxu0 %v4724
    %4782 = vmatpush2.bf16.msra.mxu0 %v4723
    %4783 = vmatprep.subr.bf16.mxu0 %v4722
    %4784 = vmatpush2.bf16.msra.mxu0 %v4721
    %4785 = vmatprep.subr.bf16.mxu0 %v4720
    %4786 = vmatpush2.bf16.msra.mxu0 %v4719
    %4787 = vmatprep.subr.bf16.mxu0 %v4718
    %4788 = vmatpush2.bf16.msra.mxu0 %v4717
    %4789 = vmatprep.subr.bf16.mxu0 %v4716
    %4790 = vmatpush2.bf16.msra.mxu0 %v4715
    %4791 = vmatprep.subr.bf16.mxu0 %v4714
    %4792 = vmatpush2.bf16.msra.mxu0 %v4713
    %4793 = vmatprep.mubr.bf16.mxu0 %v4345
    %4794 = vmatmul.mubr.bf16.gmra.mxu0 %v4234
    %v4795 = vpop.f32.mrf.mxu0
    %v4796 = vadd.f32 0.0, %v4795
    %v4797 = vpop.f32.mrf.mxu0
    %v4798 = vadd.f32 0.0, %v4797
    %v4799 = vpop.f32.mrf.mxu0
    %v4800 = vadd.f32 0.0, %v4799
    %v4801 = vpop.f32.mrf.mxu0
    %v4802 = vadd.f32 0.0, %v4801
    %4803 = vmatprep.mubr.bf16.mxu0 %v4567
    %4804 = vmatmul.mubr.bf16.gmra.mxu0 %v4456
    %v4805 = vpop.f32.mrf.mxu0
    %v4806 = vadd.f32 0.0, %v4805
    %v4807 = vpop.f32.mrf.mxu0
    %v4808 = vadd.f32 0.0, %v4807
    %v4809 = vpop.f32.mrf.mxu0
    %v4810 = vadd.f32 0.0, %v4809
    %v4811 = vpop.f32.mrf.mxu0
    %v4812 = vadd.f32 0.0, %v4811
    %4813 = vdwg.mxu0
    %v4814 = vadd.f32 %v3225, %v4796
    %v4815 = vadd.f32 %v3226, %v4798
    %v4816 = vadd.f32 %v3227, %v4800
    %v4817 = vadd.f32 %v3228, %v4802
    %v4818 = vadd.f32 %v3229, %v4806
    %v4819 = vadd.f32 %v3230, %v4808
    %v4820 = vadd.f32 %v3231, %v4810
    %v4821 = vadd.f32 %v3232, %v4812
    %s4822 = scalar_lea.vmem %s8, 2
    %v4823 = vld [vmem:[%s4822] sm:$0x3]
    %v4825 = vlaneseq
    %v4826 = vshrl.u32 %v4825, 7
    %v4827 = vsub.s32 0, %v4826
    %v4828 = vrot.slane %v4823, %v4827
    %v4829 = vlaneseq
    %v4830 = vshrl.u32 %v4829, 7
    %v4831 = vsub.s32 1, %v4830
    %v4832 = vrot.slane %v4823, %v4831
    %v4835 = vadd.f32 %v4814, %v4828
    %v4836 = vadd.f32 %v4815, %v4832
    %v4837 = vadd.f32 %v4816, %v4828
    %v4838 = vadd.f32 %v4817, %v4832
    %v4839 = vadd.f32 %v4818, %v4828
    %v4840 = vadd.f32 %v4819, %v4832
    %v4841 = vadd.f32 %v4820, %v4828
    %v4842 = vadd.f32 %v4821, %v4832
    %s4843 = scalar_lea.vmem %s9, 2
    %v4844 = vld [vmem:[%s4843] sm:$0x3]
    %s4845 = scalar_lea.vmem %s10, 2
    %v4846 = vld [vmem:[%s4845] sm:$0x3]
    %v4847 = vadd.f32 %v4835, %v4836
    %4848 = vadd.xlane.f32.xlu0 %v4847
    %v4849 = vpop.xlane.xlu0 %4848
    %v4850 = vadd.f32 %v4837, %v4838
    %4851 = vadd.xlane.f32.xlu0 %v4850
    %v4852 = vpop.xlane.xlu0 %4851
    %v4853 = vadd.f32 %v4839, %v4840
    %4854 = vadd.xlane.f32.xlu0 %v4853
    %v4855 = vpop.xlane.xlu0 %4854
    %v4856 = vadd.f32 %v4841, %v4842
    %4857 = vadd.xlane.f32.xlu0 %v4856
    %v4858 = vpop.xlane.xlu0 %4857
    %v4859 = vmul.f32 %v4849, %v351
    %v4860 = vmul.f32 %v4852, %v351
    %v4861 = vmul.f32 %v4855, %v351
    %v4862 = vmul.f32 %v4858, %v351
    %v4863 = vsub.f32 %v4835, %v4859
    %v4864 = vsub.f32 %v4836, %v4859
    %v4865 = vsub.f32 %v4837, %v4860
    %v4866 = vsub.f32 %v4838, %v4860
    %v4867 = vsub.f32 %v4839, %v4861
    %v4868 = vsub.f32 %v4840, %v4861
    %v4869 = vsub.f32 %v4841, %v4862
    %v4870 = vsub.f32 %v4842, %v4862
    %v4871 = vmul.f32 %v4863, %v4863
    %v4872 = vmul.f32 %v4864, %v4864
    %v4873 = vmul.f32 %v4865, %v4865
    %v4874 = vmul.f32 %v4866, %v4866
    %v4875 = vmul.f32 %v4867, %v4867
    %v4876 = vmul.f32 %v4868, %v4868
    %v4877 = vmul.f32 %v4869, %v4869
    %v4878 = vmul.f32 %v4870, %v4870
    %v4879 = vadd.f32 %v4871, %v4872
    %4880 = vadd.xlane.f32.xlu0 %v4879
    %v4881 = vpop.xlane.xlu0 %4880
    %v4882 = vadd.f32 %v4873, %v4874
    %4883 = vadd.xlane.f32.xlu0 %v4882
    %v4884 = vpop.xlane.xlu0 %4883
    %v4885 = vadd.f32 %v4875, %v4876
    %4886 = vadd.xlane.f32.xlu0 %v4885
    %v4887 = vpop.xlane.xlu0 %4886
    %v4888 = vadd.f32 %v4877, %v4878
    %4889 = vadd.xlane.f32.xlu0 %v4888
    %v4890 = vpop.xlane.xlu0 %4889
    %v4891 = vmul.f32 %v4881, %v351
    %v4892 = vmul.f32 %v4884, %v351
    %v4893 = vmul.f32 %v4887, %v351
    %v4894 = vmul.f32 %v4890, %v351
    %v4895 = vadd.f32 %v4891, 1e-06
    %v4896 = vadd.f32 %v4892, 1e-06
    %v4897 = vadd.f32 %v4893, 1e-06
    %v4898 = vadd.f32 %v4894, 1e-06
    %v4899 = vrsqrt.pop %v4895
    %v4900 = vrsqrt.pop %v4896
    %v4901 = vrsqrt.pop %v4897
    %v4902 = vrsqrt.pop %v4898
    %v4903 = vmul.f32 %v4863, %v4899
    %v4904 = vmul.f32 %v4864, %v4899
    %v4905 = vmul.f32 %v4865, %v4900
    %v4906 = vmul.f32 %v4866, %v4900
    %v4907 = vmul.f32 %v4867, %v4901
    %v4908 = vmul.f32 %v4868, %v4901
    %v4909 = vmul.f32 %v4869, %v4902
    %v4910 = vmul.f32 %v4870, %v4902
    %v4912 = vlaneseq
    %v4913 = vshrl.u32 %v4912, 7
    %v4914 = vsub.s32 0, %v4913
    %v4915 = vrot.slane %v4844, %v4914
    %v4916 = vlaneseq
    %v4917 = vshrl.u32 %v4916, 7
    %v4918 = vsub.s32 1, %v4917
    %v4919 = vrot.slane %v4844, %v4918
    %v4922 = vmul.f32 %v4903, %v4915
    %v4923 = vmul.f32 %v4904, %v4919
    %v4924 = vmul.f32 %v4905, %v4915
    %v4925 = vmul.f32 %v4906, %v4919
    %v4926 = vmul.f32 %v4907, %v4915
    %v4927 = vmul.f32 %v4908, %v4919
    %v4928 = vmul.f32 %v4909, %v4915
    %v4929 = vmul.f32 %v4910, %v4919
    %v4931 = vlaneseq
    %v4932 = vshrl.u32 %v4931, 7
    %v4933 = vsub.s32 0, %v4932
    %v4934 = vrot.slane %v4846, %v4933
    %v4935 = vlaneseq
    %v4936 = vshrl.u32 %v4935, 7
    %v4937 = vsub.s32 1, %v4936
    %v4938 = vrot.slane %v4846, %v4937
    %v4941 = vadd.f32 %v4922, %v4934
    %v4942 = vadd.f32 %v4923, %v4938
    %v4943 = vadd.f32 %v4924, %v4934
    %v4944 = vadd.f32 %v4925, %v4938
    %v4945 = vadd.f32 %v4926, %v4934
    %v4946 = vadd.f32 %v4927, %v4938
    %v4947 = vadd.f32 %v4928, %v4934
    %v4948 = vadd.f32 %v4929, %v4938
    %s4949 = scalar_lea.vmem %s11, 512
    %v4950 = vld [vmem:[%s4949] sm:$0xff]
    %v4951 = vld [vmem:[%s4949 + $0x8] sm:$0xff]
    %v4952 = vld [vmem:[%s4949 + $0x10] sm:$0xff]
    %v4953 = vld [vmem:[%s4949 + $0x18] sm:$0xff]
    %v4954 = vld [vmem:[%s4949 + $0x20] sm:$0xff]
    %v4955 = vld [vmem:[%s4949 + $0x28] sm:$0xff]
    %v4956 = vld [vmem:[%s4949 + $0x30] sm:$0xff]
    %v4957 = vld [vmem:[%s4949 + $0x38] sm:$0xff]
    %v4958 = vld [vmem:[%s4949 + $0x40] sm:$0xff]
    %v4959 = vld [vmem:[%s4949 + $0x48] sm:$0xff]
    %v4960 = vld [vmem:[%s4949 + $0x50] sm:$0xff]
    %v4961 = vld [vmem:[%s4949 + $0x58] sm:$0xff]
    %v4962 = vld [vmem:[%s4949 + $0x60] sm:$0xff]
    %v4963 = vld [vmem:[%s4949 + $0x68] sm:$0xff]
    %v4964 = vld [vmem:[%s4949 + $0x70] sm:$0xff]
    %v4965 = vld [vmem:[%s4949 + $0x78] sm:$0xff]
    %v4966 = vld [vmem:[%s4949 + $0x80] sm:$0xff]
    %v4967 = vld [vmem:[%s4949 + $0x88] sm:$0xff]
    %v4968 = vld [vmem:[%s4949 + $0x90] sm:$0xff]
    %v4969 = vld [vmem:[%s4949 + $0x98] sm:$0xff]
    %v4970 = vld [vmem:[%s4949 + $0xa0] sm:$0xff]
    %v4971 = vld [vmem:[%s4949 + $0xa8] sm:$0xff]
    %v4972 = vld [vmem:[%s4949 + $0xb0] sm:$0xff]
    %v4973 = vld [vmem:[%s4949 + $0xb8] sm:$0xff]
    %v4974 = vld [vmem:[%s4949 + $0xc0] sm:$0xff]
    %v4975 = vld [vmem:[%s4949 + $0xc8] sm:$0xff]
    %v4976 = vld [vmem:[%s4949 + $0xd0] sm:$0xff]
    %v4977 = vld [vmem:[%s4949 + $0xd8] sm:$0xff]
    %v4978 = vld [vmem:[%s4949 + $0xe0] sm:$0xff]
    %v4979 = vld [vmem:[%s4949 + $0xe8] sm:$0xff]
    %v4980 = vld [vmem:[%s4949 + $0xf0] sm:$0xff]
    %v4981 = vld [vmem:[%s4949 + $0xf8] sm:$0xff]
    %v4982 = vld [vmem:[%s4949 + $0x100] sm:$0xff]
    %v4983 = vld [vmem:[%s4949 + $0x108] sm:$0xff]
    %v4984 = vld [vmem:[%s4949 + $0x110] sm:$0xff]
    %v4985 = vld [vmem:[%s4949 + $0x118] sm:$0xff]
    %v4986 = vld [vmem:[%s4949 + $0x120] sm:$0xff]
    %v4987 = vld [vmem:[%s4949 + $0x128] sm:$0xff]
    %v4988 = vld [vmem:[%s4949 + $0x130] sm:$0xff]
    %v4989 = vld [vmem:[%s4949 + $0x138] sm:$0xff]
    %v4990 = vld [vmem:[%s4949 + $0x140] sm:$0xff]
    %v4991 = vld [vmem:[%s4949 + $0x148] sm:$0xff]
    %v4992 = vld [vmem:[%s4949 + $0x150] sm:$0xff]
    %v4993 = vld [vmem:[%s4949 + $0x158] sm:$0xff]
    %v4994 = vld [vmem:[%s4949 + $0x160] sm:$0xff]
    %v4995 = vld [vmem:[%s4949 + $0x168] sm:$0xff]
    %v4996 = vld [vmem:[%s4949 + $0x170] sm:$0xff]
    %v4997 = vld [vmem:[%s4949 + $0x178] sm:$0xff]
    %v4998 = vld [vmem:[%s4949 + $0x180] sm:$0xff]
    %v4999 = vld [vmem:[%s4949 + $0x188] sm:$0xff]
    %v5000 = vld [vmem:[%s4949 + $0x190] sm:$0xff]
    %v5001 = vld [vmem:[%s4949 + $0x198] sm:$0xff]
    %v5002 = vld [vmem:[%s4949 + $0x1a0] sm:$0xff]
    %v5003 = vld [vmem:[%s4949 + $0x1a8] sm:$0xff]
    %v5004 = vld [vmem:[%s4949 + $0x1b0] sm:$0xff]
    %v5005 = vld [vmem:[%s4949 + $0x1b8] sm:$0xff]
    %v5006 = vld [vmem:[%s4949 + $0x1c0] sm:$0xff]
    %v5007 = vld [vmem:[%s4949 + $0x1c8] sm:$0xff]
    %v5008 = vld [vmem:[%s4949 + $0x1d0] sm:$0xff]
    %v5009 = vld [vmem:[%s4949 + $0x1d8] sm:$0xff]
    %v5010 = vld [vmem:[%s4949 + $0x1e0] sm:$0xff]
    %v5011 = vld [vmem:[%s4949 + $0x1e8] sm:$0xff]
    %v5012 = vld [vmem:[%s4949 + $0x1f0] sm:$0xff]
    %v5013 = vld [vmem:[%s4949 + $0x1f8] sm:$0xff]
    %v5014 = vpack.c.bf16 %v4943, %v4941
    %v5015 = vpack.c.bf16 %v4944, %v4942
    %v5016 = vpack.c.bf16 %v4947, %v4945
    %v5017 = vpack.c.bf16 %v4948, %v4946
    %s5018 = scalar_lea.vmem %s12, 4
    %v5019 = vld [vmem:[%s5018] sm:$0xf]
    %v5021 = vlaneseq
    %v5022 = vshrl.u32 %v5021, 7
    %v5023 = vsub.s32 0, %v5022
    %v5024 = vrot.slane %v5019, %v5023
    %v5025 = vlaneseq
    %v5026 = vshrl.u32 %v5025, 7
    %v5027 = vsub.s32 1, %v5026
    %v5028 = vrot.slane %v5019, %v5027
    %v5029 = vlaneseq
    %v5030 = vshrl.u32 %v5029, 7
    %v5031 = vsub.s32 2, %v5030
    %v5032 = vrot.slane %v5019, %v5031
    %v5033 = vlaneseq
    %v5034 = vshrl.u32 %v5033, 7
    %v5035 = vsub.s32 3, %v5034
    %v5036 = vrot.slane %v5019, %v5035
    %v5105 = vunpack.c.l.b16 %v4950
    %v5106 = vunpack.c.h.b16 %v4950
    %v5107 = vunpack.c.l.b16 %v4951
    %v5108 = vunpack.c.h.b16 %v4951
    %v5109 = vunpack.c.l.b16 %v4952
    %v5110 = vunpack.c.h.b16 %v4952
    %v5111 = vunpack.c.l.b16 %v4953
    %v5112 = vunpack.c.h.b16 %v4953
    %v5113 = vunpack.c.l.b16 %v4954
    %v5114 = vunpack.c.h.b16 %v4954
    %v5115 = vunpack.c.l.b16 %v4955
    %v5116 = vunpack.c.h.b16 %v4955
    %v5117 = vunpack.c.l.b16 %v4956
    %v5118 = vunpack.c.h.b16 %v4956
    %v5119 = vunpack.c.l.b16 %v4957
    %v5120 = vunpack.c.h.b16 %v4957
    %v5121 = vunpack.c.l.b16 %v4958
    %v5122 = vunpack.c.h.b16 %v4958
    %v5123 = vunpack.c.l.b16 %v4959
    %v5124 = vunpack.c.h.b16 %v4959
    %v5125 = vunpack.c.l.b16 %v4960
    %v5126 = vunpack.c.h.b16 %v4960
    %v5127 = vunpack.c.l.b16 %v4961
    %v5128 = vunpack.c.h.b16 %v4961
    %v5129 = vunpack.c.l.b16 %v4962
    %v5130 = vunpack.c.h.b16 %v4962
    %v5131 = vunpack.c.l.b16 %v4963
    %v5132 = vunpack.c.h.b16 %v4963
    %v5133 = vunpack.c.l.b16 %v4964
    %v5134 = vunpack.c.h.b16 %v4964
    %v5135 = vunpack.c.l.b16 %v4965
    %v5136 = vunpack.c.h.b16 %v4965
    %v5137 = vunpack.c.l.b16 %v4966
    %v5138 = vunpack.c.h.b16 %v4966
    %v5139 = vunpack.c.l.b16 %v4967
    %v5140 = vunpack.c.h.b16 %v4967
    %v5141 = vunpack.c.l.b16 %v4968
    %v5142 = vunpack.c.h.b16 %v4968
    %v5143 = vunpack.c.l.b16 %v4969
    %v5144 = vunpack.c.h.b16 %v4969
    %v5145 = vunpack.c.l.b16 %v4970
    %v5146 = vunpack.c.h.b16 %v4970
    %v5147 = vunpack.c.l.b16 %v4971
    %v5148 = vunpack.c.h.b16 %v4971
    %v5149 = vunpack.c.l.b16 %v4972
    %v5150 = vunpack.c.h.b16 %v4972
    %v5151 = vunpack.c.l.b16 %v4973
    %v5152 = vunpack.c.h.b16 %v4973
    %v5153 = vunpack.c.l.b16 %v4974
    %v5154 = vunpack.c.h.b16 %v4974
    %v5155 = vunpack.c.l.b16 %v4975
    %v5156 = vunpack.c.h.b16 %v4975
    %v5157 = vunpack.c.l.b16 %v4976
    %v5158 = vunpack.c.h.b16 %v4976
    %v5159 = vunpack.c.l.b16 %v4977
    %v5160 = vunpack.c.h.b16 %v4977
    %v5161 = vunpack.c.l.b16 %v4978
    %v5162 = vunpack.c.h.b16 %v4978
    %v5163 = vunpack.c.l.b16 %v4979
    %v5164 = vunpack.c.h.b16 %v4979
    %v5165 = vunpack.c.l.b16 %v4980
    %v5166 = vunpack.c.h.b16 %v4980
    %v5167 = vunpack.c.l.b16 %v4981
    %v5168 = vunpack.c.h.b16 %v4981
    %v5169 = vunpack.c.l.b16 %v4982
    %v5170 = vunpack.c.h.b16 %v4982
    %v5171 = vunpack.c.l.b16 %v4983
    %v5172 = vunpack.c.h.b16 %v4983
    %v5173 = vunpack.c.l.b16 %v4984
    %v5174 = vunpack.c.h.b16 %v4984
    %v5175 = vunpack.c.l.b16 %v4985
    %v5176 = vunpack.c.h.b16 %v4985
    %v5177 = vunpack.c.l.b16 %v4986
    %v5178 = vunpack.c.h.b16 %v4986
    %v5179 = vunpack.c.l.b16 %v4987
    %v5180 = vunpack.c.h.b16 %v4987
    %v5181 = vunpack.c.l.b16 %v4988
    %v5182 = vunpack.c.h.b16 %v4988
    %v5183 = vunpack.c.l.b16 %v4989
    %v5184 = vunpack.c.h.b16 %v4989
    %v5185 = vunpack.c.l.b16 %v4990
    %v5186 = vunpack.c.h.b16 %v4990
    %v5187 = vunpack.c.l.b16 %v4991
    %v5188 = vunpack.c.h.b16 %v4991
    %v5189 = vunpack.c.l.b16 %v4992
    %v5190 = vunpack.c.h.b16 %v4992
    %v5191 = vunpack.c.l.b16 %v4993
    %v5192 = vunpack.c.h.b16 %v4993
    %v5193 = vunpack.c.l.b16 %v4994
    %v5194 = vunpack.c.h.b16 %v4994
    %v5195 = vunpack.c.l.b16 %v4995
    %v5196 = vunpack.c.h.b16 %v4995
    %v5197 = vunpack.c.l.b16 %v4996
    %v5198 = vunpack.c.h.b16 %v4996
    %v5199 = vunpack.c.l.b16 %v4997
    %v5200 = vunpack.c.h.b16 %v4997
    %v5201 = vunpack.c.l.b16 %v4998
    %v5202 = vunpack.c.h.b16 %v4998
    %v5203 = vunpack.c.l.b16 %v4999
    %v5204 = vunpack.c.h.b16 %v4999
    %v5205 = vunpack.c.l.b16 %v5000
    %v5206 = vunpack.c.h.b16 %v5000
    %v5207 = vunpack.c.l.b16 %v5001
    %v5208 = vunpack.c.h.b16 %v5001
    %v5209 = vunpack.c.l.b16 %v5002
    %v5210 = vunpack.c.h.b16 %v5002
    %v5211 = vunpack.c.l.b16 %v5003
    %v5212 = vunpack.c.h.b16 %v5003
    %v5213 = vunpack.c.l.b16 %v5004
    %v5214 = vunpack.c.h.b16 %v5004
    %v5215 = vunpack.c.l.b16 %v5005
    %v5216 = vunpack.c.h.b16 %v5005
    %v5217 = vunpack.c.l.b16 %v5006
    %v5218 = vunpack.c.h.b16 %v5006
    %v5219 = vunpack.c.l.b16 %v5007
    %v5220 = vunpack.c.h.b16 %v5007
    %v5221 = vunpack.c.l.b16 %v5008
    %v5222 = vunpack.c.h.b16 %v5008
    %v5223 = vunpack.c.l.b16 %v5009
    %v5224 = vunpack.c.h.b16 %v5009
    %v5225 = vunpack.c.l.b16 %v5010
    %v5226 = vunpack.c.h.b16 %v5010
    %v5227 = vunpack.c.l.b16 %v5011
    %v5228 = vunpack.c.h.b16 %v5011
    %v5229 = vunpack.c.l.b16 %v5012
    %v5230 = vunpack.c.h.b16 %v5012
    %v5231 = vunpack.c.l.b16 %v5013
    %v5232 = vunpack.c.h.b16 %v5013
    %v5233 = vpack.c.b16 %v5109, %v5105
    %v5234 = vpack.c.b16 %v5110, %v5106
    %v5235 = vpack.c.b16 %v5111, %v5107
    %v5236 = vpack.c.b16 %v5112, %v5108
    %v5237 = vpack.c.b16 %v5117, %v5113
    %v5238 = vpack.c.b16 %v5118, %v5114
    %v5239 = vpack.c.b16 %v5119, %v5115
    %v5240 = vpack.c.b16 %v5120, %v5116
    %v5241 = vpack.c.b16 %v5125, %v5121
    %v5242 = vpack.c.b16 %v5126, %v5122
    %v5243 = vpack.c.b16 %v5127, %v5123
    %v5244 = vpack.c.b16 %v5128, %v5124
    %v5245 = vpack.c.b16 %v5133, %v5129
    %v5246 = vpack.c.b16 %v5134, %v5130
    %v5247 = vpack.c.b16 %v5135, %v5131
    %v5248 = vpack.c.b16 %v5136, %v5132
    %v5249 = vpack.c.b16 %v5141, %v5137
    %v5250 = vpack.c.b16 %v5142, %v5138
    %v5251 = vpack.c.b16 %v5143, %v5139
    %v5252 = vpack.c.b16 %v5144, %v5140
    %v5253 = vpack.c.b16 %v5149, %v5145
    %v5254 = vpack.c.b16 %v5150, %v5146
    %v5255 = vpack.c.b16 %v5151, %v5147
    %v5256 = vpack.c.b16 %v5152, %v5148
    %v5257 = vpack.c.b16 %v5157, %v5153
    %v5258 = vpack.c.b16 %v5158, %v5154
    %v5259 = vpack.c.b16 %v5159, %v5155
    %v5260 = vpack.c.b16 %v5160, %v5156
    %v5261 = vpack.c.b16 %v5165, %v5161
    %v5262 = vpack.c.b16 %v5166, %v5162
    %v5263 = vpack.c.b16 %v5167, %v5163
    %v5264 = vpack.c.b16 %v5168, %v5164
    %v5265 = vpack.c.b16 %v5173, %v5169
    %v5266 = vpack.c.b16 %v5174, %v5170
    %v5267 = vpack.c.b16 %v5175, %v5171
    %v5268 = vpack.c.b16 %v5176, %v5172
    %v5269 = vpack.c.b16 %v5181, %v5177
    %v5270 = vpack.c.b16 %v5182, %v5178
    %v5271 = vpack.c.b16 %v5183, %v5179
    %v5272 = vpack.c.b16 %v5184, %v5180
    %v5273 = vpack.c.b16 %v5189, %v5185
    %v5274 = vpack.c.b16 %v5190, %v5186
    %v5275 = vpack.c.b16 %v5191, %v5187
    %v5276 = vpack.c.b16 %v5192, %v5188
    %v5277 = vpack.c.b16 %v5197, %v5193
    %v5278 = vpack.c.b16 %v5198, %v5194
    %v5279 = vpack.c.b16 %v5199, %v5195
    %v5280 = vpack.c.b16 %v5200, %v5196
    %v5281 = vpack.c.b16 %v5205, %v5201
    %v5282 = vpack.c.b16 %v5206, %v5202
    %v5283 = vpack.c.b16 %v5207, %v5203
    %v5284 = vpack.c.b16 %v5208, %v5204
    %v5285 = vpack.c.b16 %v5213, %v5209
    %v5286 = vpack.c.b16 %v5214, %v5210
    %v5287 = vpack.c.b16 %v5215, %v5211
    %v5288 = vpack.c.b16 %v5216, %v5212
    %v5289 = vpack.c.b16 %v5221, %v5217
    %v5290 = vpack.c.b16 %v5222, %v5218
    %v5291 = vpack.c.b16 %v5223, %v5219
    %v5292 = vpack.c.b16 %v5224, %v5220
    %v5293 = vpack.c.b16 %v5229, %v5225
    %v5294 = vpack.c.b16 %v5230, %v5226
    %v5295 = vpack.c.b16 %v5231, %v5227
    %v5296 = vpack.c.b16 %v5232, %v5228
    %5361 = vmatprep.subr.bf16.mxu0 %v5262
    %5362 = vmatpush1.bf16.msra.mxu0 %v5261
    %5363 = vmatprep.subr.bf16.mxu0 %v5258
    %5364 = vmatpush1.bf16.msra.mxu0 %v5257
    %5365 = vmatprep.subr.bf16.mxu0 %v5254
    %5366 = vmatpush1.bf16.msra.mxu0 %v5253
    %5367 = vmatprep.subr.bf16.mxu0 %v5250
    %5368 = vmatpush1.bf16.msra.mxu0 %v5249
    %5369 = vmatprep.subr.bf16.mxu0 %v5246
    %5370 = vmatpush1.bf16.msra.mxu0 %v5245
    %5371 = vmatprep.subr.bf16.mxu0 %v5242
    %5372 = vmatpush1.bf16.msra.mxu0 %v5241
    %5373 = vmatprep.subr.bf16.mxu0 %v5238
    %5374 = vmatpush1.bf16.msra.mxu0 %v5237
    %5375 = vmatprep.subr.bf16.mxu0 %v5234
    %5376 = vmatpush1.bf16.msra.mxu0 %v5233
    %5377 = vmatprep.subr.bf16.mxu0 %v5294
    %5378 = vmatpush2.bf16.msra.mxu0 %v5293
    %5379 = vmatprep.subr.bf16.mxu0 %v5290
    %5380 = vmatpush2.bf16.msra.mxu0 %v5289
    %5381 = vmatprep.subr.bf16.mxu0 %v5286
    %5382 = vmatpush2.bf16.msra.mxu0 %v5285
    %5383 = vmatprep.subr.bf16.mxu0 %v5282
    %5384 = vmatpush2.bf16.msra.mxu0 %v5281
    %5385 = vmatprep.subr.bf16.mxu0 %v5278
    %5386 = vmatpush2.bf16.msra.mxu0 %v5277
    %5387 = vmatprep.subr.bf16.mxu0 %v5274
    %5388 = vmatpush2.bf16.msra.mxu0 %v5273
    %5389 = vmatprep.subr.bf16.mxu0 %v5270
    %5390 = vmatpush2.bf16.msra.mxu0 %v5269
    %5391 = vmatprep.subr.bf16.mxu0 %v5266
    %5392 = vmatpush2.bf16.msra.mxu0 %v5265
    %5393 = vmatprep.mubr.bf16.mxu0 %v5015
    %5394 = vmatmul.mubr.bf16.gmra.mxu0 %v5014
    %v5395 = vpop.f32.mrf.mxu0
    %v5396 = vadd.f32 %v5024, %v5395
    %v5397 = vpop.f32.mrf.mxu0
    %v5398 = vadd.f32 %v5028, %v5397
    %v5399 = vpop.f32.mrf.mxu0
    %v5400 = vadd.f32 %v5024, %v5399
    %v5401 = vpop.f32.mrf.mxu0
    %v5402 = vadd.f32 %v5028, %v5401
    %5403 = vmatprep.mubr.bf16.mxu0 %v5017
    %5404 = vmatmul.mubr.bf16.gmra.mxu0 %v5016
    %v5405 = vpop.f32.mrf.mxu0
    %v5406 = vadd.f32 %v5024, %v5405
    %v5407 = vpop.f32.mrf.mxu0
    %v5408 = vadd.f32 %v5028, %v5407
    %v5409 = vpop.f32.mrf.mxu0
    %v5410 = vadd.f32 %v5024, %v5409
    %v5411 = vpop.f32.mrf.mxu0
    %v5412 = vadd.f32 %v5028, %v5411
    %5413 = vdwg.mxu0
    %5414 = vmatprep.subr.bf16.mxu0 %v5264
    %5415 = vmatpush1.bf16.msra.mxu0 %v5263
    %5416 = vmatprep.subr.bf16.mxu0 %v5260
    %5417 = vmatpush1.bf16.msra.mxu0 %v5259
    %5418 = vmatprep.subr.bf16.mxu0 %v5256
    %5419 = vmatpush1.bf16.msra.mxu0 %v5255
    %5420 = vmatprep.subr.bf16.mxu0 %v5252
    %5421 = vmatpush1.bf16.msra.mxu0 %v5251
    %5422 = vmatprep.subr.bf16.mxu0 %v5248
    %5423 = vmatpush1.bf16.msra.mxu0 %v5247
    %5424 = vmatprep.subr.bf16.mxu0 %v5244
    %5425 = vmatpush1.bf16.msra.mxu0 %v5243
    %5426 = vmatprep.subr.bf16.mxu0 %v5240
    %5427 = vmatpush1.bf16.msra.mxu0 %v5239
    %5428 = vmatprep.subr.bf16.mxu0 %v5236
    %5429 = vmatpush1.bf16.msra.mxu0 %v5235
    %5430 = vmatprep.subr.bf16.mxu0 %v5296
    %5431 = vmatpush2.bf16.msra.mxu0 %v5295
    %5432 = vmatprep.subr.bf16.mxu0 %v5292
    %5433 = vmatpush2.bf16.msra.mxu0 %v5291
    %5434 = vmatprep.subr.bf16.mxu0 %v5288
    %5435 = vmatpush2.bf16.msra.mxu0 %v5287
    %5436 = vmatprep.subr.bf16.mxu0 %v5284
    %5437 = vmatpush2.bf16.msra.mxu0 %v5283
    %5438 = vmatprep.subr.bf16.mxu0 %v5280
    %5439 = vmatpush2.bf16.msra.mxu0 %v5279
    %5440 = vmatprep.subr.bf16.mxu0 %v5276
    %5441 = vmatpush2.bf16.msra.mxu0 %v5275
    %5442 = vmatprep.subr.bf16.mxu0 %v5272
    %5443 = vmatpush2.bf16.msra.mxu0 %v5271
    %5444 = vmatprep.subr.bf16.mxu0 %v5268
    %5445 = vmatpush2.bf16.msra.mxu0 %v5267
    %5446 = vmatprep.mubr.bf16.mxu0 %v5015
    %5447 = vmatmul.mubr.bf16.gmra.mxu0 %v5014
    %v5448 = vpop.f32.mrf.mxu0
    %v5449 = vadd.f32 %v5032, %v5448
    %v5450 = vpop.f32.mrf.mxu0
    %v5451 = vadd.f32 %v5036, %v5450
    %v5452 = vpop.f32.mrf.mxu0
    %v5453 = vadd.f32 %v5032, %v5452
    %v5454 = vpop.f32.mrf.mxu0
    %v5455 = vadd.f32 %v5036, %v5454
    %5456 = vmatprep.mubr.bf16.mxu0 %v5017
    %5457 = vmatmul.mubr.bf16.gmra.mxu0 %v5016
    %v5458 = vpop.f32.mrf.mxu0
    %v5459 = vadd.f32 %v5032, %v5458
    %v5460 = vpop.f32.mrf.mxu0
    %v5461 = vadd.f32 %v5036, %v5460
    %v5462 = vpop.f32.mrf.mxu0
    %v5463 = vadd.f32 %v5032, %v5462
    %v5464 = vpop.f32.mrf.mxu0
    %v5465 = vadd.f32 %v5036, %v5464
    %5466 = vdwg.mxu0
    %v5467 = vmul.f32 %v5396, 0.5
    %v5468 = vmul.f32 %v5398, 0.5
    %v5469 = vmul.f32 %v5449, 0.5
    %v5470 = vmul.f32 %v5451, 0.5
    %v5471 = vmul.f32 %v5400, 0.5
    %v5472 = vmul.f32 %v5402, 0.5
    %v5473 = vmul.f32 %v5453, 0.5
    %v5474 = vmul.f32 %v5455, 0.5
    %v5475 = vmul.f32 %v5406, 0.5
    %v5476 = vmul.f32 %v5408, 0.5
    %v5477 = vmul.f32 %v5459, 0.5
    %v5478 = vmul.f32 %v5461, 0.5
    %v5479 = vmul.f32 %v5410, 0.5
    %v5480 = vmul.f32 %v5412, 0.5
    %v5481 = vmul.f32 %v5463, 0.5
    %v5482 = vmul.f32 %v5465, 0.5
    %v5483 = vmul.f32 %v5396, 0.044715
    %v5484 = vmul.f32 %v5398, 0.044715
    %v5485 = vmul.f32 %v5449, 0.044715
    %v5486 = vmul.f32 %v5451, 0.044715
    %v5487 = vmul.f32 %v5400, 0.044715
    %v5488 = vmul.f32 %v5402, 0.044715
    %v5489 = vmul.f32 %v5453, 0.044715
    %v5490 = vmul.f32 %v5455, 0.044715
    %v5491 = vmul.f32 %v5406, 0.044715
    %v5492 = vmul.f32 %v5408, 0.044715
    %v5493 = vmul.f32 %v5459, 0.044715
    %v5494 = vmul.f32 %v5461, 0.044715
    %v5495 = vmul.f32 %v5410, 0.044715
    %v5496 = vmul.f32 %v5412, 0.044715
    %v5497 = vmul.f32 %v5463, 0.044715
    %v5498 = vmul.f32 %v5465, 0.044715
    %v5499 = vmul.f32 %v5483, %v5396
    %v5500 = vmul.f32 %v5484, %v5398
    %v5501 = vmul.f32 %v5485, %v5449
    %v5502 = vmul.f32 %v5486, %v5451
    %v5503 = vmul.f32 %v5487, %v5400
    %v5504 = vmul.f32 %v5488, %v5402
    %v5505 = vmul.f32 %v5489, %v5453
    %v5506 = vmul.f32 %v5490, %v5455
    %v5507 = vmul.f32 %v5491, %v5406
    %v5508 = vmul.f32 %v5492, %v5408
    %v5509 = vmul.f32 %v5493, %v5459
    %v5510 = vmul.f32 %v5494, %v5461
    %v5511 = vmul.f32 %v5495, %v5410
    %v5512 = vmul.f32 %v5496, %v5412
    %v5513 = vmul.f32 %v5497, %v5463
    %v5514 = vmul.f32 %v5498, %v5465
    %v5515 = vmul.f32 %v5499, %v5396
    %v5516 = vmul.f32 %v5500, %v5398
    %v5517 = vmul.f32 %v5501, %v5449
    %v5518 = vmul.f32 %v5502, %v5451
    %v5519 = vmul.f32 %v5503, %v5400
    %v5520 = vmul.f32 %v5504, %v5402
    %v5521 = vmul.f32 %v5505, %v5453
    %v5522 = vmul.f32 %v5506, %v5455
    %v5523 = vmul.f32 %v5507, %v5406
    %v5524 = vmul.f32 %v5508, %v5408
    %v5525 = vmul.f32 %v5509, %v5459
    %v5526 = vmul.f32 %v5510, %v5461
    %v5527 = vmul.f32 %v5511, %v5410
    %v5528 = vmul.f32 %v5512, %v5412
    %v5529 = vmul.f32 %v5513, %v5463
    %v5530 = vmul.f32 %v5514, %v5465
    %v5531 = vadd.f32 %v5396, %v5515
    %v5532 = vadd.f32 %v5398, %v5516
    %v5533 = vadd.f32 %v5449, %v5517
    %v5534 = vadd.f32 %v5451, %v5518
    %v5535 = vadd.f32 %v5400, %v5519
    %v5536 = vadd.f32 %v5402, %v5520
    %v5537 = vadd.f32 %v5453, %v5521
    %v5538 = vadd.f32 %v5455, %v5522
    %v5539 = vadd.f32 %v5406, %v5523
    %v5540 = vadd.f32 %v5408, %v5524
    %v5541 = vadd.f32 %v5459, %v5525
    %v5542 = vadd.f32 %v5461, %v5526
    %v5543 = vadd.f32 %v5410, %v5527
    %v5544 = vadd.f32 %v5412, %v5528
    %v5545 = vadd.f32 %v5463, %v5529
    %v5546 = vadd.f32 %v5465, %v5530
    %v5547 = vmul.f32 %v5531, 0.7978846
    %v5548 = vmul.f32 %v5532, 0.7978846
    %v5549 = vmul.f32 %v5533, 0.7978846
    %v5550 = vmul.f32 %v5534, 0.7978846
    %v5551 = vmul.f32 %v5535, 0.7978846
    %v5552 = vmul.f32 %v5536, 0.7978846
    %v5553 = vmul.f32 %v5537, 0.7978846
    %v5554 = vmul.f32 %v5538, 0.7978846
    %v5555 = vmul.f32 %v5539, 0.7978846
    %v5556 = vmul.f32 %v5540, 0.7978846
    %v5557 = vmul.f32 %v5541, 0.7978846
    %v5558 = vmul.f32 %v5542, 0.7978846
    %v5559 = vmul.f32 %v5543, 0.7978846
    %v5560 = vmul.f32 %v5544, 0.7978846
    %v5561 = vmul.f32 %v5545, 0.7978846
    %v5562 = vmul.f32 %v5546, 0.7978846
    %v5563 = vtanh.pop %v5547
    %v5564 = vtanh.pop %v5548
    %v5565 = vtanh.pop %v5549
    %v5566 = vtanh.pop %v5550
    %v5567 = vtanh.pop %v5551
    %v5568 = vtanh.pop %v5552
    %v5569 = vtanh.pop %v5553
    %v5570 = vtanh.pop %v5554
    %v5571 = vtanh.pop %v5555
    %v5572 = vtanh.pop %v5556
    %v5573 = vtanh.pop %v5557
    %v5574 = vtanh.pop %v5558
    %v5575 = vtanh.pop %v5559
    %v5576 = vtanh.pop %v5560
    %v5577 = vtanh.pop %v5561
    %v5578 = vtanh.pop %v5562
    %v5579 = vadd.f32 %v5563, 1.0
    %v5580 = vadd.f32 %v5564, 1.0
    %v5581 = vadd.f32 %v5565, 1.0
    %v5582 = vadd.f32 %v5566, 1.0
    %v5583 = vadd.f32 %v5567, 1.0
    %v5584 = vadd.f32 %v5568, 1.0
    %v5585 = vadd.f32 %v5569, 1.0
    %v5586 = vadd.f32 %v5570, 1.0
    %v5587 = vadd.f32 %v5571, 1.0
    %v5588 = vadd.f32 %v5572, 1.0
    %v5589 = vadd.f32 %v5573, 1.0
    %v5590 = vadd.f32 %v5574, 1.0
    %v5591 = vadd.f32 %v5575, 1.0
    %v5592 = vadd.f32 %v5576, 1.0
    %v5593 = vadd.f32 %v5577, 1.0
    %v5594 = vadd.f32 %v5578, 1.0
    %v5595 = vmul.f32 %v5467, %v5579
    %v5596 = vmul.f32 %v5468, %v5580
    %v5597 = vmul.f32 %v5469, %v5581
    %v5598 = vmul.f32 %v5470, %v5582
    %v5599 = vmul.f32 %v5471, %v5583
    %v5600 = vmul.f32 %v5472, %v5584
    %v5601 = vmul.f32 %v5473, %v5585
    %v5602 = vmul.f32 %v5474, %v5586
    %v5603 = vmul.f32 %v5475, %v5587
    %v5604 = vmul.f32 %v5476, %v5588
    %v5605 = vmul.f32 %v5477, %v5589
    %v5606 = vmul.f32 %v5478, %v5590
    %v5607 = vmul.f32 %v5479, %v5591
    %v5608 = vmul.f32 %v5480, %v5592
    %v5609 = vmul.f32 %v5481, %v5593
    %v5610 = vmul.f32 %v5482, %v5594
    %s5611 = scalar_lea.vmem %s13, 512
    %v5612 = vld [vmem:[%s5611] sm:$0xff]
    %v5613 = vld [vmem:[%s5611 + $0x8] sm:$0xff]
    %v5614 = vld [vmem:[%s5611 + $0x10] sm:$0xff]
    %v5615 = vld [vmem:[%s5611 + $0x18] sm:$0xff]
    %v5616 = vld [vmem:[%s5611 + $0x20] sm:$0xff]
    %v5617 = vld [vmem:[%s5611 + $0x28] sm:$0xff]
    %v5618 = vld [vmem:[%s5611 + $0x30] sm:$0xff]
    %v5619 = vld [vmem:[%s5611 + $0x38] sm:$0xff]
    %v5620 = vld [vmem:[%s5611 + $0x40] sm:$0xff]
    %v5621 = vld [vmem:[%s5611 + $0x48] sm:$0xff]
    %v5622 = vld [vmem:[%s5611 + $0x50] sm:$0xff]
    %v5623 = vld [vmem:[%s5611 + $0x58] sm:$0xff]
    %v5624 = vld [vmem:[%s5611 + $0x60] sm:$0xff]
    %v5625 = vld [vmem:[%s5611 + $0x68] sm:$0xff]
    %v5626 = vld [vmem:[%s5611 + $0x70] sm:$0xff]
    %v5627 = vld [vmem:[%s5611 + $0x78] sm:$0xff]
    %v5628 = vld [vmem:[%s5611 + $0x80] sm:$0xff]
    %v5629 = vld [vmem:[%s5611 + $0x88] sm:$0xff]
    %v5630 = vld [vmem:[%s5611 + $0x90] sm:$0xff]
    %v5631 = vld [vmem:[%s5611 + $0x98] sm:$0xff]
    %v5632 = vld [vmem:[%s5611 + $0xa0] sm:$0xff]
    %v5633 = vld [vmem:[%s5611 + $0xa8] sm:$0xff]
    %v5634 = vld [vmem:[%s5611 + $0xb0] sm:$0xff]
    %v5635 = vld [vmem:[%s5611 + $0xb8] sm:$0xff]
    %v5636 = vld [vmem:[%s5611 + $0xc0] sm:$0xff]
    %v5637 = vld [vmem:[%s5611 + $0xc8] sm:$0xff]
    %v5638 = vld [vmem:[%s5611 + $0xd0] sm:$0xff]
    %v5639 = vld [vmem:[%s5611 + $0xd8] sm:$0xff]
    %v5640 = vld [vmem:[%s5611 + $0xe0] sm:$0xff]
    %v5641 = vld [vmem:[%s5611 + $0xe8] sm:$0xff]
    %v5642 = vld [vmem:[%s5611 + $0xf0] sm:$0xff]
    %v5643 = vld [vmem:[%s5611 + $0xf8] sm:$0xff]
    %v5644 = vld [vmem:[%s5611 + $0x100] sm:$0xff]
    %v5645 = vld [vmem:[%s5611 + $0x108] sm:$0xff]
    %v5646 = vld [vmem:[%s5611 + $0x110] sm:$0xff]
    %v5647 = vld [vmem:[%s5611 + $0x118] sm:$0xff]
    %v5648 = vld [vmem:[%s5611 + $0x120] sm:$0xff]
    %v5649 = vld [vmem:[%s5611 + $0x128] sm:$0xff]
    %v5650 = vld [vmem:[%s5611 + $0x130] sm:$0xff]
    %v5651 = vld [vmem:[%s5611 + $0x138] sm:$0xff]
    %v5652 = vld [vmem:[%s5611 + $0x140] sm:$0xff]
    %v5653 = vld [vmem:[%s5611 + $0x148] sm:$0xff]
    %v5654 = vld [vmem:[%s5611 + $0x150] sm:$0xff]
    %v5655 = vld [vmem:[%s5611 + $0x158] sm:$0xff]
    %v5656 = vld [vmem:[%s5611 + $0x160] sm:$0xff]
    %v5657 = vld [vmem:[%s5611 + $0x168] sm:$0xff]
    %v5658 = vld [vmem:[%s5611 + $0x170] sm:$0xff]
    %v5659 = vld [vmem:[%s5611 + $0x178] sm:$0xff]
    %v5660 = vld [vmem:[%s5611 + $0x180] sm:$0xff]
    %v5661 = vld [vmem:[%s5611 + $0x188] sm:$0xff]
    %v5662 = vld [vmem:[%s5611 + $0x190] sm:$0xff]
    %v5663 = vld [vmem:[%s5611 + $0x198] sm:$0xff]
    %v5664 = vld [vmem:[%s5611 + $0x1a0] sm:$0xff]
    %v5665 = vld [vmem:[%s5611 + $0x1a8] sm:$0xff]
    %v5666 = vld [vmem:[%s5611 + $0x1b0] sm:$0xff]
    %v5667 = vld [vmem:[%s5611 + $0x1b8] sm:$0xff]
    %v5668 = vld [vmem:[%s5611 + $0x1c0] sm:$0xff]
    %v5669 = vld [vmem:[%s5611 + $0x1c8] sm:$0xff]
    %v5670 = vld [vmem:[%s5611 + $0x1d0] sm:$0xff]
    %v5671 = vld [vmem:[%s5611 + $0x1d8] sm:$0xff]
    %v5672 = vld [vmem:[%s5611 + $0x1e0] sm:$0xff]
    %v5673 = vld [vmem:[%s5611 + $0x1e8] sm:$0xff]
    %v5674 = vld [vmem:[%s5611 + $0x1f0] sm:$0xff]
    %v5675 = vld [vmem:[%s5611 + $0x1f8] sm:$0xff]
    %v5676 = vpack.c.bf16 %v5599, %v5595
    %v5677 = vpack.c.bf16 %v5600, %v5596
    %v5678 = vpack.c.bf16 %v5601, %v5597
    %v5679 = vpack.c.bf16 %v5602, %v5598
    %v5680 = vpack.c.bf16 %v5607, %v5603
    %v5681 = vpack.c.bf16 %v5608, %v5604
    %v5682 = vpack.c.bf16 %v5609, %v5605
    %v5683 = vpack.c.bf16 %v5610, %v5606
    %v5748 = vunpack.c.l.b16 %v5612
    %v5749 = vunpack.c.h.b16 %v5612
    %v5750 = vunpack.c.l.b16 %v5613
    %v5751 = vunpack.c.h.b16 %v5613
    %v5752 = vunpack.c.l.b16 %v5614
    %v5753 = vunpack.c.h.b16 %v5614
    %v5754 = vunpack.c.l.b16 %v5615
    %v5755 = vunpack.c.h.b16 %v5615
    %v5756 = vunpack.c.l.b16 %v5616
    %v5757 = vunpack.c.h.b16 %v5616
    %v5758 = vunpack.c.l.b16 %v5617
    %v5759 = vunpack.c.h.b16 %v5617
    %v5760 = vunpack.c.l.b16 %v5618
    %v5761 = vunpack.c.h.b16 %v5618
    %v5762 = vunpack.c.l.b16 %v5619
    %v5763 = vunpack.c.h.b16 %v5619
    %v5764 = vunpack.c.l.b16 %v5620
    %v5765 = vunpack.c.h.b16 %v5620
    %v5766 = vunpack.c.l.b16 %v5621
    %v5767 = vunpack.c.h.b16 %v5621
    %v5768 = vunpack.c.l.b16 %v5622
    %v5769 = vunpack.c.h.b16 %v5622
    %v5770 = vunpack.c.l.b16 %v5623
    %v5771 = vunpack.c.h.b16 %v5623
    %v5772 = vunpack.c.l.b16 %v5624
    %v5773 = vunpack.c.h.b16 %v5624
    %v5774 = vunpack.c.l.b16 %v5625
    %v5775 = vunpack.c.h.b16 %v5625
    %v5776 = vunpack.c.l.b16 %v5626
    %v5777 = vunpack.c.h.b16 %v5626
    %v5778 = vunpack.c.l.b16 %v5627
    %v5779 = vunpack.c.h.b16 %v5627
    %v5780 = vunpack.c.l.b16 %v5628
    %v5781 = vunpack.c.h.b16 %v5628
    %v5782 = vunpack.c.l.b16 %v5629
    %v5783 = vunpack.c.h.b16 %v5629
    %v5784 = vunpack.c.l.b16 %v5630
    %v5785 = vunpack.c.h.b16 %v5630
    %v5786 = vunpack.c.l.b16 %v5631
    %v5787 = vunpack.c.h.b16 %v5631
    %v5788 = vunpack.c.l.b16 %v5632
    %v5789 = vunpack.c.h.b16 %v5632
    %v5790 = vunpack.c.l.b16 %v5633
    %v5791 = vunpack.c.h.b16 %v5633
    %v5792 = vunpack.c.l.b16 %v5634
    %v5793 = vunpack.c.h.b16 %v5634
    %v5794 = vunpack.c.l.b16 %v5635
    %v5795 = vunpack.c.h.b16 %v5635
    %v5796 = vunpack.c.l.b16 %v5636
    %v5797 = vunpack.c.h.b16 %v5636
    %v5798 = vunpack.c.l.b16 %v5637
    %v5799 = vunpack.c.h.b16 %v5637
    %v5800 = vunpack.c.l.b16 %v5638
    %v5801 = vunpack.c.h.b16 %v5638
    %v5802 = vunpack.c.l.b16 %v5639
    %v5803 = vunpack.c.h.b16 %v5639
    %v5804 = vunpack.c.l.b16 %v5640
    %v5805 = vunpack.c.h.b16 %v5640
    %v5806 = vunpack.c.l.b16 %v5641
    %v5807 = vunpack.c.h.b16 %v5641
    %v5808 = vunpack.c.l.b16 %v5642
    %v5809 = vunpack.c.h.b16 %v5642
    %v5810 = vunpack.c.l.b16 %v5643
    %v5811 = vunpack.c.h.b16 %v5643
    %v5812 = vunpack.c.l.b16 %v5644
    %v5813 = vunpack.c.h.b16 %v5644
    %v5814 = vunpack.c.l.b16 %v5645
    %v5815 = vunpack.c.h.b16 %v5645
    %v5816 = vunpack.c.l.b16 %v5646
    %v5817 = vunpack.c.h.b16 %v5646
    %v5818 = vunpack.c.l.b16 %v5647
    %v5819 = vunpack.c.h.b16 %v5647
    %v5820 = vunpack.c.l.b16 %v5648
    %v5821 = vunpack.c.h.b16 %v5648
    %v5822 = vunpack.c.l.b16 %v5649
    %v5823 = vunpack.c.h.b16 %v5649
    %v5824 = vunpack.c.l.b16 %v5650
    %v5825 = vunpack.c.h.b16 %v5650
    %v5826 = vunpack.c.l.b16 %v5651
    %v5827 = vunpack.c.h.b16 %v5651
    %v5828 = vunpack.c.l.b16 %v5652
    %v5829 = vunpack.c.h.b16 %v5652
    %v5830 = vunpack.c.l.b16 %v5653
    %v5831 = vunpack.c.h.b16 %v5653
    %v5832 = vunpack.c.l.b16 %v5654
    %v5833 = vunpack.c.h.b16 %v5654
    %v5834 = vunpack.c.l.b16 %v5655
    %v5835 = vunpack.c.h.b16 %v5655
    %v5836 = vunpack.c.l.b16 %v5656
    %v5837 = vunpack.c.h.b16 %v5656
    %v5838 = vunpack.c.l.b16 %v5657
    %v5839 = vunpack.c.h.b16 %v5657
    %v5840 = vunpack.c.l.b16 %v5658
    %v5841 = vunpack.c.h.b16 %v5658
    %v5842 = vunpack.c.l.b16 %v5659
    %v5843 = vunpack.c.h.b16 %v5659
    %v5844 = vunpack.c.l.b16 %v5660
    %v5845 = vunpack.c.h.b16 %v5660
    %v5846 = vunpack.c.l.b16 %v5661
    %v5847 = vunpack.c.h.b16 %v5661
    %v5848 = vunpack.c.l.b16 %v5662
    %v5849 = vunpack.c.h.b16 %v5662
    %v5850 = vunpack.c.l.b16 %v5663
    %v5851 = vunpack.c.h.b16 %v5663
    %v5852 = vunpack.c.l.b16 %v5664
    %v5853 = vunpack.c.h.b16 %v5664
    %v5854 = vunpack.c.l.b16 %v5665
    %v5855 = vunpack.c.h.b16 %v5665
    %v5856 = vunpack.c.l.b16 %v5666
    %v5857 = vunpack.c.h.b16 %v5666
    %v5858 = vunpack.c.l.b16 %v5667
    %v5859 = vunpack.c.h.b16 %v5667
    %v5860 = vunpack.c.l.b16 %v5668
    %v5861 = vunpack.c.h.b16 %v5668
    %v5862 = vunpack.c.l.b16 %v5669
    %v5863 = vunpack.c.h.b16 %v5669
    %v5864 = vunpack.c.l.b16 %v5670
    %v5865 = vunpack.c.h.b16 %v5670
    %v5866 = vunpack.c.l.b16 %v5671
    %v5867 = vunpack.c.h.b16 %v5671
    %v5868 = vunpack.c.l.b16 %v5672
    %v5869 = vunpack.c.h.b16 %v5672
    %v5870 = vunpack.c.l.b16 %v5673
    %v5871 = vunpack.c.h.b16 %v5673
    %v5872 = vunpack.c.l.b16 %v5674
    %v5873 = vunpack.c.h.b16 %v5674
    %v5874 = vunpack.c.l.b16 %v5675
    %v5875 = vunpack.c.h.b16 %v5675
    %v5876 = vpack.c.b16 %v5750, %v5748
    %v5877 = vpack.c.b16 %v5751, %v5749
    %v5878 = vpack.c.b16 %v5754, %v5752
    %v5879 = vpack.c.b16 %v5755, %v5753
    %v5880 = vpack.c.b16 %v5758, %v5756
    %v5881 = vpack.c.b16 %v5759, %v5757
    %v5882 = vpack.c.b16 %v5762, %v5760
    %v5883 = vpack.c.b16 %v5763, %v5761
    %v5884 = vpack.c.b16 %v5766, %v5764
    %v5885 = vpack.c.b16 %v5767, %v5765
    %v5886 = vpack.c.b16 %v5770, %v5768
    %v5887 = vpack.c.b16 %v5771, %v5769
    %v5888 = vpack.c.b16 %v5774, %v5772
    %v5889 = vpack.c.b16 %v5775, %v5773
    %v5890 = vpack.c.b16 %v5778, %v5776
    %v5891 = vpack.c.b16 %v5779, %v5777
    %v5892 = vpack.c.b16 %v5782, %v5780
    %v5893 = vpack.c.b16 %v5783, %v5781
    %v5894 = vpack.c.b16 %v5786, %v5784
    %v5895 = vpack.c.b16 %v5787, %v5785
    %v5896 = vpack.c.b16 %v5790, %v5788
    %v5897 = vpack.c.b16 %v5791, %v5789
    %v5898 = vpack.c.b16 %v5794, %v5792
    %v5899 = vpack.c.b16 %v5795, %v5793
    %v5900 = vpack.c.b16 %v5798, %v5796
    %v5901 = vpack.c.b16 %v5799, %v5797
    %v5902 = vpack.c.b16 %v5802, %v5800
    %v5903 = vpack.c.b16 %v5803, %v5801
    %v5904 = vpack.c.b16 %v5806, %v5804
    %v5905 = vpack.c.b16 %v5807, %v5805
    %v5906 = vpack.c.b16 %v5810, %v5808
    %v5907 = vpack.c.b16 %v5811, %v5809
    %v5908 = vpack.c.b16 %v5814, %v5812
    %v5909 = vpack.c.b16 %v5815, %v5813
    %v5910 = vpack.c.b16 %v5818, %v5816
    %v5911 = vpack.c.b16 %v5819, %v5817
    %v5912 = vpack.c.b16 %v5822, %v5820
    %v5913 = vpack.c.b16 %v5823, %v5821
    %v5914 = vpack.c.b16 %v5826, %v5824
    %v5915 = vpack.c.b16 %v5827, %v5825
    %v5916 = vpack.c.b16 %v5830, %v5828
    %v5917 = vpack.c.b16 %v5831, %v5829
    %v5918 = vpack.c.b16 %v5834, %v5832
    %v5919 = vpack.c.b16 %v5835, %v5833
    %v5920 = vpack.c.b16 %v5838, %v5836
    %v5921 = vpack.c.b16 %v5839, %v5837
    %v5922 = vpack.c.b16 %v5842, %v5840
    %v5923 = vpack.c.b16 %v5843, %v5841
    %v5924 = vpack.c.b16 %v5846, %v5844
    %v5925 = vpack.c.b16 %v5847, %v5845
    %v5926 = vpack.c.b16 %v5850, %v5848
    %v5927 = vpack.c.b16 %v5851, %v5849
    %v5928 = vpack.c.b16 %v5854, %v5852
    %v5929 = vpack.c.b16 %v5855, %v5853
    %v5930 = vpack.c.b16 %v5858, %v5856
    %v5931 = vpack.c.b16 %v5859, %v5857
    %v5932 = vpack.c.b16 %v5862, %v5860
    %v5933 = vpack.c.b16 %v5863, %v5861
    %v5934 = vpack.c.b16 %v5866, %v5864
    %v5935 = vpack.c.b16 %v5867, %v5865
    %v5936 = vpack.c.b16 %v5870, %v5868
    %v5937 = vpack.c.b16 %v5871, %v5869
    %v5938 = vpack.c.b16 %v5874, %v5872
    %v5939 = vpack.c.b16 %v5875, %v5873
    %6004 = vmatprep.subr.bf16.mxu0 %v5891
    %6005 = vmatpush1.bf16.msra.mxu0 %v5890
    %6006 = vmatprep.subr.bf16.mxu0 %v5889
    %6007 = vmatpush1.bf16.msra.mxu0 %v5888
    %6008 = vmatprep.subr.bf16.mxu0 %v5887
    %6009 = vmatpush1.bf16.msra.mxu0 %v5886
    %6010 = vmatprep.subr.bf16.mxu0 %v5885
    %6011 = vmatpush1.bf16.msra.mxu0 %v5884
    %6012 = vmatprep.subr.bf16.mxu0 %v5883
    %6013 = vmatpush1.bf16.msra.mxu0 %v5882
    %6014 = vmatprep.subr.bf16.mxu0 %v5881
    %6015 = vmatpush1.bf16.msra.mxu0 %v5880
    %6016 = vmatprep.subr.bf16.mxu0 %v5879
    %6017 = vmatpush1.bf16.msra.mxu0 %v5878
    %6018 = vmatprep.subr.bf16.mxu0 %v5877
    %6019 = vmatpush1.bf16.msra.mxu0 %v5876
    %6020 = vmatprep.subr.bf16.mxu0 %v5907
    %6021 = vmatpush2.bf16.msra.mxu0 %v5906
    %6022 = vmatprep.subr.bf16.mxu0 %v5905
    %6023 = vmatpush2.bf16.msra.mxu0 %v5904
    %6024 = vmatprep.subr.bf16.mxu0 %v5903
    %6025 = vmatpush2.bf16.msra.mxu0 %v5902
    %6026 = vmatprep.subr.bf16.mxu0 %v5901
    %6027 = vmatpush2.bf16.msra.mxu0 %v5900
    %6028 = vmatprep.subr.bf16.mxu0 %v5899
    %6029 = vmatpush2.bf16.msra.mxu0 %v5898
    %6030 = vmatprep.subr.bf16.mxu0 %v5897
    %6031 = vmatpush2.bf16.msra.mxu0 %v5896
    %6032 = vmatprep.subr.bf16.mxu0 %v5895
    %6033 = vmatpush2.bf16.msra.mxu0 %v5894
    %6034 = vmatprep.subr.bf16.mxu0 %v5893
    %6035 = vmatpush2.bf16.msra.mxu0 %v5892
    %6036 = vmatprep.mubr.bf16.mxu0 %v5677
    %6037 = vmatmul.mubr.bf16.gmra.mxu0 %v5676
    %v6038 = vpop.f32.mrf.mxu0
    %v6039 = vadd.f32 0.0, %v6038
    %v6040 = vpop.f32.mrf.mxu0
    %v6041 = vadd.f32 0.0, %v6040
    %v6042 = vpop.f32.mrf.mxu0
    %v6043 = vadd.f32 0.0, %v6042
    %v6044 = vpop.f32.mrf.mxu0
    %v6045 = vadd.f32 0.0, %v6044
    %6046 = vmatprep.mubr.bf16.mxu0 %v5681
    %6047 = vmatmul.mubr.bf16.gmra.mxu0 %v5680
    %v6048 = vpop.f32.mrf.mxu0
    %v6049 = vadd.f32 0.0, %v6048
    %v6050 = vpop.f32.mrf.mxu0
    %v6051 = vadd.f32 0.0, %v6050
    %v6052 = vpop.f32.mrf.mxu0
    %v6053 = vadd.f32 0.0, %v6052
    %v6054 = vpop.f32.mrf.mxu0
    %v6055 = vadd.f32 0.0, %v6054
    %6056 = vdwg.mxu0
    %6057 = vmatprep.subr.bf16.mxu0 %v5923
    %6058 = vmatpush1.bf16.msra.mxu0 %v5922
    %6059 = vmatprep.subr.bf16.mxu0 %v5921
    %6060 = vmatpush1.bf16.msra.mxu0 %v5920
    %6061 = vmatprep.subr.bf16.mxu0 %v5919
    %6062 = vmatpush1.bf16.msra.mxu0 %v5918
    %6063 = vmatprep.subr.bf16.mxu0 %v5917
    %6064 = vmatpush1.bf16.msra.mxu0 %v5916
    %6065 = vmatprep.subr.bf16.mxu0 %v5915
    %6066 = vmatpush1.bf16.msra.mxu0 %v5914
    %6067 = vmatprep.subr.bf16.mxu0 %v5913
    %6068 = vmatpush1.bf16.msra.mxu0 %v5912
    %6069 = vmatprep.subr.bf16.mxu0 %v5911
    %6070 = vmatpush1.bf16.msra.mxu0 %v5910
    %6071 = vmatprep.subr.bf16.mxu0 %v5909
    %6072 = vmatpush1.bf16.msra.mxu0 %v5908
    %6073 = vmatprep.subr.bf16.mxu0 %v5939
    %6074 = vmatpush2.bf16.msra.mxu0 %v5938
    %6075 = vmatprep.subr.bf16.mxu0 %v5937
    %6076 = vmatpush2.bf16.msra.mxu0 %v5936
    %6077 = vmatprep.subr.bf16.mxu0 %v5935
    %6078 = vmatpush2.bf16.msra.mxu0 %v5934
    %6079 = vmatprep.subr.bf16.mxu0 %v5933
    %6080 = vmatpush2.bf16.msra.mxu0 %v5932
    %6081 = vmatprep.subr.bf16.mxu0 %v5931
    %6082 = vmatpush2.bf16.msra.mxu0 %v5930
    %6083 = vmatprep.subr.bf16.mxu0 %v5929
    %6084 = vmatpush2.bf16.msra.mxu0 %v5928
    %6085 = vmatprep.subr.bf16.mxu0 %v5927
    %6086 = vmatpush2.bf16.msra.mxu0 %v5926
    %6087 = vmatprep.subr.bf16.mxu0 %v5925
    %6088 = vmatpush2.bf16.msra.mxu0 %v5924
    %6089 = vmatprep.mubr.bf16.mxu0 %v5679
    %6090 = vmatmul.mubr.bf16.gmra.mxu0 %v5678
    %v6091 = vpop.f32.mrf.mxu0
    %v6092 = vadd.f32 %v6039, %v6091
    %v6093 = vpop.f32.mrf.mxu0
    %v6094 = vadd.f32 %v6041, %v6093
    %v6095 = vpop.f32.mrf.mxu0
    %v6096 = vadd.f32 %v6043, %v6095
    %v6097 = vpop.f32.mrf.mxu0
    %v6098 = vadd.f32 %v6045, %v6097
    %6099 = vmatprep.mubr.bf16.mxu0 %v5683
    %6100 = vmatmul.mubr.bf16.gmra.mxu0 %v5682
    %v6101 = vpop.f32.mrf.mxu0
    %v6102 = vadd.f32 %v6049, %v6101
    %v6103 = vpop.f32.mrf.mxu0
    %v6104 = vadd.f32 %v6051, %v6103
    %v6105 = vpop.f32.mrf.mxu0
    %v6106 = vadd.f32 %v6053, %v6105
    %v6107 = vpop.f32.mrf.mxu0
    %v6108 = vadd.f32 %v6055, %v6107
    %6109 = vdwg.mxu0
    %v6110 = vadd.f32 %v4835, %v6092
    %v6111 = vadd.f32 %v4836, %v6094
    %v6112 = vadd.f32 %v4837, %v6096
    %v6113 = vadd.f32 %v4838, %v6098
    %v6114 = vadd.f32 %v4839, %v6102
    %v6115 = vadd.f32 %v4840, %v6104
    %v6116 = vadd.f32 %v4841, %v6106
    %v6117 = vadd.f32 %v4842, %v6108
    %s6118 = scalar_lea.vmem %s14, 2
    %v6119 = vld [vmem:[%s6118] sm:$0x3]
    %v6121 = vlaneseq
    %v6122 = vshrl.u32 %v6121, 7
    %v6123 = vsub.s32 0, %v6122
    %v6124 = vrot.slane %v6119, %v6123
    %v6125 = vlaneseq
    %v6126 = vshrl.u32 %v6125, 7
    %v6127 = vsub.s32 1, %v6126
    %v6128 = vrot.slane %v6119, %v6127
    %v6131 = vadd.f32 %v6110, %v6124
    %v6132 = vadd.f32 %v6111, %v6128
    %v6133 = vadd.f32 %v6112, %v6124
    %v6134 = vadd.f32 %v6113, %v6128
    %v6135 = vadd.f32 %v6114, %v6124
    %v6136 = vadd.f32 %v6115, %v6128
    %v6137 = vadd.f32 %v6116, %v6124
    %v6138 = vadd.f32 %v6117, %v6128
    %v6139 = vld [vmem:[%s15] sm:$0x3]
    %v6140 = vld [vmem:[%s16] sm:$0x3]
    %v6141 = vadd.f32 %v6131, %v6132
    %6142 = vadd.xlane.f32.xlu0 %v6141
    %v6143 = vpop.xlane.xlu0 %6142
    %v6144 = vadd.f32 %v6133, %v6134
    %6145 = vadd.xlane.f32.xlu0 %v6144
    %v6146 = vpop.xlane.xlu0 %6145
    %v6147 = vadd.f32 %v6135, %v6136
    %6148 = vadd.xlane.f32.xlu0 %v6147
    %v6149 = vpop.xlane.xlu0 %6148
    %v6150 = vadd.f32 %v6137, %v6138
    %6151 = vadd.xlane.f32.xlu0 %v6150
    %v6152 = vpop.xlane.xlu0 %6151
    %v6153 = vmul.f32 %v6143, %v351
    %v6154 = vmul.f32 %v6146, %v351
    %v6155 = vmul.f32 %v6149, %v351
    %v6156 = vmul.f32 %v6152, %v351
    %v6157 = vsub.f32 %v6131, %v6153
    %v6158 = vsub.f32 %v6132, %v6153
    %v6159 = vsub.f32 %v6133, %v6154
    %v6160 = vsub.f32 %v6134, %v6154
    %v6161 = vsub.f32 %v6135, %v6155
    %v6162 = vsub.f32 %v6136, %v6155
    %v6163 = vsub.f32 %v6137, %v6156
    %v6164 = vsub.f32 %v6138, %v6156
    %v6165 = vmul.f32 %v6157, %v6157
    %v6166 = vmul.f32 %v6158, %v6158
    %v6167 = vmul.f32 %v6159, %v6159
    %v6168 = vmul.f32 %v6160, %v6160
    %v6169 = vmul.f32 %v6161, %v6161
    %v6170 = vmul.f32 %v6162, %v6162
    %v6171 = vmul.f32 %v6163, %v6163
    %v6172 = vmul.f32 %v6164, %v6164
    %v6173 = vadd.f32 %v6165, %v6166
    %6174 = vadd.xlane.f32.xlu0 %v6173
    %v6175 = vpop.xlane.xlu0 %6174
    %v6176 = vadd.f32 %v6167, %v6168
    %6177 = vadd.xlane.f32.xlu0 %v6176
    %v6178 = vpop.xlane.xlu0 %6177
    %v6179 = vadd.f32 %v6169, %v6170
    %6180 = vadd.xlane.f32.xlu0 %v6179
    %v6181 = vpop.xlane.xlu0 %6180
    %v6182 = vadd.f32 %v6171, %v6172
    %6183 = vadd.xlane.f32.xlu0 %v6182
    %v6184 = vpop.xlane.xlu0 %6183
    %v6185 = vmul.f32 %v6175, %v351
    %v6186 = vmul.f32 %v6178, %v351
    %v6187 = vmul.f32 %v6181, %v351
    %v6188 = vmul.f32 %v6184, %v351
    %v6189 = vadd.f32 %v6185, 1e-06
    %v6190 = vadd.f32 %v6186, 1e-06
    %v6191 = vadd.f32 %v6187, 1e-06
    %v6192 = vadd.f32 %v6188, 1e-06
    %v6193 = vrsqrt.pop %v6189
    %v6194 = vrsqrt.pop %v6190
    %v6195 = vrsqrt.pop %v6191
    %v6196 = vrsqrt.pop %v6192
    %v6197 = vmul.f32 %v6157, %v6193
    %v6198 = vmul.f32 %v6158, %v6193
    %v6199 = vmul.f32 %v6159, %v6194
    %v6200 = vmul.f32 %v6160, %v6194
    %v6201 = vmul.f32 %v6161, %v6195
    %v6202 = vmul.f32 %v6162, %v6195
    %v6203 = vmul.f32 %v6163, %v6196
    %v6204 = vmul.f32 %v6164, %v6196
    %v6206 = vlaneseq
    %v6207 = vshrl.u32 %v6206, 7
    %v6208 = vsub.s32 0, %v6207
    %v6209 = vrot.slane %v6139, %v6208
    %v6210 = vlaneseq
    %v6211 = vshrl.u32 %v6210, 7
    %v6212 = vsub.s32 1, %v6211
    %v6213 = vrot.slane %v6139, %v6212
    %v6216 = vmul.f32 %v6197, %v6209
    %v6217 = vmul.f32 %v6198, %v6213
    %v6218 = vmul.f32 %v6199, %v6209
    %v6219 = vmul.f32 %v6200, %v6213
    %v6220 = vmul.f32 %v6201, %v6209
    %v6221 = vmul.f32 %v6202, %v6213
    %v6222 = vmul.f32 %v6203, %v6209
    %v6223 = vmul.f32 %v6204, %v6213
    %v6225 = vlaneseq
    %v6226 = vshrl.u32 %v6225, 7
    %v6227 = vsub.s32 0, %v6226
    %v6228 = vrot.slane %v6140, %v6227
    %v6229 = vlaneseq
    %v6230 = vshrl.u32 %v6229, 7
    %v6231 = vsub.s32 1, %v6230
    %v6232 = vrot.slane %v6140, %v6231
    %v6235 = vadd.f32 %v6216, %v6228
    %v6236 = vadd.f32 %v6217, %v6232
    %v6237 = vadd.f32 %v6218, %v6228
    %v6238 = vadd.f32 %v6219, %v6232
    %v6239 = vadd.f32 %v6220, %v6228
    %v6240 = vadd.f32 %v6221, %v6232
    %v6241 = vadd.f32 %v6222, %v6228
    %v6242 = vadd.f32 %v6223, %v6232
    %6243 = vst [vmem:[#allocation5] sm:$0xff] %v6235
    %6244 = vst [vmem:[#allocation5 + $0x8] sm:$0xff] %v6236
    %6245 = vst [vmem:[#allocation5 + $0x10] sm:$0xff] %v6237
    %6246 = vst [vmem:[#allocation5 + $0x18] sm:$0xff] %v6238
    %6247 = vst [vmem:[#allocation5 + $0x20] sm:$0xff] %v6239
    %6248 = vst [vmem:[#allocation5 + $0x28] sm:$0xff] %v6240
    %6249 = vst [vmem:[#allocation5 + $0x30] sm:$0xff] %v6241
    %6250 = vst [vmem:[#allocation5 + $0x38] sm:$0xff] %v6242
    // Predicated region
    $region74: #{siglip_vision_model.1} parent=1 // pred_check
      _
    $region75: #{siglip_vision_model.1} parent=1 // pred_check_branch
      %6252 = sbr.rel (0) target = $region77
    $region76: #{siglip_vision_model.1} parent=1 // pred_region
      %s6254 = ssub.s32 1024, 1024
      %6255 = vsyncadd [#allocation4], %s6254
      %s6256 = sshll.u32 [#allocation5], 4
      %s6257 = int_to_ptr.vmem [resolvable:$true] %s6256
      %6262 = dma.vmem_to_hbm [thread:$0]  %s6257, 1024, %s17, [#allocation4], 256, 256, 16
    $region77: #{siglip_vision_model.1} parent=1 // pred_fallthru
      _
    // Predicated region
    $region78: #{siglip_vision_model.1} parent=1 // pred_check
      _
    $region79: #{siglip_vision_model.1} parent=1 // pred_check_branch
      %6264 = sbr.rel (0) target = $region81
    $region80: #{siglip_vision_model.1} parent=1 // pred_region
      %6265 = dma.done [#allocation4], 1024
    $region81: #{siglip_vision_model.1} parent=1 // pred_fallthru
      _
    %6266 = vsyncpa [#allocation3], 1
    %6267 = vsyncpa [#allocation4], 1

</llo_original>
